<compile_context>
chip_gen: v5e
topology: v5e:2x2
jax: 0.10.0
libtpu: 0.0.40
codegen_flags: <defaults>
</compile_context>

<pallas_src>
import functools

import jax
import jax.numpy as jnp
from jax.experimental import pallas as pl
from jax.experimental.pallas import tpu as pltpu


def _round_up(x, m):
    return (x + m - 1) // m * m


def _wrap_mask(h, wp8, w):
    # 1.0 on real output columns (j < w), 0.0 on wrap/alignment columns.
    col = jax.lax.broadcasted_iota(jnp.int32, (h, wp8, 1), 1)
    return (col < w).astype(jnp.float32).reshape(h * wp8, 1)


def _partial_stats(masked):
    # per-image [sum, sum_sq] over valid pixels -> (2, C) f32
    return jnp.concatenate(
        [jnp.sum(masked, axis=0, keepdims=True),
         jnp.sum(masked * masked, axis=0, keepdims=True)], axis=0)


def _bn_scale_shift(stats_ref, gb_ref, count, eps):
    # y_norm = y*scale + shift  with batch mean/var (biased, PyTorch train BN)
    inv = 1.0 / count
    mean = stats_ref[0:1, :] * inv
    var = stats_ref[1:2, :] * inv - mean * mean
    scale = jax.lax.rsqrt(var + eps) * gb_ref[0:1, :]
    shift = gb_ref[1:2, :] - mean * scale
    return scale, shift


# ----------------------------------------------------------------------------
# Kernel 1: conv1 (single packed-K MXU matmul) + per-image partial BN1 stats
# ----------------------------------------------------------------------------
def conv1_stats_kernel(x_ref, w_ref, y_ref, stats_ref, *, h, w, wp8):
    # x_ref:     (1, m_rows, 9*cin_p) bf16  host-packed im2col of raw input
    # w_ref:     (9*cin_p, cout_p)    bf16  conv1 taps packed along K
    # y_ref:     (1, m_rows, cout_p)  bf16  pre-BN conv output
    # stats_ref: (1, 2, cout_p)       f32   per-image [sum, sum_sq]
    acc = jnp.dot(x_ref[0], w_ref[...], preferred_element_type=jnp.float32)
    y_ref[0] = acc.astype(y_ref.dtype)
    mask = _wrap_mask(h, wp8, w)
    stats_ref[0] = _partial_stats(acc * mask)


# ----------------------------------------------------------------------------
# Kernel 2: BN1 + ReLU fused into conv2 (im2col built in VMEM, packed K)
# ----------------------------------------------------------------------------
def bn_relu_conv2_kernel(y1_ref, stats_ref, gb_ref, w_ref,
                         y2_ref, stats2_ref, pad_ref, *,
                         h, w, wp8, count, eps):
    # y1_ref:     (1, m_rows, cout_p) bf16   conv1 pre-BN output
    # stats_ref:  (2, cout_p) f32            batch [sum, sum_sq] of conv1
    # gb_ref:     (2, cout_p) f32            [gamma, beta] of bn1
    # w_ref:      (9*cout_p, cout_p) bf16    conv2 taps packed along K
    # y2_ref:     (1, m_rows, cout_p) bf16   conv2 pre-BN output
    # stats2_ref: (1, 2, cout_p) f32
    # pad_ref:    (l_pad, cout_p) bf16 VMEM  flat-padded conv2 input (scratch)
    m_rows = y2_ref.shape[1]
    c = pad_ref.shape[1]
    scale, shift = _bn_scale_shift(stats_ref, gb_ref, count, eps)
    mask = _wrap_mask(h, wp8, w)
    a1 = jnp.maximum(y1_ref[0].astype(jnp.float32) * scale + shift, 0.0) * mask

    # Rebuild the flat-padded layout in VMEM: zero head/tail borders, BN'd
    # (and wrap-masked) activations at row offset wp8+1.
    head = wp8 + 1
    tail = pad_ref.shape[0] - head - m_rows
    pad_ref[pl.ds(0, head), :] = jnp.zeros((head, c), pad_ref.dtype)
    pad_ref[pl.ds(head + m_rows, tail), :] = jnp.zeros((tail, c), pad_ref.dtype)
    pad_ref[pl.ds(head, m_rows), :] = a1.astype(pad_ref.dtype)

    # im2col in VMEM: nine 128-lane-aligned slices packed along K, one matmul.
    im2col = jnp.concatenate(
        [pad_ref[pl.ds(ky * wp8 + kx, m_rows), :]
         for ky in range(3) for kx in range(3)], axis=-1)
    acc = jnp.dot(im2col, w_ref[...], preferred_element_type=jnp.float32)
    y2_ref[0] = acc.astype(y2_ref.dtype)
    stats2_ref[0] = _partial_stats(acc * mask)


# ----------------------------------------------------------------------------
# Kernel 3: BN2 + ReLU + de-pad (wrap columns / channel padding) -> compact out
# ----------------------------------------------------------------------------
def bn_relu_depad_kernel(y_ref, stats_ref, gb_ref, x_ref, *,
                         h, w, wp8, cout, count, eps):
    # y_ref: (1, m_rows, cout_p) bf16;   x_ref: (1, h*w, cout) f32 compact out
    cp = y_ref.shape[2]
    scale, shift = _bn_scale_shift(stats_ref, gb_ref, count, eps)
    a = jnp.maximum(y_ref[0].astype(jnp.float32) * scale + shift, 0.0)
    x_ref[0] = a.reshape(h, wp8, cp)[:, :w, :cout].reshape(h * w, cout)


# ----------------------------------------------------------------------------
# Host-side packing helpers
# ----------------------------------------------------------------------------
def _pack_conv_weights(w_oihw, cin_p, cout_p):
    # (Cout, Cin, 3, 3) -> (ky, kx, Cin_p, Cout_p) -> (9*Cin_p, Cout_p) bf16
    cout, cin = w_oihw.shape[0], w_oihw.shape[1]
    wk = jnp.transpose(w_oihw, (2, 3, 1, 0)).astype(jnp.float32)
    wk = jnp.pad(wk, ((0, 0), (0, 0), (0, cin_p - cin), (0, cout_p - cout)))
    return wk.reshape(9 * cin_p, cout_p).astype(jnp.bfloat16)


def _pack_gamma_beta(gamma, beta, cout_p):
    cout = gamma.shape[0]
    return jnp.stack([jnp.pad(gamma, (0, cout_p - cout)),
                      jnp.pad(beta, (0, cout_p - cout))]).astype(jnp.float32)


# ----------------------------------------------------------------------------
# encoder_block.forward
# ----------------------------------------------------------------------------
def encoder_block_forward(x_nchw, params, eps=1e-5):
    """Returns (x, p) in PyTorch NCHW layout (H, W assumed even)."""
    n, cin, h, w = x_nchw.shape
    cout = params["w1"].shape[0]
    assert h % 2 == 0 and w % 2 == 0

    wp8 = _round_up(w + 2, 8)            # sublane-aligned padded row width
    m_rows = h * wp8                     # flat output rows per image
    l_pad = (h + 2) * wp8 + 8            # flat-padded rows (+ tap overrun)
    cin_p = _round_up(cin, 8)
    cout_p = _round_up(cout, 128)        # lane-dense conv output channels
    count = float(n * h * w)             # BN batch-stat count (valid pixels)
    offsets = tuple(ky * wp8 + kx for ky in range(3) for kx in range(3))
    parallel = pltpu.CompilerParams(dimension_semantics=("parallel",))

    # -- XLA prologue on the (small) raw input -------------------------------
    x = jnp.transpose(x_nchw, (0, 2, 3, 1)).astype(jnp.bfloat16)
    x = jnp.pad(x, ((0, 0), (1, 1), (1, wp8 - w - 1), (0, cin_p - cin)))
    x = x.reshape(n, (h + 2) * wp8, cin_p)
    x = jnp.pad(x, ((0, 0), (0, l_pad - (h + 2) * wp8), (0, 0)))
    # conv1 im2col packed along K on the host: for tiny Cin the 9x duplication
    # of the raw input is negligible; it gives conv1 a single K=9*cin_p matmul
    # without 8-lane-wide in-kernel lane packing or misaligned tap loads.
    x_im2col = jnp.concatenate(
        [x[:, off:off + m_rows, :] for off in offsets], axis=-1)

    w1p = _pack_conv_weights(params["w1"], cin_p, cout_p)
    w2p = _pack_conv_weights(params["w2"], cout_p, cout_p)
    gb1 = _pack_gamma_beta(params["g1"], params["be1"], cout_p)
    gb2 = _pack_gamma_beta(params["g2"], params["be2"], cout_p)
    # Conv biases are intentionally not used: a per-channel constant added
    # before train-mode BatchNorm cancels exactly (mean absorbs it).

    # -- layer 1: conv1 (one packed-K matmul) + per-image partial stats ------
    y1, s1 = pl.pallas_call(
        functools.partial(conv1_stats_kernel, h=h, w=w, wp8=wp8),
        grid=(n,),
        in_specs=[
            pl.BlockSpec((1, m_rows, 9 * cin_p), lambda i: (i, 0, 0)),
            pl.BlockSpec((9 * cin_p, cout_p), lambda i: (0, 0)),
        ],
        out_specs=[
            pl.BlockSpec((1, m_rows, cout_p), lambda i: (i, 0, 0)),
            pl.BlockSpec((1, 2, cout_p), lambda i: (i, 0, 0)),
        ],
        out_shape=[
            jax.ShapeDtypeStruct((n, m_rows, cout_p), jnp.bfloat16),
            jax.ShapeDtypeStruct((n, 2, cout_p), jnp.float32),
        ],
        compiler_params=parallel,
    )(x_im2col, w1p)
    stats1 = jnp.sum(s1, axis=0)         # tiny XLA reduce over the batch

    # -- layer 2: BN1 + ReLU fused into conv2's pass (K = 9*cout_p) ----------
    y2, s2 = pl.pallas_call(
        functools.partial(bn_relu_conv2_kernel, h=h, w=w, wp8=wp8,
                          count=count, eps=eps),
        grid=(n,),
        in_specs=[
            pl.BlockSpec((1, m_rows, cout_p), lambda i: (i, 0, 0)),
            pl.BlockSpec((2, cout_p), lambda i: (0, 0)),
            pl.BlockSpec((2, cout_p), lambda i: (0, 0)),
            pl.BlockSpec((9 * cout_p, cout_p), lambda i: (0, 0)),
        ],
        out_specs=[
            pl.BlockSpec((1, m_rows, cout_p), lambda i: (i, 0, 0)),
            pl.BlockSpec((1, 2, cout_p), lambda i: (i, 0, 0)),
        ],
        out_shape=[
            jax.ShapeDtypeStruct((n, m_rows, cout_p), jnp.bfloat16),
            jax.ShapeDtypeStruct((n, 2, cout_p), jnp.float32),
        ],
        scratch_shapes=[pltpu.VMEM((l_pad, cout_p), jnp.bfloat16)],
        compiler_params=parallel,
    )(y1, stats1, gb1, w2p)
    stats2 = jnp.sum(s2, axis=0)

    # -- layer 2 epilogue: BN2 + ReLU + de-pad to compact lanes --------------
    x_flat = pl.pallas_call(
        functools.partial(bn_relu_depad_kernel, h=h, w=w, wp8=wp8, cout=cout,
                          count=count, eps=eps),
        grid=(n,),
        in_specs=[
            pl.BlockSpec((1, m_rows, cout_p), lambda i: (i, 0, 0)),
            pl.BlockSpec((2, cout_p), lambda i: (0, 0)),
            pl.BlockSpec((2, cout_p), lambda i: (0, 0)),
        ],
        out_specs=pl.BlockSpec((1, h * w, cout), lambda i: (i, 0, 0)),
        out_shape=jax.ShapeDtypeStruct((n, h * w, cout), jnp.float32),
        compiler_params=parallel,
    )(y2, stats2, gb2)

    # -- cheap XLA epilogue on the compact (un-padded) activation ------------
    x_nhwc = x_flat.reshape(n, h, w, cout)
    # TODO(synk): fuse the 2x2 max-pool into bn_relu_depad_kernel (needs a
    # stride-2 sublane extraction from the flat layout).
    p_nhwc = x_nhwc.reshape(n, h // 2, 2, w // 2, 2, cout).max(axis=(2, 4))
    return (jnp.transpose(x_nhwc, (0, 3, 1, 2)),
            jnp.transpose(p_nhwc, (0, 3, 1, 2)))


# ----------------------------------------------------------------------------
# Pure-JAX f32 reference (correctness sanity check)
# ----------------------------------------------------------------------------
def _ref_forward(x_nchw, params, eps=1e-5):
    def conv(x, w, b):
        y = jax.lax.conv_general_dilated(
            x, w, window_strides=(1, 1), padding=((1, 1), (1, 1)),
            dimension_numbers=("NCHW", "OIHW", "NCHW"))
        return y + b[None, :, None, None]

    def bn_relu(x, g, be):
        mean = x.mean(axis=(0, 2, 3), keepdims=True)
        var = ((x - mean) ** 2).mean(axis=(0, 2, 3), keepdims=True)
        y = (x - mean) / jnp.sqrt(var + eps)
        y = y * g[None, :, None, None] + be[None, :, None, None]
        return jnp.maximum(y, 0.0)

    y = bn_relu(conv(x_nchw, params["w1"], params["b1"]),
                params["g1"], params["be1"])
    y = bn_relu(conv(y, params["w2"], params["b2"]),
                params["g2"], params["be2"])
    n, c, h, w = y.shape
    p = y.reshape(n, c, h // 2, 2, w // 2, 2).max(axis=(3, 5))
    return y, p


# ----------------------------------------------------------------------------
if __name__ == "__main__":
    N, IN_C, OUT_C, H, W = 2, 4, 8, 16, 16

    key = jax.random.PRNGKey(0)
    k_x, k_w1, k_b1, k_w2, k_b2 = jax.random.split(key, 5)

    x = jax.random.normal(k_x, (N, IN_C, H, W), dtype=jnp.float32)

    params = {
        # conv1: Conv2d(in_c, out_c, 3, padding=1)
        "w1": jax.random.normal(k_w1, (OUT_C, IN_C, 3, 3), jnp.float32) * 0.1,
        "b1": jax.random.normal(k_b1, (OUT_C,), jnp.float32) * 0.1,
        # bn1: BatchNorm2d default init (weight=1, bias=0)
        "g1": jnp.ones((OUT_C,), jnp.float32),
        "be1": jnp.zeros((OUT_C,), jnp.float32),
        # conv2: Conv2d(out_c, out_c, 3, padding=1)
        "w2": jax.random.normal(k_w2, (OUT_C, OUT_C, 3, 3), jnp.float32) * 0.1,
        "b2": jax.random.normal(k_b2, (OUT_C,), jnp.float32) * 0.1,
        # bn2
        "g2": jnp.ones((OUT_C,), jnp.float32),
        "be2": jnp.zeros((OUT_C,), jnp.float32),
    }

    x_out, p_out = jax.jit(encoder_block_forward)(x, params)
    jax.block_until_ready((x_out, p_out))

    x_ref, p_ref = _ref_forward(x, params)
    assert x_out.shape == (N, OUT_C, H, W)
    assert p_out.shape == (N, OUT_C, H // 2, W // 2)
    # bf16 MXU inputs / bf16 inter-kernel activations (BN + stats in f32) ->
    # relaxed tolerance vs the pure-f32 reference.
    assert jnp.allclose(x_out, x_ref, atol=5e-2, rtol=5e-2)
    assert jnp.allclose(p_out, p_ref, atol=5e-2, rtol=5e-2)

    print("KERNEL_OK")
</pallas_src>

<mosaic_0001>
module attributes {stable_mosaic.version = 11 : i64} {
  func.func @conv1_stats_kernel(%arg0: i32, %arg1: memref<1x384x72xbf16, #tpu.memory_space<vmem>>, %arg2: memref<72x128xbf16, #tpu.memory_space<vmem>>, %arg3: memref<1x384x128xbf16, #tpu.memory_space<vmem>>, %arg4: memref<1x2x128xf32, #tpu.memory_space<vmem>>) attributes {dimension_semantics = [#tpu.dimension_semantics<parallel>], iteration_bounds = array<i64: 2>, scalar_prefetch = 0 : i64, scratch_operands = 0 : i64, tpu.core_type = #tpu.core_type<tc>, window_params = [{transform_indices = @transform_0, window_bounds = array<i64: 1, 384, 72>}, {pipeline_mode = #tpu.pipeline_mode<synchronous>, transform_indices = @transform_1, window_bounds = array<i64: 72, 128>}, {transform_indices = @transform_2, window_bounds = array<i64: 1, 384, 128>}, {transform_indices = @transform_3, window_bounds = array<i64: 1, 2, 128>}]} {
    %c0 = arith.constant 0 : index
    %c0_0 = arith.constant 0 : index
    %c0_1 = arith.constant 0 : index
    %0 = vector.load %arg1[%c0, %c0_0, %c0_1] : memref<1x384x72xbf16, #tpu.memory_space<vmem>>, vector<1x384x72xbf16>
    %1 = vector.shape_cast %0 : vector<1x384x72xbf16> to vector<384x72xbf16>
    %c0_2 = arith.constant 0 : index
    %c0_3 = arith.constant 0 : index
    %2 = vector.load %arg2[%c0_2, %c0_3] : memref<72x128xbf16, #tpu.memory_space<vmem>>, vector<72x128xbf16>
    %cst = arith.constant dense<0.000000e+00> : vector<384x128xf32>
    %3 = tpu.matmul %1, %2, %cst {dimension_numbers = #tpu.dot_dimension_numbers<[1], [0], [0], [1], [0, 0, 1, 1], [], []>} : vector<384x72xbf16>, vector<72x128xbf16>, vector<384x128xf32> -> vector<384x128xf32>
    %4 = arith.truncf %3 : vector<384x128xf32> to vector<384x128xbf16>
    %c0_4 = arith.constant 0 : index
    %c0_5 = arith.constant 0 : index
    %c0_6 = arith.constant 0 : index
    %5 = vector.load %arg3[%c0_4, %c0_5, %c0_6] : memref<1x384x128xbf16, #tpu.memory_space<vmem>>, vector<1x384x128xbf16>
    %6 = vector.shape_cast %5 : vector<1x384x128xbf16> to vector<384x128xbf16>
    %7 = vector.shape_cast %4 : vector<384x128xbf16> to vector<1x384x128xbf16>
    tpu.vector_store %arg3[%c0_4, %c0_5, %c0_6], %7 {strides = array<i32>} : memref<1x384x128xbf16, #tpu.memory_space<vmem>>, vector<1x384x128xbf16>,
    %8 = tpu.iota {dimensions = array<i32: 1>} : vector<16x24x1xi32>
    %c16_i32 = arith.constant 16 : i32
    %9 = vector.broadcast %c16_i32 : i32 to vector<16x24x1xi32>
    %10 = arith.cmpi slt, %8, %9 : vector<16x24x1xi32>
    %11 = arith.extui %10 : vector<16x24x1xi1> to vector<16x24x1xi32>
    %12 = arith.sitofp %11 : vector<16x24x1xi32> to vector<16x24x1xf32>
    %13 = vector.shape_cast %12 : vector<16x24x1xf32> to vector<384x1xf32>
    %14 = vector.broadcast %13 : vector<384x1xf32> to vector<384x128xf32>
    %15 = arith.mulf %3, %14 : vector<384x128xf32>
    %cst_7 = arith.constant dense<0.000000e+00> : vector<128xf32>
    %16 = vector.multi_reduction <add>, %15, %cst_7 [0] : vector<384x128xf32> to vector<128xf32>
    %17 = vector.shape_cast %16 : vector<128xf32> to vector<1x128xf32>
    %18 = arith.mulf %15, %15 : vector<384x128xf32>
    %cst_8 = arith.constant dense<0.000000e+00> : vector<128xf32>
    %19 = vector.multi_reduction <add>, %18, %cst_8 [0] : vector<384x128xf32> to vector<128xf32>
    %20 = vector.shape_cast %19 : vector<128xf32> to vector<1x128xf32>
    %21 = tpu.concatenate %17, %20 in 0 : vector<1x128xf32>, vector<1x128xf32> -> vector<2x128xf32>
    %c0_9 = arith.constant 0 : index
    %c0_10 = arith.constant 0 : index
    %c0_11 = arith.constant 0 : index
    %22 = vector.load %arg4[%c0_9, %c0_10, %c0_11] : memref<1x2x128xf32, #tpu.memory_space<vmem>>, vector<1x2x128xf32>
    %23 = vector.shape_cast %22 : vector<1x2x128xf32> to vector<2x128xf32>
    %24 = vector.shape_cast %21 : vector<2x128xf32> to vector<1x2x128xf32>
    tpu.vector_store %arg4[%c0_9, %c0_10, %c0_11], %24 {strides = array<i32>} : memref<1x2x128xf32, #tpu.memory_space<vmem>>, vector<1x2x128xf32>,
    return
  }
  func.func @transform_0(%arg0: i32) -> (i32, i32, i32) {
    %c0_i32 = arith.constant 0 : i32
    %c0_i32_0 = arith.constant 0 : i32
    %c0_i32_1 = arith.constant 0 : i32
    return %arg0, %c0_i32, %c0_i32_0 : i32, i32, i32
  }
  func.func @transform_1(%arg0: i32) -> (i32, i32) {
    %c0_i32 = arith.constant 0 : i32
    %c0_i32_0 = arith.constant 0 : i32
    %c0_i32_1 = arith.constant 0 : i32
    return %c0_i32, %c0_i32_0 : i32, i32
  }
  func.func @transform_2(%arg0: i32) -> (i32, i32, i32) {
    %c0_i32 = arith.constant 0 : i32
    %c0_i32_0 = arith.constant 0 : i32
    %c0_i32_1 = arith.constant 0 : i32
    return %arg0, %c0_i32, %c0_i32_0 : i32, i32, i32
  }
  func.func @transform_3(%arg0: i32) -> (i32, i32, i32) {
    %c0_i32 = arith.constant 0 : i32
    %c0_i32_0 = arith.constant 0 : i32
    %c0_i32_1 = arith.constant 0 : i32
    return %arg0, %c0_i32, %c0_i32_0 : i32, i32, i32
  }
}

module attributes {stable_mosaic.version = 11 : i64} {
  func.func @bn_relu_conv2_kernel(%arg0: i32, %arg1: memref<1x384x128xbf16, #tpu.memory_space<vmem>>, %arg2: memref<2x128xf32, #tpu.memory_space<vmem>>, %arg3: memref<2x128xf32, #tpu.memory_space<vmem>>, %arg4: memref<1152x128xbf16, #tpu.memory_space<vmem>>, %arg5: memref<1x384x128xbf16, #tpu.memory_space<vmem>>, %arg6: memref<1x2x128xf32, #tpu.memory_space<vmem>>, %arg7: memref<440x128xbf16, #tpu.memory_space<vmem>>) attributes {dimension_semantics = [#tpu.dimension_semantics<parallel>], iteration_bounds = array<i64: 2>, scalar_prefetch = 0 : i64, scratch_operands = 1 : i64, tpu.core_type = #tpu.core_type<tc>, window_params = [{transform_indices = @transform_0, window_bounds = array<i64: 1, 384, 128>}, {pipeline_mode = #tpu.pipeline_mode<synchronous>, transform_indices = @transform_1, window_bounds = array<i64: 2, 128>}, {pipeline_mode = #tpu.pipeline_mode<synchronous>, transform_indices = @transform_2, window_bounds = array<i64: 2, 128>}, {pipeline_mode = #tpu.pipeline_mode<synchronous>, transform_indices = @transform_3, window_bounds = array<i64: 1152, 128>}, {transform_indices = @transform_4, window_bounds = array<i64: 1, 384, 128>}, {transform_indices = @transform_5, window_bounds = array<i64: 1, 2, 128>}]} {
    %c0 = arith.constant 0 : index
    %c0_0 = arith.constant 0 : index
    %0 = vector.load %arg2[%c0, %c0_0] : memref<2x128xf32, #tpu.memory_space<vmem>>, vector<1x128xf32>
    %cst = arith.constant 0.001953125 : f32
    %1 = vector.broadcast %cst : f32 to vector<1x128xf32>
    %2 = arith.mulf %0, %1 : vector<1x128xf32>
    %c1 = arith.constant 1 : index
    %c0_1 = arith.constant 0 : index
    %3 = vector.load %arg2[%c1, %c0_1] : memref<2x128xf32, #tpu.memory_space<vmem>>, vector<1x128xf32>
    %cst_2 = arith.constant 0.001953125 : f32
    %4 = vector.broadcast %cst_2 : f32 to vector<1x128xf32>
    %5 = arith.mulf %3, %4 : vector<1x128xf32>
    %6 = arith.mulf %2, %2 : vector<1x128xf32>
    %7 = arith.subf %5, %6 : vector<1x128xf32>
    %cst_3 = arith.constant 9.99999974E-6 : f32
    %8 = vector.broadcast %cst_3 : f32 to vector<1x128xf32>
    %9 = arith.addf %7, %8 : vector<1x128xf32>
    %10 = math.rsqrt %9 : vector<1x128xf32>
    %c0_4 = arith.constant 0 : index
    %c0_5 = arith.constant 0 : index
    %11 = vector.load %arg3[%c0_4, %c0_5] : memref<2x128xf32, #tpu.memory_space<vmem>>, vector<1x128xf32>
    %12 = arith.mulf %10, %11 : vector<1x128xf32>
    %c1_6 = arith.constant 1 : index
    %c0_7 = arith.constant 0 : index
    %13 = vector.load %arg3[%c1_6, %c0_7] : memref<2x128xf32, #tpu.memory_space<vmem>>, vector<1x128xf32>
    %14 = arith.mulf %2, %12 : vector<1x128xf32>
    %15 = arith.subf %13, %14 : vector<1x128xf32>
    %16 = tpu.iota {dimensions = array<i32: 1>} : vector<16x24x1xi32>
    %c16_i32 = arith.constant 16 : i32
    %17 = vector.broadcast %c16_i32 : i32 to vector<16x24x1xi32>
    %18 = arith.cmpi slt, %16, %17 : vector<16x24x1xi32>
    %19 = arith.extui %18 : vector<16x24x1xi1> to vector<16x24x1xi32>
    %20 = arith.sitofp %19 : vector<16x24x1xi32> to vector<16x24x1xf32>
    %21 = vector.shape_cast %20 : vector<16x24x1xf32> to vector<384x1xf32>
    %c0_8 = arith.constant 0 : index
    %c0_9 = arith.constant 0 : index
    %c0_10 = arith.constant 0 : index
    %22 = vector.load %arg1[%c0_8, %c0_9, %c0_10] : memref<1x384x128xbf16, #tpu.memory_space<vmem>>, vector<1x384x128xbf16>
    %23 = vector.shape_cast %22 : vector<1x384x128xbf16> to vector<384x128xbf16>
    %24 = arith.extf %23 : vector<384x128xbf16> to vector<384x128xf32>
    %25 = vector.broadcast %12 : vector<1x128xf32> to vector<384x128xf32>
    %26 = arith.mulf %24, %25 : vector<384x128xf32>
    %27 = vector.broadcast %15 : vector<1x128xf32> to vector<384x128xf32>
    %28 = arith.addf %26, %27 : vector<384x128xf32>
    %cst_11 = arith.constant 0.000000e+00 : f32
    %29 = vector.broadcast %cst_11 : f32 to vector<384x128xf32>
    %30 = arith.maximumf %28, %29 : vector<384x128xf32>
    %31 = vector.broadcast %21 : vector<384x1xf32> to vector<384x128xf32>
    %32 = arith.mulf %30, %31 : vector<384x128xf32>
    %cst_12 = arith.constant 0.000000e+00 : bf16
    %33 = vector.broadcast %cst_12 : bf16 to vector<25x128xbf16>
    %c0_13 = arith.constant 0 : index
    %c0_14 = arith.constant 0 : index
    %34 = vector.load %arg7[%c0_13, %c0_14] : memref<440x128xbf16, #tpu.memory_space<vmem>>, vector<25x128xbf16>
    tpu.vector_store %arg7[%c0_13, %c0_14], %33 {strides = array<i32>} : memref<440x128xbf16, #tpu.memory_space<vmem>>, vector<25x128xbf16>,
    %cst_15 = arith.constant 0.000000e+00 : bf16
    %35 = vector.broadcast %cst_15 : bf16 to vector<31x128xbf16>
    %c409 = arith.constant 409 : index
    %c0_16 = arith.constant 0 : index
    %36 = vector.load %arg7[%c409, %c0_16] : memref<440x128xbf16, #tpu.memory_space<vmem>>, vector<31x128xbf16>
    tpu.vector_store %arg7[%c409, %c0_16], %35 {strides = array<i32>} : memref<440x128xbf16, #tpu.memory_space<vmem>>, vector<31x128xbf16>,
    %37 = arith.truncf %32 : vector<384x128xf32> to vector<384x128xbf16>
    %c25 = arith.constant 25 : index
    %c0_17 = arith.constant 0 : index
    %38 = vector.load %arg7[%c25, %c0_17] : memref<440x128xbf16, #tpu.memory_space<vmem>>, vector<384x128xbf16>
    tpu.vector_store %arg7[%c25, %c0_17], %37 {strides = array<i32>} : memref<440x128xbf16, #tpu.memory_space<vmem>>, vector<384x128xbf16>,
    %c0_18 = arith.constant 0 : index
    %c0_19 = arith.constant 0 : index
    %39 = vector.load %arg7[%c0_18, %c0_19] : memref<440x128xbf16, #tpu.memory_space<vmem>>, vector<384x128xbf16>
    %c1_20 = arith.constant 1 : index
    %c0_21 = arith.constant 0 : index
    %40 = vector.load %arg7[%c1_20, %c0_21] : memref<440x128xbf16, #tpu.memory_space<vmem>>, vector<384x128xbf16>
    %c2 = arith.constant 2 : index
    %c0_22 = arith.constant 0 : index
    %41 = vector.load %arg7[%c2, %c0_22] : memref<440x128xbf16, #tpu.memory_space<vmem>>, vector<384x128xbf16>
    %c24 = arith.constant 24 : index
    %c0_23 = arith.constant 0 : index
    %42 = vector.load %arg7[%c24, %c0_23] : memref<440x128xbf16, #tpu.memory_space<vmem>>, vector<384x128xbf16>
    %c25_24 = arith.constant 25 : index
    %c0_25 = arith.constant 0 : index
    %43 = vector.load %arg7[%c25_24, %c0_25] : memref<440x128xbf16, #tpu.memory_space<vmem>>, vector<384x128xbf16>
    %c26 = arith.constant 26 : index
    %c0_26 = arith.constant 0 : index
    %44 = vector.load %arg7[%c26, %c0_26] : memref<440x128xbf16, #tpu.memory_space<vmem>>, vector<384x128xbf16>
    %c48 = arith.constant 48 : index
    %c0_27 = arith.constant 0 : index
    %45 = vector.load %arg7[%c48, %c0_27] : memref<440x128xbf16, #tpu.memory_space<vmem>>, vector<384x128xbf16>
    %c49 = arith.constant 49 : index
    %c0_28 = arith.constant 0 : index
    %46 = vector.load %arg7[%c49, %c0_28] : memref<440x128xbf16, #tpu.memory_space<vmem>>, vector<384x128xbf16>
    %c50 = arith.constant 50 : index
    %c0_29 = arith.constant 0 : index
    %47 = vector.load %arg7[%c50, %c0_29] : memref<440x128xbf16, #tpu.memory_space<vmem>>, vector<384x128xbf16>
    %48 = tpu.concatenate %39, %40, %41, %42, %43, %44, %45, %46, %47 in 1 : vector<384x128xbf16>, vector<384x128xbf16>, vector<384x128xbf16>, vector<384x128xbf16>, vector<384x128xbf16>, vector<384x128xbf16>, vector<384x128xbf16>, vector<384x128xbf16>, vector<384x128xbf16> -> vector<384x1152xbf16>
    %c0_30 = arith.constant 0 : index
    %c0_31 = arith.constant 0 : index
    %49 = vector.load %arg4[%c0_30, %c0_31] : memref<1152x128xbf16, #tpu.memory_space<vmem>>, vector<1152x128xbf16>
    %cst_32 = arith.constant dense<0.000000e+00> : vector<384x128xf32>
    %50 = tpu.matmul %48, %49, %cst_32 {dimension_numbers = #tpu.dot_dimension_numbers<[1], [0], [0], [1], [0, 0, 1, 1], [], []>} : vector<384x1152xbf16>, vector<1152x128xbf16>, vector<384x128xf32> -> vector<384x128xf32>
    %51 = arith.truncf %50 : vector<384x128xf32> to vector<384x128xbf16>
    %c0_33 = arith.constant 0 : index
    %c0_34 = arith.constant 0 : index
    %c0_35 = arith.constant 0 : index
    %52 = vector.load %arg5[%c0_33, %c0_34, %c0_35] : memref<1x384x128xbf16, #tpu.memory_space<vmem>>, vector<1x384x128xbf16>
    %53 = vector.shape_cast %52 : vector<1x384x128xbf16> to vector<384x128xbf16>
    %54 = vector.shape_cast %51 : vector<384x128xbf16> to vector<1x384x128xbf16>
    tpu.vector_store %arg5[%c0_33, %c0_34, %c0_35], %54 {strides = array<i32>} : memref<1x384x128xbf16, #tpu.memory_space<vmem>>, vector<1x384x128xbf16>,
    %55 = vector.broadcast %21 : vector<384x1xf32> to vector<384x128xf32>
    %56 = arith.mulf %50, %55 : vector<384x128xf32>
    %cst_36 = arith.constant dense<0.000000e+00> : vector<128xf32>
    %57 = vector.multi_reduction <add>, %56, %cst_36 [0] : vector<384x128xf32> to vector<128xf32>
    %58 = vector.shape_cast %57 : vector<128xf32> to vector<1x128xf32>
    %59 = arith.mulf %56, %56 : vector<384x128xf32>
    %cst_37 = arith.constant dense<0.000000e+00> : vector<128xf32>
    %60 = vector.multi_reduction <add>, %59, %cst_37 [0] : vector<384x128xf32> to vector<128xf32>
    %61 = vector.shape_cast %60 : vector<128xf32> to vector<1x128xf32>
    %62 = tpu.concatenate %58, %61 in 0 : vector<1x128xf32>, vector<1x128xf32> -> vector<2x128xf32>
    %c0_38 = arith.constant 0 : index
    %c0_39 = arith.constant 0 : index
    %c0_40 = arith.constant 0 : index
    %63 = vector.load %arg6[%c0_38, %c0_39, %c0_40] : memref<1x2x128xf32, #tpu.memory_space<vmem>>, vector<1x2x128xf32>
    %64 = vector.shape_cast %63 : vector<1x2x128xf32> to vector<2x128xf32>
    %65 = vector.shape_cast %62 : vector<2x128xf32> to vector<1x2x128xf32>
    tpu.vector_store %arg6[%c0_38, %c0_39, %c0_40], %65 {strides = array<i32>} : memref<1x2x128xf32, #tpu.memory_space<vmem>>, vector<1x2x128xf32>,
    return
  }
  func.func @transform_0(%arg0: i32) -> (i32, i32, i32) {
    %c0_i32 = arith.constant 0 : i32
    %c0_i32_0 = arith.constant 0 : i32
    %c0_i32_1 = arith.constant 0 : i32
    return %arg0, %c0_i32, %c0_i32_0 : i32, i32, i32
  }
  func.func @transform_1(%arg0: i32) -> (i32, i32) {
    %c0_i32 = arith.constant 0 : i32
    %c0_i32_0 = arith.constant 0 : i32
    %c0_i32_1 = arith.constant 0 : i32
    return %c0_i32, %c0_i32_0 : i32, i32
  }
  func.func @transform_2(%arg0: i32) -> (i32, i32) {
    %c0_i32 = arith.constant 0 : i32
    %c0_i32_0 = arith.constant 0 : i32
    %c0_i32_1 = arith.constant 0 : i32
    return %c0_i32, %c0_i32_0 : i32, i32
  }
  func.func @transform_3(%arg0: i32) -> (i32, i32) {
    %c0_i32 = arith.constant 0 : i32
    %c0_i32_0 = arith.constant 0 : i32
    %c0_i32_1 = arith.constant 0 : i32
    return %c0_i32, %c0_i32_0 : i32, i32
  }
  func.func @transform_4(%arg0: i32) -> (i32, i32, i32) {
    %c0_i32 = arith.constant 0 : i32
    %c0_i32_0 = arith.constant 0 : i32
    %c0_i32_1 = arith.constant 0 : i32
    return %arg0, %c0_i32, %c0_i32_0 : i32, i32, i32
  }
  func.func @transform_5(%arg0: i32) -> (i32, i32, i32) {
    %c0_i32 = arith.constant 0 : i32
    %c0_i32_0 = arith.constant 0 : i32
    %c0_i32_1 = arith.constant 0 : i32
    return %arg0, %c0_i32, %c0_i32_0 : i32, i32, i32
  }
}

module attributes {stable_mosaic.version = 11 : i64} {
  func.func @bn_relu_depad_kernel(%arg0: i32, %arg1: memref<1x384x128xbf16, #tpu.memory_space<vmem>>, %arg2: memref<2x128xf32, #tpu.memory_space<vmem>>, %arg3: memref<2x128xf32, #tpu.memory_space<vmem>>, %arg4: memref<1x256x8xf32, #tpu.memory_space<vmem>>) attributes {dimension_semantics = [#tpu.dimension_semantics<parallel>], iteration_bounds = array<i64: 2>, scalar_prefetch = 0 : i64, scratch_operands = 0 : i64, tpu.core_type = #tpu.core_type<tc>, window_params = [{transform_indices = @transform_0, window_bounds = array<i64: 1, 384, 128>}, {pipeline_mode = #tpu.pipeline_mode<synchronous>, transform_indices = @transform_1, window_bounds = array<i64: 2, 128>}, {pipeline_mode = #tpu.pipeline_mode<synchronous>, transform_indices = @transform_2, window_bounds = array<i64: 2, 128>}, {transform_indices = @transform_3, window_bounds = array<i64: 1, 256, 8>}]} {
    %c0 = arith.constant 0 : index
    %c0_0 = arith.constant 0 : index
    %0 = vector.load %arg2[%c0, %c0_0] : memref<2x128xf32, #tpu.memory_space<vmem>>, vector<1x128xf32>
    %cst = arith.constant 0.001953125 : f32
    %1 = vector.broadcast %cst : f32 to vector<1x128xf32>
    %2 = arith.mulf %0, %1 : vector<1x128xf32>
    %c1 = arith.constant 1 : index
    %c0_1 = arith.constant 0 : index
    %3 = vector.load %arg2[%c1, %c0_1] : memref<2x128xf32, #tpu.memory_space<vmem>>, vector<1x128xf32>
    %cst_2 = arith.constant 0.001953125 : f32
    %4 = vector.broadcast %cst_2 : f32 to vector<1x128xf32>
    %5 = arith.mulf %3, %4 : vector<1x128xf32>
    %6 = arith.mulf %2, %2 : vector<1x128xf32>
    %7 = arith.subf %5, %6 : vector<1x128xf32>
    %cst_3 = arith.constant 9.99999974E-6 : f32
    %8 = vector.broadcast %cst_3 : f32 to vector<1x128xf32>
    %9 = arith.addf %7, %8 : vector<1x128xf32>
    %10 = math.rsqrt %9 : vector<1x128xf32>
    %c0_4 = arith.constant 0 : index
    %c0_5 = arith.constant 0 : index
    %11 = vector.load %arg3[%c0_4, %c0_5] : memref<2x128xf32, #tpu.memory_space<vmem>>, vector<1x128xf32>
    %12 = arith.mulf %10, %11 : vector<1x128xf32>
    %c1_6 = arith.constant 1 : index
    %c0_7 = arith.constant 0 : index
    %13 = vector.load %arg3[%c1_6, %c0_7] : memref<2x128xf32, #tpu.memory_space<vmem>>, vector<1x128xf32>
    %14 = arith.mulf %2, %12 : vector<1x128xf32>
    %15 = arith.subf %13, %14 : vector<1x128xf32>
    %c0_8 = arith.constant 0 : index
    %c0_9 = arith.constant 0 : index
    %c0_10 = arith.constant 0 : index
    %16 = vector.load %arg1[%c0_8, %c0_9, %c0_10] : memref<1x384x128xbf16, #tpu.memory_space<vmem>>, vector<1x384x128xbf16>
    %17 = vector.shape_cast %16 : vector<1x384x128xbf16> to vector<384x128xbf16>
    %18 = arith.extf %17 : vector<384x128xbf16> to vector<384x128xf32>
    %19 = vector.broadcast %12 : vector<1x128xf32> to vector<384x128xf32>
    %20 = arith.mulf %18, %19 : vector<384x128xf32>
    %21 = vector.broadcast %15 : vector<1x128xf32> to vector<384x128xf32>
    %22 = arith.addf %20, %21 : vector<384x128xf32>
    %cst_11 = arith.constant 0.000000e+00 : f32
    %23 = vector.broadcast %cst_11 : f32 to vector<384x128xf32>
    %24 = arith.maximumf %22, %23 : vector<384x128xf32>
    %25 = vector.shape_cast %24 : vector<384x128xf32> to vector<16x24x128xf32>
    %26 = vector.extract_strided_slice %25 {offsets = [0, 0, 0], sizes = [16, 16, 8], strides = [1, 1, 1]} : vector<16x24x128xf32> to vector<16x16x8xf32>
    %27 = vector.shape_cast %26 : vector<16x16x8xf32> to vector<256x8xf32>
    %c0_12 = arith.constant 0 : index
    %c0_13 = arith.constant 0 : index
    %c0_14 = arith.constant 0 : index
    %28 = vector.load %arg4[%c0_12, %c0_13, %c0_14] : memref<1x256x8xf32, #tpu.memory_space<vmem>>, vector<1x256x8xf32>
    %29 = vector.shape_cast %28 : vector<1x256x8xf32> to vector<256x8xf32>
    %30 = vector.shape_cast %27 : vector<256x8xf32> to vector<1x256x8xf32>
    tpu.vector_store %arg4[%c0_12, %c0_13, %c0_14], %30 {strides = array<i32>} : memref<1x256x8xf32, #tpu.memory_space<vmem>>, vector<1x256x8xf32>,
    return
  }
  func.func @transform_0(%arg0: i32) -> (i32, i32, i32) {
    %c0_i32 = arith.constant 0 : i32
    %c0_i32_0 = arith.constant 0 : i32
    %c0_i32_1 = arith.constant 0 : i32
    return %arg0, %c0_i32, %c0_i32_0 : i32, i32, i32
  }
  func.func @transform_1(%arg0: i32) -> (i32, i32) {
    %c0_i32 = arith.constant 0 : i32
    %c0_i32_0 = arith.constant 0 : i32
    %c0_i32_1 = arith.constant 0 : i32
    return %c0_i32, %c0_i32_0 : i32, i32
  }
  func.func @transform_2(%arg0: i32) -> (i32, i32) {
    %c0_i32 = arith.constant 0 : i32
    %c0_i32_0 = arith.constant 0 : i32
    %c0_i32_1 = arith.constant 0 : i32
    return %c0_i32, %c0_i32_0 : i32, i32
  }
  func.func @transform_3(%arg0: i32) -> (i32, i32, i32) {
    %c0_i32 = arith.constant 0 : i32
    %c0_i32_0 = arith.constant 0 : i32
    %c0_i32_1 = arith.constant 0 : i32
    return %arg0, %c0_i32, %c0_i32_0 : i32, i32, i32
  }
}

</mosaic_0001>

<llo_original>
// kernel: encoder_block_forward.3
$region0: #{encoder_block_forward.3}
  #allocation0 [shape = 'u32[]', space=smem, size = 0x4, offset = 0x4, fixed_abs, tag = 'smem constant byte address 0x4 - core index']
  #allocation1 [shape = 'u32[72,128]{1,0:T(1,128)}', space=vmem, size = 0x9000, scoped, tag = 'internal scratch']
  %s0 = inlined_call_operand.vmem [shape: bf16[2,384,72], index: 0, kind: input, shape index: {}]
  %s1 = inlined_call_operand.vmem [shape: bf16[72,128], index: 1, kind: input, shape index: {}]
  %s2 = inlined_call_operand.vmem [shape: bf16[2,384,128], index: 2, kind: output, shape index: {0}]
  %s3 = inlined_call_operand.vmem [shape: f32[2,2,128], index: 3, kind: output, shape index: {1}]
  %4 = xla_tuple %s2, %s3
  %s5 = sld [smem:[#allocation0]]
  $region49: #{encoder_block_forward.3} parent=0
    _
  %s7 = ssub.s32 1, %s5
  %s8 = scalar_select 0, %s7, %s5
  loop: start=0, step=1, limit=4
  $region2: #{encoder_block_forward.3} parent=0 // loop_pre_header
    _
  $region3: #{encoder_block_forward.3} parent=0 // loop_header
    %s10 = sphi 0, %s14
    %p11 = scmp.ge.s32.totalorder %s10, 4
    %s20 = sphi 0, %s22
    %s23 = sphi 0, %s20
    %s24 = sphi 0, %s23
    %s40 = sphi 0, %s24
    %s44 = sphi 0, %s44
    %s46 = sphi 0, %s44
    %s47 = sphi 0, %s46
    %s61 = sphi 0, %s47
    %s67 = sphi 0, %s69
    %s70 = sphi 0, %s67
    %s71 = sphi 0, %s70
    %s87 = sphi 0, %s71
    %s93 = sphi 0, %s95
    %s96 = sphi 0, %s93
    %s97 = sphi 0, %s96
    %s113 = sphi 0, %s97
  $region4: #{encoder_block_forward.3} parent=0 // loop_header_branch
    %13 = sbr.rel (%p11) target = $region8
  $region5: #{encoder_block_forward.3} parent=0 // loop_body
    %s15 = ssub.s32 %s10, 1
    %s16 = ssub.s32 %s10, 2
    %s17 = sadd.s32 %s10, 1
    %s18 = ssub.s32 %s10, %s17
    %p19 = scmp.eq.s32.totalorder %s18, 0
    %s21 = sadd.s32 %s20, 1
    %s22 = scalar_select %p19, %s20, %s21
    %p25 = pneg %p19
    %p26 = scmp.eq.s32.totalorder %s10, 1
    %p27 = por %p25, %p26
    %p28 = scmp.ne.s32.totalorder %s20, %s23
    %p29 = scmp.eq.s32.totalorder %s10, 0
    %p30 = por %p28, %p29
    %p31 = scmp.ne.s32.totalorder %s20, %s23
    %p32 = scmp.eq.s32.totalorder %s15, 1
    %p33 = por %p31, %p32
    %p34 = scmp.ne.s32.totalorder %s23, %s24
    %p35 = scmp.eq.s32.totalorder %s15, 0
    %p36 = por %p34, %p35
    %p37 = scmp.ne.s32.totalorder %s23, %s24
    %p38 = scmp.eq.s32.totalorder %s16, 1
    %p39 = por %p37, %p38
    %p41 = scmp.ne.s32.totalorder %s24, %s40
    %p42 = scmp.eq.s32.totalorder %s16, 0
    %p43 = por %p41, %p42
    %s45 = sadd.s32 %s44, 1
    %p48 = scmp.eq.s32.totalorder %s10, 1
    %p49 = scmp.ne.s32.totalorder %s44, %s46
    %p50 = scmp.eq.s32.totalorder %s10, 0
    %p51 = por %p49, %p50
    %p52 = scmp.ne.s32.totalorder %s44, %s46
    %p53 = scmp.eq.s32.totalorder %s15, 1
    %p54 = por %p52, %p53
    %p55 = scmp.ne.s32.totalorder %s46, %s47
    %p56 = scmp.eq.s32.totalorder %s15, 0
    %p57 = por %p55, %p56
    %p58 = scmp.ne.s32.totalorder %s46, %s47
    %p59 = scmp.eq.s32.totalorder %s16, 1
    %p60 = por %p58, %p59
    %p62 = scmp.ne.s32.totalorder %s47, %s61
    %p63 = scmp.eq.s32.totalorder %s16, 0
    %p64 = por %p62, %p63
    %s65 = ssub.s32 %s10, %s17
    %p66 = scmp.eq.s32.totalorder %s65, 0
    %s68 = sadd.s32 %s67, 1
    %s69 = scalar_select %p66, %s67, %s68
    %p72 = pneg %p66
    %p73 = scmp.eq.s32.totalorder %s10, 1
    %p74 = por %p72, %p73
    %p75 = scmp.ne.s32.totalorder %s67, %s70
    %p76 = scmp.eq.s32.totalorder %s10, 0
    %p77 = por %p75, %p76
    %p78 = scmp.ne.s32.totalorder %s67, %s70
    %p79 = scmp.eq.s32.totalorder %s15, 1
    %p80 = por %p78, %p79
    %p81 = scmp.ne.s32.totalorder %s70, %s71
    %p82 = scmp.eq.s32.totalorder %s15, 0
    %p83 = por %p81, %p82
    %p84 = scmp.ne.s32.totalorder %s70, %s71
    %p85 = scmp.eq.s32.totalorder %s16, 1
    %p86 = por %p84, %p85
    %p88 = scmp.ne.s32.totalorder %s71, %s87
    %p89 = scmp.eq.s32.totalorder %s16, 0
    %p90 = por %p88, %p89
    %s91 = ssub.s32 %s10, %s17
    %p92 = scmp.eq.s32.totalorder %s91, 0
    %s94 = sadd.s32 %s93, 1
    %s95 = scalar_select %p92, %s93, %s94
    %p98 = pneg %p92
    %p99 = scmp.eq.s32.totalorder %s10, 1
    %p100 = por %p98, %p99
    %p101 = scmp.ne.s32.totalorder %s93, %s96
    %p102 = scmp.eq.s32.totalorder %s10, 0
    %p103 = por %p101, %p102
    %p104 = scmp.ne.s32.totalorder %s93, %s96
    %p105 = scmp.eq.s32.totalorder %s15, 1
    %p106 = por %p104, %p105
    %p107 = scmp.ne.s32.totalorder %s96, %s97
    %p108 = scmp.eq.s32.totalorder %s15, 0
    %p109 = por %p107, %p108
    %p110 = scmp.ne.s32.totalorder %s96, %s97
    %p111 = scmp.eq.s32.totalorder %s16, 1
    %p112 = por %p110, %p111
    %p114 = scmp.ne.s32.totalorder %s97, %s113
    %p115 = scmp.eq.s32.totalorder %s16, 0
    %p116 = por %p114, %p115
    %p117 = scmp.le.s32.totalorder 1, %s10
    %p118 = scmp.lt.s32.totalorder %s10, 3
    %p119 = pnand %p117, %p118
    %p120 = pneg %p119
    // Predicated region
    $region9: #{encoder_block_forward.3} parent=5 // pred_check
      _
    $region10: #{encoder_block_forward.3} parent=5 // pred_check_branch
      %122 = sbr.rel (%p119) target = $region12
    $region11: #{encoder_block_forward.3} parent=5 // pred_region
      %s123 = ssub.s32 %s10, 1
      // Predicated region
      $region13: #{encoder_block_forward.3} parent=11 // pred_check
        %p124 = pneg %p57
      $region14: #{encoder_block_forward.3} parent=11 // pred_check_branch
        %126 = sbr.rel (%p124) target = $region16
      $region15: #{encoder_block_forward.3} parent=11 // pred_region
        _
      $region16: #{encoder_block_forward.3} parent=11 // pred_fallthru
        _
    $region12: #{encoder_block_forward.3} parent=5 // pred_fallthru
      _
    %p127 = scmp.lt.s32.totalorder %s10, 2
    // Predicated region
    $region17: #{encoder_block_forward.3} parent=5 // pred_check
      %p128 = pneg %p127
    $region18: #{encoder_block_forward.3} parent=5 // pred_check_branch
      %130 = sbr.rel (%p128) target = $region20
    $region19: #{encoder_block_forward.3} parent=5 // pred_region
      // Predicated region
      $region21: #{encoder_block_forward.3} parent=19 // pred_check
        %p131 = pneg %p30
      $region22: #{encoder_block_forward.3} parent=19 // pred_check_branch
        %133 = sbr.rel (%p131) target = $region24
      $region23: #{encoder_block_forward.3} parent=19 // pred_region
        %p134 = scmp.lt.s32.totalorder %s10, 1
        %s135 = scalar_select %p134, %s10, 1
        %s136 = smul.addr %s135, 48
        %s137 = smul.addr %s136, 4
        %s138 = scalar_lea.vmem %s0, %s137
      $region24: #{encoder_block_forward.3} parent=19 // pred_fallthru
        _
    $region20: #{encoder_block_forward.3} parent=5 // pred_fallthru
      _
    %p139 = scmp.le.s32.totalorder 1, %s10
    %p140 = scmp.lt.s32.totalorder %s10, 3
    %p141 = pnand %p139, %p140
    %p142 = pneg %p141
    // Predicated region
    $region25: #{encoder_block_forward.3} parent=5 // pred_check
      _
    $region26: #{encoder_block_forward.3} parent=5 // pred_check_branch
      %144 = sbr.rel (%p141) target = $region28
    $region27: #{encoder_block_forward.3} parent=5 // pred_region
      %s145 = ssub.s32 %s10, 1
      %p146 = scmp.lt.s32.totalorder %s15, 1
      %s147 = scalar_select %p146, %s15, 1
      %s148 = smul.addr %s147, 48
      %s149 = smul.addr %s148, 4
      %s150 = scalar_lea.vmem %s0, %s149
      %p151 = pneg %p36
      %p152 = pneg %p33
      %p153 = pneg %p57
      %p154 = pneg %p54
      %p155 = pneg %p83
      %p156 = pneg %p80
      %p157 = scmp.lt.s32.totalorder %s15, 1
      %s158 = scalar_select %p157, %s15, 1
      %s159 = smul.addr %s158, 48
      %s160 = smul.addr %s159, 4
      %s161 = scalar_lea.vmem %s2, %s160
      %p162 = pneg %p109
      %p163 = pneg %p106
      %p164 = scmp.lt.s32.totalorder %s15, 1
      %s165 = scalar_select %p164, %s15, 1
      %s166 = smul.addr %s165, 2
      %s167 = scalar_lea.vmem %s3, %s166
      %p168 = scmp.lt.s32.totalorder %s15, 1
      %s169 = scalar_select %p168, %s15, 1
      %s170 = smul.addr %s169, 48
      %s171 = smul.addr %s170, 4
      %s172 = scalar_lea.vmem %s0, %s171
      %p173 = scmp.lt.s32.totalorder %s15, 1
      %s174 = scalar_select %p173, %s15, 1
      %s175 = smul.addr %s174, 48
      %s176 = smul.addr %s175, 4
      %s177 = scalar_lea.vmem %s2, %s176
      %p178 = scmp.lt.s32.totalorder %s15, 1
      %s179 = scalar_select %p178, %s15, 1
      %s180 = smul.addr %s179, 2
      %s181 = scalar_lea.vmem %s3, %s180
      %v183 = vld [vmem:[%s172] sm:$0xf]
      %v184 = vld [vmem:[%s172 + $0x4] sm:$0xf]
      %v185 = vld [vmem:[%s172 + $0x8] sm:$0xf]
      %v186 = vld [vmem:[%s172 + $0xc] sm:$0xf]
      %v187 = vld [vmem:[%s172 + $0x10] sm:$0xf]
      %v188 = vld [vmem:[%s172 + $0x14] sm:$0xf]
      %v189 = vld [vmem:[%s172 + $0x18] sm:$0xf]
      %v190 = vld [vmem:[%s172 + $0x1c] sm:$0xf]
      %v191 = vld [vmem:[%s172 + $0x20] sm:$0xf]
      %v192 = vld [vmem:[%s172 + $0x24] sm:$0xf]
      %v193 = vld [vmem:[%s172 + $0x28] sm:$0xf]
      %v194 = vld [vmem:[%s172 + $0x2c] sm:$0xf]
      %v195 = vld [vmem:[%s172 + $0x30] sm:$0xf]
      %v196 = vld [vmem:[%s172 + $0x34] sm:$0xf]
      %v197 = vld [vmem:[%s172 + $0x38] sm:$0xf]
      %v198 = vld [vmem:[%s172 + $0x3c] sm:$0xf]
      %v199 = vld [vmem:[%s172 + $0x40] sm:$0xf]
      %v200 = vld [vmem:[%s172 + $0x44] sm:$0xf]
      %v201 = vld [vmem:[%s172 + $0x48] sm:$0xf]
      %v202 = vld [vmem:[%s172 + $0x4c] sm:$0xf]
      %v203 = vld [vmem:[%s172 + $0x50] sm:$0xf]
      %v204 = vld [vmem:[%s172 + $0x54] sm:$0xf]
      %v205 = vld [vmem:[%s172 + $0x58] sm:$0xf]
      %v206 = vld [vmem:[%s172 + $0x5c] sm:$0xf]
      %v207 = vld [vmem:[%s172 + $0x60] sm:$0xf]
      %v208 = vld [vmem:[%s172 + $0x64] sm:$0xf]
      %v209 = vld [vmem:[%s172 + $0x68] sm:$0xf]
      %v210 = vld [vmem:[%s172 + $0x6c] sm:$0xf]
      %v211 = vld [vmem:[%s172 + $0x70] sm:$0xf]
      %v212 = vld [vmem:[%s172 + $0x74] sm:$0xf]
      %v213 = vld [vmem:[%s172 + $0x78] sm:$0xf]
      %v214 = vld [vmem:[%s172 + $0x7c] sm:$0xf]
      %v215 = vld [vmem:[%s172 + $0x80] sm:$0xf]
      %v216 = vld [vmem:[%s172 + $0x84] sm:$0xf]
      %v217 = vld [vmem:[%s172 + $0x88] sm:$0xf]
      %v218 = vld [vmem:[%s172 + $0x8c] sm:$0xf]
      %v219 = vld [vmem:[%s172 + $0x90] sm:$0xf]
      %v220 = vld [vmem:[%s172 + $0x94] sm:$0xf]
      %v221 = vld [vmem:[%s172 + $0x98] sm:$0xf]
      %v222 = vld [vmem:[%s172 + $0x9c] sm:$0xf]
      %v223 = vld [vmem:[%s172 + $0xa0] sm:$0xf]
      %v224 = vld [vmem:[%s172 + $0xa4] sm:$0xf]
      %v225 = vld [vmem:[%s172 + $0xa8] sm:$0xf]
      %v226 = vld [vmem:[%s172 + $0xac] sm:$0xf]
      %v227 = vld [vmem:[%s172 + $0xb0] sm:$0xf]
      %v228 = vld [vmem:[%s172 + $0xb4] sm:$0xf]
      %v229 = vld [vmem:[%s172 + $0xb8] sm:$0xf]
      %v230 = vld [vmem:[%s172 + $0xbc] sm:$0xf]
      %v231 = vld [vmem:[%s1] sm:$0xf]
      %v232 = vld [vmem:[%s1 + $0x4] sm:$0xf]
      %v233 = vld [vmem:[%s1 + $0x8] sm:$0xf]
      %v234 = vld [vmem:[%s1 + $0xc] sm:$0xf]
      %v235 = vld [vmem:[%s1 + $0x10] sm:$0xf]
      %v236 = vld [vmem:[%s1 + $0x14] sm:$0xf]
      %v237 = vld [vmem:[%s1 + $0x18] sm:$0xf]
      %v238 = vld [vmem:[%s1 + $0x1c] sm:$0xf]
      %v239 = vld [vmem:[%s1 + $0x20] sm:$0xf]
      %v288 = vunpack.c.l.b16 %v183
      %v289 = vunpack.c.l.b16 %v184
      %v290 = vunpack.c.l.b16 %v185
      %v291 = vunpack.c.l.b16 %v186
      %v292 = vunpack.c.l.b16 %v187
      %v293 = vunpack.c.l.b16 %v188
      %v294 = vunpack.c.l.b16 %v189
      %v295 = vunpack.c.l.b16 %v190
      %v296 = vunpack.c.l.b16 %v191
      %v297 = vunpack.c.l.b16 %v192
      %v298 = vunpack.c.l.b16 %v193
      %v299 = vunpack.c.l.b16 %v194
      %v300 = vunpack.c.l.b16 %v195
      %v301 = vunpack.c.l.b16 %v196
      %v302 = vunpack.c.l.b16 %v197
      %v303 = vunpack.c.l.b16 %v198
      %v304 = vunpack.c.l.b16 %v199
      %v305 = vunpack.c.l.b16 %v200
      %v306 = vunpack.c.l.b16 %v201
      %v307 = vunpack.c.l.b16 %v202
      %v308 = vunpack.c.l.b16 %v203
      %v309 = vunpack.c.l.b16 %v204
      %v310 = vunpack.c.l.b16 %v205
      %v311 = vunpack.c.l.b16 %v206
      %v312 = vunpack.c.l.b16 %v207
      %v313 = vunpack.c.l.b16 %v208
      %v314 = vunpack.c.l.b16 %v209
      %v315 = vunpack.c.l.b16 %v210
      %v316 = vunpack.c.l.b16 %v211
      %v317 = vunpack.c.l.b16 %v212
      %v318 = vunpack.c.l.b16 %v213
      %v319 = vunpack.c.l.b16 %v214
      %v320 = vunpack.c.l.b16 %v215
      %v321 = vunpack.c.l.b16 %v216
      %v322 = vunpack.c.l.b16 %v217
      %v323 = vunpack.c.l.b16 %v218
      %v324 = vunpack.c.l.b16 %v219
      %v325 = vunpack.c.l.b16 %v220
      %v326 = vunpack.c.l.b16 %v221
      %v327 = vunpack.c.l.b16 %v222
      %v328 = vunpack.c.l.b16 %v223
      %v329 = vunpack.c.l.b16 %v224
      %v330 = vunpack.c.l.b16 %v225
      %v331 = vunpack.c.l.b16 %v226
      %v332 = vunpack.c.l.b16 %v227
      %v333 = vunpack.c.l.b16 %v228
      %v334 = vunpack.c.l.b16 %v229
      %v335 = vunpack.c.l.b16 %v230
      %v336 = vpack.c.b16 %v289, %v288
      %v337 = vpack.c.b16 %v291, %v290
      %v338 = vpack.c.b16 %v293, %v292
      %v339 = vpack.c.b16 %v295, %v294
      %v340 = vpack.c.b16 %v297, %v296
      %v341 = vpack.c.b16 %v299, %v298
      %v342 = vpack.c.b16 %v301, %v300
      %v343 = vpack.c.b16 %v303, %v302
      %v344 = vpack.c.b16 %v305, %v304
      %v345 = vpack.c.b16 %v307, %v306
      %v346 = vpack.c.b16 %v309, %v308
      %v347 = vpack.c.b16 %v311, %v310
      %v348 = vpack.c.b16 %v313, %v312
      %v349 = vpack.c.b16 %v315, %v314
      %v350 = vpack.c.b16 %v317, %v316
      %v351 = vpack.c.b16 %v319, %v318
      %v352 = vpack.c.b16 %v321, %v320
      %v353 = vpack.c.b16 %v323, %v322
      %v354 = vpack.c.b16 %v325, %v324
      %v355 = vpack.c.b16 %v327, %v326
      %v356 = vpack.c.b16 %v329, %v328
      %v357 = vpack.c.b16 %v331, %v330
      %v358 = vpack.c.b16 %v333, %v332
      %v359 = vpack.c.b16 %v335, %v334
      %v369 = vunpack.c.l.b16 %v231
      %v370 = vunpack.c.l.b16 %v232
      %v371 = vunpack.c.l.b16 %v233
      %v372 = vunpack.c.l.b16 %v234
      %v373 = vunpack.c.l.b16 %v235
      %v374 = vunpack.c.l.b16 %v236
      %v375 = vunpack.c.l.b16 %v237
      %v376 = vunpack.c.l.b16 %v238
      %v377 = vunpack.c.l.b16 %v239
      %v378 = vpack.c.b16 %v370, %v369
      %v379 = vpack.c.b16 %v372, %v371
      %v380 = vpack.c.b16 %v374, %v373
      %v381 = vpack.c.b16 %v376, %v375
      %v382 = vpack.c.b16 %v377, %v377
      %vm387 = vcmask 588800
      %v389 = vsel %vm387, %v336, 0
      %v392 = vsel %vm387, %v337, 0
      %v395 = vsel %vm387, %v338, 0
      %v398 = vsel %vm387, %v339, 0
      %v401 = vsel %vm387, %v340, 0
      %v404 = vsel %vm387, %v341, 0
      %v407 = vsel %vm387, %v342, 0
      %v410 = vsel %vm387, %v343, 0
      %v413 = vsel %vm387, %v344, 0
      %v416 = vsel %vm387, %v345, 0
      %v419 = vsel %vm387, %v346, 0
      %v422 = vsel %vm387, %v347, 0
      %v425 = vsel %vm387, %v348, 0
      %v428 = vsel %vm387, %v349, 0
      %v431 = vsel %vm387, %v350, 0
      %v434 = vsel %vm387, %v351, 0
      %v437 = vsel %vm387, %v352, 0
      %v440 = vsel %vm387, %v353, 0
      %v443 = vsel %vm387, %v354, 0
      %v446 = vsel %vm387, %v355, 0
      %v449 = vsel %vm387, %v356, 0
      %v452 = vsel %vm387, %v357, 0
      %v455 = vsel %vm387, %v358, 0
      %v458 = vsel %vm387, %v359, 0
      %vm460 = vcmask 1043456
      %v462 = vsel %vm460, %v382, 0
      %464 = vmatpush.bf16.msra.mxu0 0
      %465 = vmatpush.bf16.msra.mxu0 0
      %466 = vmatpush.bf16.msra.mxu0 0
      %467 = vmatpush.bf16.msra.mxu0 %v462
      %468 = vmatpush.bf16.msra.mxu0 %v381
      %469 = vmatpush.bf16.msra.mxu0 %v380
      %470 = vmatpush.bf16.msra.mxu0 %v379
      %471 = vmatpush.bf16.msra.mxu0 %v378
      %472 = vmatmul.bf16.gmra.mxu0 %v389
      %v473 = vpop.f32.mrf.mxu0
      %v474 = vadd.f32 0.0, %v473
      %v475 = vpop.f32.mrf.mxu0
      %v476 = vadd.f32 0.0, %v475
      %477 = vmatmul.bf16.gmra.mxu0 %v392
      %v478 = vpop.f32.mrf.mxu0
      %v479 = vadd.f32 0.0, %v478
      %v480 = vpop.f32.mrf.mxu0
      %v481 = vadd.f32 0.0, %v480
      %482 = vmatmul.bf16.gmra.mxu0 %v395
      %v483 = vpop.f32.mrf.mxu0
      %v484 = vadd.f32 0.0, %v483
      %v485 = vpop.f32.mrf.mxu0
      %v486 = vadd.f32 0.0, %v485
      %487 = vmatmul.bf16.gmra.mxu0 %v398
      %v488 = vpop.f32.mrf.mxu0
      %v489 = vadd.f32 0.0, %v488
      %v490 = vpop.f32.mrf.mxu0
      %v491 = vadd.f32 0.0, %v490
      %492 = vmatmul.bf16.gmra.mxu0 %v401
      %v493 = vpop.f32.mrf.mxu0
      %v494 = vadd.f32 0.0, %v493
      %v495 = vpop.f32.mrf.mxu0
      %v496 = vadd.f32 0.0, %v495
      %497 = vmatmul.bf16.gmra.mxu0 %v404
      %v498 = vpop.f32.mrf.mxu0
      %v499 = vadd.f32 0.0, %v498
      %v500 = vpop.f32.mrf.mxu0
      %v501 = vadd.f32 0.0, %v500
      %502 = vmatmul.bf16.gmra.mxu0 %v407
      %v503 = vpop.f32.mrf.mxu0
      %v504 = vadd.f32 0.0, %v503
      %v505 = vpop.f32.mrf.mxu0
      %v506 = vadd.f32 0.0, %v505
      %507 = vmatmul.bf16.gmra.mxu0 %v410
      %v508 = vpop.f32.mrf.mxu0
      %v509 = vadd.f32 0.0, %v508
      %v510 = vpop.f32.mrf.mxu0
      %v511 = vadd.f32 0.0, %v510
      %512 = vmatmul.bf16.gmra.mxu0 %v413
      %v513 = vpop.f32.mrf.mxu0
      %v514 = vadd.f32 0.0, %v513
      %v515 = vpop.f32.mrf.mxu0
      %v516 = vadd.f32 0.0, %v515
      %517 = vmatmul.bf16.gmra.mxu0 %v416
      %v518 = vpop.f32.mrf.mxu0
      %v519 = vadd.f32 0.0, %v518
      %v520 = vpop.f32.mrf.mxu0
      %v521 = vadd.f32 0.0, %v520
      %522 = vmatmul.bf16.gmra.mxu0 %v419
      %v523 = vpop.f32.mrf.mxu0
      %v524 = vadd.f32 0.0, %v523
      %v525 = vpop.f32.mrf.mxu0
      %v526 = vadd.f32 0.0, %v525
      %527 = vmatmul.bf16.gmra.mxu0 %v422
      %v528 = vpop.f32.mrf.mxu0
      %v529 = vadd.f32 0.0, %v528
      %v530 = vpop.f32.mrf.mxu0
      %v531 = vadd.f32 0.0, %v530
      %532 = vmatmul.bf16.gmra.mxu0 %v425
      %v533 = vpop.f32.mrf.mxu0
      %v534 = vadd.f32 0.0, %v533
      %v535 = vpop.f32.mrf.mxu0
      %v536 = vadd.f32 0.0, %v535
      %537 = vmatmul.bf16.gmra.mxu0 %v428
      %v538 = vpop.f32.mrf.mxu0
      %v539 = vadd.f32 0.0, %v538
      %v540 = vpop.f32.mrf.mxu0
      %v541 = vadd.f32 0.0, %v540
      %542 = vmatmul.bf16.gmra.mxu0 %v431
      %v543 = vpop.f32.mrf.mxu0
      %v544 = vadd.f32 0.0, %v543
      %v545 = vpop.f32.mrf.mxu0
      %v546 = vadd.f32 0.0, %v545
      %547 = vmatmul.bf16.gmra.mxu0 %v434
      %v548 = vpop.f32.mrf.mxu0
      %v549 = vadd.f32 0.0, %v548
      %v550 = vpop.f32.mrf.mxu0
      %v551 = vadd.f32 0.0, %v550
      %552 = vmatmul.bf16.gmra.mxu0 %v437
      %v553 = vpop.f32.mrf.mxu0
      %v554 = vadd.f32 0.0, %v553
      %v555 = vpop.f32.mrf.mxu0
      %v556 = vadd.f32 0.0, %v555
      %557 = vmatmul.bf16.gmra.mxu0 %v440
      %v558 = vpop.f32.mrf.mxu0
      %v559 = vadd.f32 0.0, %v558
      %v560 = vpop.f32.mrf.mxu0
      %v561 = vadd.f32 0.0, %v560
      %562 = vmatmul.bf16.gmra.mxu0 %v443
      %v563 = vpop.f32.mrf.mxu0
      %v564 = vadd.f32 0.0, %v563
      %v565 = vpop.f32.mrf.mxu0
      %v566 = vadd.f32 0.0, %v565
      %567 = vmatmul.bf16.gmra.mxu0 %v446
      %v568 = vpop.f32.mrf.mxu0
      %v569 = vadd.f32 0.0, %v568
      %v570 = vpop.f32.mrf.mxu0
      %v571 = vadd.f32 0.0, %v570
      %572 = vmatmul.bf16.gmra.mxu0 %v449
      %v573 = vpop.f32.mrf.mxu0
      %v574 = vadd.f32 0.0, %v573
      %v575 = vpop.f32.mrf.mxu0
      %v576 = vadd.f32 0.0, %v575
      %577 = vmatmul.bf16.gmra.mxu0 %v452
      %v578 = vpop.f32.mrf.mxu0
      %v579 = vadd.f32 0.0, %v578
      %v580 = vpop.f32.mrf.mxu0
      %v581 = vadd.f32 0.0, %v580
      %582 = vmatmul.bf16.gmra.mxu0 %v455
      %v583 = vpop.f32.mrf.mxu0
      %v584 = vadd.f32 0.0, %v583
      %v585 = vpop.f32.mrf.mxu0
      %v586 = vadd.f32 0.0, %v585
      %587 = vmatmul.bf16.gmra.mxu0 %v458
      %v588 = vpop.f32.mrf.mxu0
      %v589 = vadd.f32 0.0, %v588
      %v590 = vpop.f32.mrf.mxu0
      %v591 = vadd.f32 0.0, %v590
      %592 = vdwg.mxu0
      %v593 = vpack.c.bf16 %v474, %v474
      %v594 = vpack.c.bf16 %v476, %v476
      %v595 = vpack.c.bf16 %v479, %v479
      %v596 = vpack.c.bf16 %v481, %v481
      %v597 = vpack.c.bf16 %v484, %v484
      %v598 = vpack.c.bf16 %v486, %v486
      %v599 = vpack.c.bf16 %v489, %v489
      %v600 = vpack.c.bf16 %v491, %v491
      %v601 = vpack.c.bf16 %v494, %v494
      %v602 = vpack.c.bf16 %v496, %v496
      %v603 = vpack.c.bf16 %v499, %v499
      %v604 = vpack.c.bf16 %v501, %v501
      %v605 = vpack.c.bf16 %v504, %v504
      %v606 = vpack.c.bf16 %v506, %v506
      %v607 = vpack.c.bf16 %v509, %v509
      %v608 = vpack.c.bf16 %v511, %v511
      %v609 = vpack.c.bf16 %v514, %v514
      %v610 = vpack.c.bf16 %v516, %v516
      %v611 = vpack.c.bf16 %v519, %v519
      %v612 = vpack.c.bf16 %v521, %v521
      %v613 = vpack.c.bf16 %v524, %v524
      %v614 = vpack.c.bf16 %v526, %v526
      %v615 = vpack.c.bf16 %v529, %v529
      %v616 = vpack.c.bf16 %v531, %v531
      %v617 = vpack.c.bf16 %v534, %v534
      %v618 = vpack.c.bf16 %v536, %v536
      %v619 = vpack.c.bf16 %v539, %v539
      %v620 = vpack.c.bf16 %v541, %v541
      %v621 = vpack.c.bf16 %v544, %v544
      %v622 = vpack.c.bf16 %v546, %v546
      %v623 = vpack.c.bf16 %v549, %v549
      %v624 = vpack.c.bf16 %v551, %v551
      %v625 = vpack.c.bf16 %v554, %v554
      %v626 = vpack.c.bf16 %v556, %v556
      %v627 = vpack.c.bf16 %v559, %v559
      %v628 = vpack.c.bf16 %v561, %v561
      %v629 = vpack.c.bf16 %v564, %v564
      %v630 = vpack.c.bf16 %v566, %v566
      %v631 = vpack.c.bf16 %v569, %v569
      %v632 = vpack.c.bf16 %v571, %v571
      %v633 = vpack.c.bf16 %v574, %v574
      %v634 = vpack.c.bf16 %v576, %v576
      %v635 = vpack.c.bf16 %v579, %v579
      %v636 = vpack.c.bf16 %v581, %v581
      %v637 = vpack.c.bf16 %v584, %v584
      %v638 = vpack.c.bf16 %v586, %v586
      %v639 = vpack.c.bf16 %v589, %v589
      %v640 = vpack.c.bf16 %v591, %v591
      %641 = vst [vmem:[%s177] sm:$0xf] %v593
      %642 = vst [vmem:[%s177 + $0x4] sm:$0xf] %v594
      %643 = vst [vmem:[%s177 + $0x8] sm:$0xf] %v595
      %644 = vst [vmem:[%s177 + $0xc] sm:$0xf] %v596
      %645 = vst [vmem:[%s177 + $0x10] sm:$0xf] %v597
      %646 = vst [vmem:[%s177 + $0x14] sm:$0xf] %v598
      %647 = vst [vmem:[%s177 + $0x18] sm:$0xf] %v599
      %648 = vst [vmem:[%s177 + $0x1c] sm:$0xf] %v600
      %649 = vst [vmem:[%s177 + $0x20] sm:$0xf] %v601
      %650 = vst [vmem:[%s177 + $0x24] sm:$0xf] %v602
      %651 = vst [vmem:[%s177 + $0x28] sm:$0xf] %v603
      %652 = vst [vmem:[%s177 + $0x2c] sm:$0xf] %v604
      %653 = vst [vmem:[%s177 + $0x30] sm:$0xf] %v605
      %654 = vst [vmem:[%s177 + $0x34] sm:$0xf] %v606
      %655 = vst [vmem:[%s177 + $0x38] sm:$0xf] %v607
      %656 = vst [vmem:[%s177 + $0x3c] sm:$0xf] %v608
      %657 = vst [vmem:[%s177 + $0x40] sm:$0xf] %v609
      %658 = vst [vmem:[%s177 + $0x44] sm:$0xf] %v610
      %659 = vst [vmem:[%s177 + $0x48] sm:$0xf] %v611
      %660 = vst [vmem:[%s177 + $0x4c] sm:$0xf] %v612
      %661 = vst [vmem:[%s177 + $0x50] sm:$0xf] %v613
      %662 = vst [vmem:[%s177 + $0x54] sm:$0xf] %v614
      %663 = vst [vmem:[%s177 + $0x58] sm:$0xf] %v615
      %664 = vst [vmem:[%s177 + $0x5c] sm:$0xf] %v616
      %665 = vst [vmem:[%s177 + $0x60] sm:$0xf] %v617
      %666 = vst [vmem:[%s177 + $0x64] sm:$0xf] %v618
      %667 = vst [vmem:[%s177 + $0x68] sm:$0xf] %v619
      %668 = vst [vmem:[%s177 + $0x6c] sm:$0xf] %v620
      %669 = vst [vmem:[%s177 + $0x70] sm:$0xf] %v621
      %670 = vst [vmem:[%s177 + $0x74] sm:$0xf] %v622
      %671 = vst [vmem:[%s177 + $0x78] sm:$0xf] %v623
      %672 = vst [vmem:[%s177 + $0x7c] sm:$0xf] %v624
      %673 = vst [vmem:[%s177 + $0x80] sm:$0xf] %v625
      %674 = vst [vmem:[%s177 + $0x84] sm:$0xf] %v626
      %675 = vst [vmem:[%s177 + $0x88] sm:$0xf] %v627
      %676 = vst [vmem:[%s177 + $0x8c] sm:$0xf] %v628
      %677 = vst [vmem:[%s177 + $0x90] sm:$0xf] %v629
      %678 = vst [vmem:[%s177 + $0x94] sm:$0xf] %v630
      %679 = vst [vmem:[%s177 + $0x98] sm:$0xf] %v631
      %680 = vst [vmem:[%s177 + $0x9c] sm:$0xf] %v632
      %681 = vst [vmem:[%s177 + $0xa0] sm:$0xf] %v633
      %682 = vst [vmem:[%s177 + $0xa4] sm:$0xf] %v634
      %683 = vst [vmem:[%s177 + $0xa8] sm:$0xf] %v635
      %684 = vst [vmem:[%s177 + $0xac] sm:$0xf] %v636
      %685 = vst [vmem:[%s177 + $0xb0] sm:$0xf] %v637
      %686 = vst [vmem:[%s177 + $0xb4] sm:$0xf] %v638
      %687 = vst [vmem:[%s177 + $0xb8] sm:$0xf] %v639
      %688 = vst [vmem:[%s177 + $0xbc] sm:$0xf] %v640
      %v689 = vlaneseq
      %v690 = vshrl.u32 %v689, 7
      %v691 = vadd.s32 %v690, 8
      %v692 = vadd.s32 %v690, 16
      %vm693 = vcmp.lt.s32.totalorder %v690, 16
      %vm694 = vcmp.lt.s32.totalorder %v691, 16
      %vm695 = vcmp.lt.s32.totalorder %v692, 16
      %v696 = vsel %vm693, 1, 0
      %v697 = vsel %vm694, 1, 0
      %v698 = vsel %vm695, 1, 0
      %v699 = vcvt.s32.f32 %v696
      %v700 = vcvt.s32.f32 %v697
      %v701 = vcvt.s32.f32 %v698
      %v702 = vmul.f32 %v474, %v699
      %v703 = vmul.f32 %v476, %v700
      %v704 = vmul.f32 %v479, %v701
      %v705 = vmul.f32 %v481, %v699
      %v706 = vmul.f32 %v484, %v700
      %v707 = vmul.f32 %v486, %v701
      %v708 = vmul.f32 %v489, %v699
      %v709 = vmul.f32 %v491, %v700
      %v710 = vmul.f32 %v494, %v701
      %v711 = vmul.f32 %v496, %v699
      %v712 = vmul.f32 %v499, %v700
      %v713 = vmul.f32 %v501, %v701
      %v714 = vmul.f32 %v504, %v699
      %v715 = vmul.f32 %v506, %v700
      %v716 = vmul.f32 %v509, %v701
      %v717 = vmul.f32 %v511, %v699
      %v718 = vmul.f32 %v514, %v700
      %v719 = vmul.f32 %v516, %v701
      %v720 = vmul.f32 %v519, %v699
      %v721 = vmul.f32 %v521, %v700
      %v722 = vmul.f32 %v524, %v701
      %v723 = vmul.f32 %v526, %v699
      %v724 = vmul.f32 %v529, %v700
      %v725 = vmul.f32 %v531, %v701
      %v726 = vmul.f32 %v534, %v699
      %v727 = vmul.f32 %v536, %v700
      %v728 = vmul.f32 %v539, %v701
      %v729 = vmul.f32 %v541, %v699
      %v730 = vmul.f32 %v544, %v700
      %v731 = vmul.f32 %v546, %v701
      %v732 = vmul.f32 %v549, %v699
      %v733 = vmul.f32 %v551, %v700
      %v734 = vmul.f32 %v554, %v701
      %v735 = vmul.f32 %v556, %v699
      %v736 = vmul.f32 %v559, %v700
      %v737 = vmul.f32 %v561, %v701
      %v738 = vmul.f32 %v564, %v699
      %v739 = vmul.f32 %v566, %v700
      %v740 = vmul.f32 %v569, %v701
      %v741 = vmul.f32 %v571, %v699
      %v742 = vmul.f32 %v574, %v700
      %v743 = vmul.f32 %v576, %v701
      %v744 = vmul.f32 %v579, %v699
      %v745 = vmul.f32 %v581, %v700
      %v746 = vmul.f32 %v584, %v701
      %v747 = vmul.f32 %v586, %v699
      %v748 = vmul.f32 %v589, %v700
      %v749 = vmul.f32 %v591, %v701
      %v750 = vadd.f32 %v702, %v703
      %v751 = vadd.f32 %v750, %v704
      %v752 = vadd.f32 %v751, %v705
      %v753 = vadd.f32 %v752, %v706
      %v754 = vadd.f32 %v753, %v707
      %v755 = vadd.f32 %v754, %v708
      %v756 = vadd.f32 %v755, %v709
      %v757 = vadd.f32 %v756, %v710
      %v758 = vadd.f32 %v757, %v711
      %v759 = vadd.f32 %v758, %v712
      %v760 = vadd.f32 %v759, %v713
      %v761 = vadd.f32 %v760, %v714
      %v762 = vadd.f32 %v761, %v715
      %v763 = vadd.f32 %v762, %v716
      %v764 = vadd.f32 %v763, %v717
      %v765 = vadd.f32 %v764, %v718
      %v766 = vadd.f32 %v765, %v719
      %v767 = vadd.f32 %v766, %v720
      %v768 = vadd.f32 %v767, %v721
      %v769 = vadd.f32 %v768, %v722
      %v770 = vadd.f32 %v769, %v723
      %v771 = vadd.f32 %v770, %v724
      %v772 = vadd.f32 %v771, %v725
      %v773 = vadd.f32 %v772, %v726
      %v774 = vadd.f32 %v773, %v727
      %v775 = vadd.f32 %v774, %v728
      %v776 = vadd.f32 %v775, %v729
      %v777 = vadd.f32 %v776, %v730
      %v778 = vadd.f32 %v777, %v731
      %v779 = vadd.f32 %v778, %v732
      %v780 = vadd.f32 %v779, %v733
      %v781 = vadd.f32 %v780, %v734
      %v782 = vadd.f32 %v781, %v735
      %v783 = vadd.f32 %v782, %v736
      %v784 = vadd.f32 %v783, %v737
      %v785 = vadd.f32 %v784, %v738
      %v786 = vadd.f32 %v785, %v739
      %v787 = vadd.f32 %v786, %v740
      %v788 = vadd.f32 %v787, %v741
      %v789 = vadd.f32 %v788, %v742
      %v790 = vadd.f32 %v789, %v743
      %v791 = vadd.f32 %v790, %v744
      %v792 = vadd.f32 %v791, %v745
      %v793 = vadd.f32 %v792, %v746
      %v794 = vadd.f32 %v793, %v747
      %v795 = vadd.f32 %v794, %v748
      %v796 = vadd.f32 %v795, %v749
      %v797 = vrot.slane %v796, 4
      %v798 = vadd.f32 %v796, %v797
      %v799 = vrot.slane %v798, 2
      %v800 = vadd.f32 %v798, %v799
      %v801 = vrot.slane %v800, 1
      %v802 = vadd.f32 %v800, %v801
      %v803 = vmul.f32 %v702, %v702
      %v804 = vmul.f32 %v703, %v703
      %v805 = vmul.f32 %v704, %v704
      %v806 = vmul.f32 %v705, %v705
      %v807 = vmul.f32 %v706, %v706
      %v808 = vmul.f32 %v707, %v707
      %v809 = vmul.f32 %v708, %v708
      %v810 = vmul.f32 %v709, %v709
      %v811 = vmul.f32 %v710, %v710
      %v812 = vmul.f32 %v711, %v711
      %v813 = vmul.f32 %v712, %v712
      %v814 = vmul.f32 %v713, %v713
      %v815 = vmul.f32 %v714, %v714
      %v816 = vmul.f32 %v715, %v715
      %v817 = vmul.f32 %v716, %v716
      %v818 = vmul.f32 %v717, %v717
      %v819 = vmul.f32 %v718, %v718
      %v820 = vmul.f32 %v719, %v719
      %v821 = vmul.f32 %v720, %v720
      %v822 = vmul.f32 %v721, %v721
      %v823 = vmul.f32 %v722, %v722
      %v824 = vmul.f32 %v723, %v723
      %v825 = vmul.f32 %v724, %v724
      %v826 = vmul.f32 %v725, %v725
      %v827 = vmul.f32 %v726, %v726
      %v828 = vmul.f32 %v727, %v727
      %v829 = vmul.f32 %v728, %v728
      %v830 = vmul.f32 %v729, %v729
      %v831 = vmul.f32 %v730, %v730
      %v832 = vmul.f32 %v731, %v731
      %v833 = vmul.f32 %v732, %v732
      %v834 = vmul.f32 %v733, %v733
      %v835 = vmul.f32 %v734, %v734
      %v836 = vmul.f32 %v735, %v735
      %v837 = vmul.f32 %v736, %v736
      %v838 = vmul.f32 %v737, %v737
      %v839 = vmul.f32 %v738, %v738
      %v840 = vmul.f32 %v739, %v739
      %v841 = vmul.f32 %v740, %v740
      %v842 = vmul.f32 %v741, %v741
      %v843 = vmul.f32 %v742, %v742
      %v844 = vmul.f32 %v743, %v743
      %v845 = vmul.f32 %v744, %v744
      %v846 = vmul.f32 %v745, %v745
      %v847 = vmul.f32 %v746, %v746
      %v848 = vmul.f32 %v747, %v747
      %v849 = vmul.f32 %v748, %v748
      %v850 = vmul.f32 %v749, %v749
      %v851 = vadd.f32 %v803, %v804
      %v852 = vadd.f32 %v851, %v805
      %v853 = vadd.f32 %v852, %v806
      %v854 = vadd.f32 %v853, %v807
      %v855 = vadd.f32 %v854, %v808
      %v856 = vadd.f32 %v855, %v809
      %v857 = vadd.f32 %v856, %v810
      %v858 = vadd.f32 %v857, %v811
      %v859 = vadd.f32 %v858, %v812
      %v860 = vadd.f32 %v859, %v813
      %v861 = vadd.f32 %v860, %v814
      %v862 = vadd.f32 %v861, %v815
      %v863 = vadd.f32 %v862, %v816
      %v864 = vadd.f32 %v863, %v817
      %v865 = vadd.f32 %v864, %v818
      %v866 = vadd.f32 %v865, %v819
      %v867 = vadd.f32 %v866, %v820
      %v868 = vadd.f32 %v867, %v821
      %v869 = vadd.f32 %v868, %v822
      %v870 = vadd.f32 %v869, %v823
      %v871 = vadd.f32 %v870, %v824
      %v872 = vadd.f32 %v871, %v825
      %v873 = vadd.f32 %v872, %v826
      %v874 = vadd.f32 %v873, %v827
      %v875 = vadd.f32 %v874, %v828
      %v876 = vadd.f32 %v875, %v829
      %v877 = vadd.f32 %v876, %v830
      %v878 = vadd.f32 %v877, %v831
      %v879 = vadd.f32 %v878, %v832
      %v880 = vadd.f32 %v879, %v833
      %v881 = vadd.f32 %v880, %v834
      %v882 = vadd.f32 %v881, %v835
      %v883 = vadd.f32 %v882, %v836
      %v884 = vadd.f32 %v883, %v837
      %v885 = vadd.f32 %v884, %v838
      %v886 = vadd.f32 %v885, %v839
      %v887 = vadd.f32 %v886, %v840
      %v888 = vadd.f32 %v887, %v841
      %v889 = vadd.f32 %v888, %v842
      %v890 = vadd.f32 %v889, %v843
      %v891 = vadd.f32 %v890, %v844
      %v892 = vadd.f32 %v891, %v845
      %v893 = vadd.f32 %v892, %v846
      %v894 = vadd.f32 %v893, %v847
      %v895 = vadd.f32 %v894, %v848
      %v896 = vadd.f32 %v895, %v849
      %v897 = vadd.f32 %v896, %v850
      %v898 = vrot.slane %v897, 4
      %v899 = vadd.f32 %v897, %v898
      %v900 = vrot.slane %v899, 2
      %v901 = vadd.f32 %v899, %v900
      %v902 = vrot.slane %v901, 1
      %v903 = vadd.f32 %v901, %v902
      %vm904 = vcmask 1040384
      %v905 = vsel %vm904, %v802, %v903
      %906 = vst [vmem:[%s181] sm:$0x3] %v905
      %p907 = scmp.lt.s32.totalorder %s15, 1
      %s908 = scalar_select %p907, %s15, 1
      %s909 = smul.addr %s908, 48
      %s910 = smul.addr %s909, 4
      %s911 = scalar_lea.vmem %s2, %s910
      %p912 = scmp.lt.s32.totalorder %s15, 1
      %s913 = scalar_select %p912, %s15, 1
      %s914 = smul.addr %s913, 2
      %s915 = scalar_lea.vmem %s3, %s914
      // Predicated region
      $region29: #{encoder_block_forward.3} parent=27 // pred_check
        %p916 = pneg %p80
      $region30: #{encoder_block_forward.3} parent=27 // pred_check_branch
        %918 = sbr.rel (%p916) target = $region32
      $region31: #{encoder_block_forward.3} parent=27 // pred_region
        _
      $region32: #{encoder_block_forward.3} parent=27 // pred_fallthru
        _
      // Predicated region
      $region33: #{encoder_block_forward.3} parent=27 // pred_check
        %p919 = pneg %p106
      $region34: #{encoder_block_forward.3} parent=27 // pred_check_branch
        %921 = sbr.rel (%p919) target = $region36
      $region35: #{encoder_block_forward.3} parent=27 // pred_region
        _
      $region36: #{encoder_block_forward.3} parent=27 // pred_fallthru
        _
    $region28: #{encoder_block_forward.3} parent=5 // pred_fallthru
      _
    %p922 = scmp.le.s32.totalorder 2, %s10
    // Predicated region
    $region37: #{encoder_block_forward.3} parent=5 // pred_check
      %p923 = pneg %p922
    $region38: #{encoder_block_forward.3} parent=5 // pred_check_branch
      %925 = sbr.rel (%p923) target = $region40
    $region39: #{encoder_block_forward.3} parent=5 // pred_region
      %s926 = ssub.s32 %s10, 2
      // Predicated region
      $region41: #{encoder_block_forward.3} parent=39 // pred_check
        %p927 = pneg %p86
      $region42: #{encoder_block_forward.3} parent=39 // pred_check_branch
        %929 = sbr.rel (%p927) target = $region44
      $region43: #{encoder_block_forward.3} parent=39 // pred_region
        %p930 = scmp.lt.s32.totalorder %s16, 1
        %s931 = scalar_select %p930, %s16, 1
        %s932 = smul.addr %s931, 48
        %s933 = smul.addr %s932, 4
        %s934 = scalar_lea.vmem %s2, %s933
      $region44: #{encoder_block_forward.3} parent=39 // pred_fallthru
        _
      // Predicated region
      $region45: #{encoder_block_forward.3} parent=39 // pred_check
        %p935 = pneg %p112
      $region46: #{encoder_block_forward.3} parent=39 // pred_check_branch
        %937 = sbr.rel (%p935) target = $region48
      $region47: #{encoder_block_forward.3} parent=39 // pred_region
        %p938 = scmp.lt.s32.totalorder %s16, 1
        %s939 = scalar_select %p938, %s16, 1
        %s940 = smul.addr %s939, 2
        %s941 = scalar_lea.vmem %s3, %s940
      $region48: #{encoder_block_forward.3} parent=39 // pred_fallthru
        _
    $region40: #{encoder_block_forward.3} parent=5 // pred_fallthru
      _
  $region6: #{encoder_block_forward.3} parent=0 // loop_footer
    %s14 = sadd.s32 1, %s10
  $region7: #{encoder_block_forward.3} parent=0 // loop_footer_branch
    %9 = sbr.rel target = $region3
  $region8: #{encoder_block_forward.3} parent=0 // loop_exit
    _

// kernel: encoder_block_forward.5
$region0: #{encoder_block_forward.5}
  #allocation0 [shape = 'u32[]', space=smem, size = 0x4, offset = 0x4, fixed_abs, tag = 'smem constant byte address 0x4 - core index']
  #allocation1 [shape = 'u32[72,128]{1,0:T(1,128)}', space=vmem, size = 0x9000, scoped, tag = 'internal scratch']
  %s0 = inlined_call_operand.vmem [shape: bf16[2,384,128], index: 0, kind: input, shape index: {}]
  %s1 = inlined_call_operand.vmem [shape: f32[2,128], index: 1, kind: input, shape index: {}]
  %s2 = inlined_call_operand.vmem [shape: f32[2,128], index: 2, kind: input, shape index: {}]
  %s3 = inlined_call_operand.vmem [shape: f32[2,256,8], index: 3, kind: output, shape index: {}]
  %s4 = sld [smem:[#allocation0]]
  $region45: #{encoder_block_forward.5} parent=0
    _
  %s6 = ssub.s32 1, %s4
  %s7 = scalar_select 0, %s6, %s4
  loop: start=0, step=1, limit=4
  $region2: #{encoder_block_forward.5} parent=0 // loop_pre_header
    _
  $region3: #{encoder_block_forward.5} parent=0 // loop_header
    %s9 = sphi 0, %s13
    %p10 = scmp.ge.s32.totalorder %s9, 4
    %s19 = sphi 0, %s21
    %s22 = sphi 0, %s19
    %s23 = sphi 0, %s22
    %s39 = sphi 0, %s23
    %s43 = sphi 0, %s43
    %s45 = sphi 0, %s43
    %s46 = sphi 0, %s45
    %s60 = sphi 0, %s46
    %s64 = sphi 0, %s64
    %s66 = sphi 0, %s64
    %s67 = sphi 0, %s66
    %s81 = sphi 0, %s67
    %s87 = sphi 0, %s89
    %s90 = sphi 0, %s87
    %s91 = sphi 0, %s90
    %s107 = sphi 0, %s91
  $region4: #{encoder_block_forward.5} parent=0 // loop_header_branch
    %12 = sbr.rel (%p10) target = $region8
  $region5: #{encoder_block_forward.5} parent=0 // loop_body
    %s14 = ssub.s32 %s9, 1
    %s15 = ssub.s32 %s9, 2
    %s16 = sadd.s32 %s9, 1
    %s17 = ssub.s32 %s9, %s16
    %p18 = scmp.eq.s32.totalorder %s17, 0
    %s20 = sadd.s32 %s19, 1
    %s21 = scalar_select %p18, %s19, %s20
    %p24 = pneg %p18
    %p25 = scmp.eq.s32.totalorder %s9, 1
    %p26 = por %p24, %p25
    %p27 = scmp.ne.s32.totalorder %s19, %s22
    %p28 = scmp.eq.s32.totalorder %s9, 0
    %p29 = por %p27, %p28
    %p30 = scmp.ne.s32.totalorder %s19, %s22
    %p31 = scmp.eq.s32.totalorder %s14, 1
    %p32 = por %p30, %p31
    %p33 = scmp.ne.s32.totalorder %s22, %s23
    %p34 = scmp.eq.s32.totalorder %s14, 0
    %p35 = por %p33, %p34
    %p36 = scmp.ne.s32.totalorder %s22, %s23
    %p37 = scmp.eq.s32.totalorder %s15, 1
    %p38 = por %p36, %p37
    %p40 = scmp.ne.s32.totalorder %s23, %s39
    %p41 = scmp.eq.s32.totalorder %s15, 0
    %p42 = por %p40, %p41
    %s44 = sadd.s32 %s43, 1
    %p47 = scmp.eq.s32.totalorder %s9, 1
    %p48 = scmp.ne.s32.totalorder %s43, %s45
    %p49 = scmp.eq.s32.totalorder %s9, 0
    %p50 = por %p48, %p49
    %p51 = scmp.ne.s32.totalorder %s43, %s45
    %p52 = scmp.eq.s32.totalorder %s14, 1
    %p53 = por %p51, %p52
    %p54 = scmp.ne.s32.totalorder %s45, %s46
    %p55 = scmp.eq.s32.totalorder %s14, 0
    %p56 = por %p54, %p55
    %p57 = scmp.ne.s32.totalorder %s45, %s46
    %p58 = scmp.eq.s32.totalorder %s15, 1
    %p59 = por %p57, %p58
    %p61 = scmp.ne.s32.totalorder %s46, %s60
    %p62 = scmp.eq.s32.totalorder %s15, 0
    %p63 = por %p61, %p62
    %s65 = sadd.s32 %s64, 1
    %p68 = scmp.eq.s32.totalorder %s9, 1
    %p69 = scmp.ne.s32.totalorder %s64, %s66
    %p70 = scmp.eq.s32.totalorder %s9, 0
    %p71 = por %p69, %p70
    %p72 = scmp.ne.s32.totalorder %s64, %s66
    %p73 = scmp.eq.s32.totalorder %s14, 1
    %p74 = por %p72, %p73
    %p75 = scmp.ne.s32.totalorder %s66, %s67
    %p76 = scmp.eq.s32.totalorder %s14, 0
    %p77 = por %p75, %p76
    %p78 = scmp.ne.s32.totalorder %s66, %s67
    %p79 = scmp.eq.s32.totalorder %s15, 1
    %p80 = por %p78, %p79
    %p82 = scmp.ne.s32.totalorder %s67, %s81
    %p83 = scmp.eq.s32.totalorder %s15, 0
    %p84 = por %p82, %p83
    %s85 = ssub.s32 %s9, %s16
    %p86 = scmp.eq.s32.totalorder %s85, 0
    %s88 = sadd.s32 %s87, 1
    %s89 = scalar_select %p86, %s87, %s88
    %p92 = pneg %p86
    %p93 = scmp.eq.s32.totalorder %s9, 1
    %p94 = por %p92, %p93
    %p95 = scmp.ne.s32.totalorder %s87, %s90
    %p96 = scmp.eq.s32.totalorder %s9, 0
    %p97 = por %p95, %p96
    %p98 = scmp.ne.s32.totalorder %s87, %s90
    %p99 = scmp.eq.s32.totalorder %s14, 1
    %p100 = por %p98, %p99
    %p101 = scmp.ne.s32.totalorder %s90, %s91
    %p102 = scmp.eq.s32.totalorder %s14, 0
    %p103 = por %p101, %p102
    %p104 = scmp.ne.s32.totalorder %s90, %s91
    %p105 = scmp.eq.s32.totalorder %s15, 1
    %p106 = por %p104, %p105
    %p108 = scmp.ne.s32.totalorder %s91, %s107
    %p109 = scmp.eq.s32.totalorder %s15, 0
    %p110 = por %p108, %p109
    %p111 = scmp.le.s32.totalorder 1, %s9
    %p112 = scmp.lt.s32.totalorder %s9, 3
    %p113 = pnand %p111, %p112
    %p114 = pneg %p113
    // Predicated region
    $region9: #{encoder_block_forward.5} parent=5 // pred_check
      _
    $region10: #{encoder_block_forward.5} parent=5 // pred_check_branch
      %116 = sbr.rel (%p113) target = $region12
    $region11: #{encoder_block_forward.5} parent=5 // pred_region
      %s117 = ssub.s32 %s9, 1
      // Predicated region
      $region13: #{encoder_block_forward.5} parent=11 // pred_check
        %p118 = pneg %p56
      $region14: #{encoder_block_forward.5} parent=11 // pred_check_branch
        %120 = sbr.rel (%p118) target = $region16
      $region15: #{encoder_block_forward.5} parent=11 // pred_region
        _
      $region16: #{encoder_block_forward.5} parent=11 // pred_fallthru
        _
      // Predicated region
      $region17: #{encoder_block_forward.5} parent=11 // pred_check
        %p121 = pneg %p77
      $region18: #{encoder_block_forward.5} parent=11 // pred_check_branch
        %123 = sbr.rel (%p121) target = $region20
      $region19: #{encoder_block_forward.5} parent=11 // pred_region
        _
      $region20: #{encoder_block_forward.5} parent=11 // pred_fallthru
        _
    $region12: #{encoder_block_forward.5} parent=5 // pred_fallthru
      _
    %p124 = scmp.lt.s32.totalorder %s9, 2
    // Predicated region
    $region21: #{encoder_block_forward.5} parent=5 // pred_check
      %p125 = pneg %p124
    $region22: #{encoder_block_forward.5} parent=5 // pred_check_branch
      %127 = sbr.rel (%p125) target = $region24
    $region23: #{encoder_block_forward.5} parent=5 // pred_region
      // Predicated region
      $region25: #{encoder_block_forward.5} parent=23 // pred_check
        %p128 = pneg %p29
      $region26: #{encoder_block_forward.5} parent=23 // pred_check_branch
        %130 = sbr.rel (%p128) target = $region28
      $region27: #{encoder_block_forward.5} parent=23 // pred_region
        %p131 = scmp.lt.s32.totalorder %s9, 1
        %s132 = scalar_select %p131, %s9, 1
        %s133 = smul.addr %s132, 48
        %s134 = smul.addr %s133, 4
        %s135 = scalar_lea.vmem %s0, %s134
      $region28: #{encoder_block_forward.5} parent=23 // pred_fallthru
        _
    $region24: #{encoder_block_forward.5} parent=5 // pred_fallthru
      _
    %p136 = scmp.le.s32.totalorder 1, %s9
    %p137 = scmp.lt.s32.totalorder %s9, 3
    %p138 = pnand %p136, %p137
    %p139 = pneg %p138
    // Predicated region
    $region29: #{encoder_block_forward.5} parent=5 // pred_check
      _
    $region30: #{encoder_block_forward.5} parent=5 // pred_check_branch
      %141 = sbr.rel (%p138) target = $region32
    $region31: #{encoder_block_forward.5} parent=5 // pred_region
      %s142 = ssub.s32 %s9, 1
      %p143 = scmp.lt.s32.totalorder %s14, 1
      %s144 = scalar_select %p143, %s14, 1
      %s145 = smul.addr %s144, 48
      %s146 = smul.addr %s145, 4
      %s147 = scalar_lea.vmem %s0, %s146
      %p148 = pneg %p35
      %p149 = pneg %p32
      %p150 = pneg %p56
      %p151 = pneg %p53
      %p152 = pneg %p77
      %p153 = pneg %p74
      %p154 = pneg %p103
      %p155 = pneg %p100
      %p156 = scmp.lt.s32.totalorder %s14, 1
      %s157 = scalar_select %p156, %s14, 1
      %s158 = smul.addr %s157, 32
      %s159 = smul.addr %s158, 8
      %s160 = scalar_lea.vmem %s3, %s159
      %p161 = scmp.lt.s32.totalorder %s14, 1
      %s162 = scalar_select %p161, %s14, 1
      %s163 = smul.addr %s162, 48
      %s164 = smul.addr %s163, 4
      %s165 = scalar_lea.vmem %s0, %s164
      %p166 = scmp.lt.s32.totalorder %s14, 1
      %s167 = scalar_select %p166, %s14, 1
      %s168 = smul.addr %s167, 32
      %s169 = smul.addr %s168, 8
      %s170 = scalar_lea.vmem %s3, %s169
      %v171 = vld [vmem:[%s1] sm:$0x1]
      %v172 = vmul.f32 %v171, 0.001953125
      %v173 = vld [vmem:[%s1 + $0x1] sm:$0x1]
      %v174 = vmul.f32 %v173, 0.001953125
      %v175 = vmul.f32 %v172, %v172
      %v176 = vsub.f32 %v174, %v175
      %v177 = vadd.f32 %v176, 1e-05
      %v178 = vrsqrt.pop %v177
      %v179 = vmul.f32 %v178, %v177
      %v180 = vmul.f32 %v179, %v178
      %v181 = vmul.f32 0.5, %v180
      %v182 = vsub.f32 1.5, %v181
      %v183 = vmul.f32 %v178, %v182
      %vm184 = vweird.f32 %v177
      %vm185 = vweird.f32 %v178
      %vm186 = vmor %vm184, %vm185
      %v187 = vsel %vm186, %v178, %v183
      %v188 = vld [vmem:[%s2] sm:$0x1]
      %v189 = vmul.f32 %v187, %v188
      %v190 = vld [vmem:[%s2 + $0x1] sm:$0x1]
      %v191 = vmul.f32 %v172, %v189
      %v192 = vsub.f32 %v190, %v191
      %v193 = vld [vmem:[%s165] sm:$0xf]
      %v194 = vld [vmem:[%s165 + $0x4] sm:$0xf]
      %v195 = vld [vmem:[%s165 + $0xc] sm:$0xf]
      %v196 = vld [vmem:[%s165 + $0x10] sm:$0xf]
      %v197 = vld [vmem:[%s165 + $0x18] sm:$0xf]
      %v198 = vld [vmem:[%s165 + $0x1c] sm:$0xf]
      %v199 = vld [vmem:[%s165 + $0x24] sm:$0xf]
      %v200 = vld [vmem:[%s165 + $0x28] sm:$0xf]
      %v201 = vld [vmem:[%s165 + $0x30] sm:$0xf]
      %v202 = vld [vmem:[%s165 + $0x34] sm:$0xf]
      %v203 = vld [vmem:[%s165 + $0x3c] sm:$0xf]
      %v204 = vld [vmem:[%s165 + $0x40] sm:$0xf]
      %v205 = vld [vmem:[%s165 + $0x48] sm:$0xf]
      %v206 = vld [vmem:[%s165 + $0x4c] sm:$0xf]
      %v207 = vld [vmem:[%s165 + $0x54] sm:$0xf]
      %v208 = vld [vmem:[%s165 + $0x58] sm:$0xf]
      %v209 = vld [vmem:[%s165 + $0x60] sm:$0xf]
      %v210 = vld [vmem:[%s165 + $0x64] sm:$0xf]
      %v211 = vld [vmem:[%s165 + $0x6c] sm:$0xf]
      %v212 = vld [vmem:[%s165 + $0x70] sm:$0xf]
      %v213 = vld [vmem:[%s165 + $0x78] sm:$0xf]
      %v214 = vld [vmem:[%s165 + $0x7c] sm:$0xf]
      %v215 = vld [vmem:[%s165 + $0x84] sm:$0xf]
      %v216 = vld [vmem:[%s165 + $0x88] sm:$0xf]
      %v217 = vld [vmem:[%s165 + $0x90] sm:$0xf]
      %v218 = vld [vmem:[%s165 + $0x94] sm:$0xf]
      %v219 = vld [vmem:[%s165 + $0x9c] sm:$0xf]
      %v220 = vld [vmem:[%s165 + $0xa0] sm:$0xf]
      %v221 = vld [vmem:[%s165 + $0xa8] sm:$0xf]
      %v222 = vld [vmem:[%s165 + $0xac] sm:$0xf]
      %v223 = vld [vmem:[%s165 + $0xb4] sm:$0xf]
      %v224 = vld [vmem:[%s165 + $0xb8] sm:$0xf]
      %v225 = vunpack.c.l.bf16 %v193
      %v226 = vunpack.c.l.bf16 %v194
      %v227 = vunpack.c.l.bf16 %v195
      %v228 = vunpack.c.l.bf16 %v196
      %v229 = vunpack.c.l.bf16 %v197
      %v230 = vunpack.c.l.bf16 %v198
      %v231 = vunpack.c.l.bf16 %v199
      %v232 = vunpack.c.l.bf16 %v200
      %v233 = vunpack.c.l.bf16 %v201
      %v234 = vunpack.c.l.bf16 %v202
      %v235 = vunpack.c.l.bf16 %v203
      %v236 = vunpack.c.l.bf16 %v204
      %v237 = vunpack.c.l.bf16 %v205
      %v238 = vunpack.c.l.bf16 %v206
      %v239 = vunpack.c.l.bf16 %v207
      %v240 = vunpack.c.l.bf16 %v208
      %v241 = vunpack.c.l.bf16 %v209
      %v242 = vunpack.c.l.bf16 %v210
      %v243 = vunpack.c.l.bf16 %v211
      %v244 = vunpack.c.l.bf16 %v212
      %v245 = vunpack.c.l.bf16 %v213
      %v246 = vunpack.c.l.bf16 %v214
      %v247 = vunpack.c.l.bf16 %v215
      %v248 = vunpack.c.l.bf16 %v216
      %v249 = vunpack.c.l.bf16 %v217
      %v250 = vunpack.c.l.bf16 %v218
      %v251 = vunpack.c.l.bf16 %v219
      %v252 = vunpack.c.l.bf16 %v220
      %v253 = vunpack.c.l.bf16 %v221
      %v254 = vunpack.c.l.bf16 %v222
      %v255 = vunpack.c.l.bf16 %v223
      %v256 = vunpack.c.l.bf16 %v224
      %v257 = vperm.slane %v189, 0
      %v258 = vmul.f32 %v225, %v257
      %v259 = vmul.f32 %v226, %v257
      %v260 = vmul.f32 %v227, %v257
      %v261 = vmul.f32 %v228, %v257
      %v262 = vmul.f32 %v229, %v257
      %v263 = vmul.f32 %v230, %v257
      %v264 = vmul.f32 %v231, %v257
      %v265 = vmul.f32 %v232, %v257
      %v266 = vmul.f32 %v233, %v257
      %v267 = vmul.f32 %v234, %v257
      %v268 = vmul.f32 %v235, %v257
      %v269 = vmul.f32 %v236, %v257
      %v270 = vmul.f32 %v237, %v257
      %v271 = vmul.f32 %v238, %v257
      %v272 = vmul.f32 %v239, %v257
      %v273 = vmul.f32 %v240, %v257
      %v274 = vmul.f32 %v241, %v257
      %v275 = vmul.f32 %v242, %v257
      %v276 = vmul.f32 %v243, %v257
      %v277 = vmul.f32 %v244, %v257
      %v278 = vmul.f32 %v245, %v257
      %v279 = vmul.f32 %v246, %v257
      %v280 = vmul.f32 %v247, %v257
      %v281 = vmul.f32 %v248, %v257
      %v282 = vmul.f32 %v249, %v257
      %v283 = vmul.f32 %v250, %v257
      %v284 = vmul.f32 %v251, %v257
      %v285 = vmul.f32 %v252, %v257
      %v286 = vmul.f32 %v253, %v257
      %v287 = vmul.f32 %v254, %v257
      %v288 = vmul.f32 %v255, %v257
      %v289 = vmul.f32 %v256, %v257
      %v290 = vperm.slane %v192, 0
      %v291 = vadd.f32 %v258, %v290
      %v292 = vadd.f32 %v259, %v290
      %v293 = vadd.f32 %v260, %v290
      %v294 = vadd.f32 %v261, %v290
      %v295 = vadd.f32 %v262, %v290
      %v296 = vadd.f32 %v263, %v290
      %v297 = vadd.f32 %v264, %v290
      %v298 = vadd.f32 %v265, %v290
      %v299 = vadd.f32 %v266, %v290
      %v300 = vadd.f32 %v267, %v290
      %v301 = vadd.f32 %v268, %v290
      %v302 = vadd.f32 %v269, %v290
      %v303 = vadd.f32 %v270, %v290
      %v304 = vadd.f32 %v271, %v290
      %v305 = vadd.f32 %v272, %v290
      %v306 = vadd.f32 %v273, %v290
      %v307 = vadd.f32 %v274, %v290
      %v308 = vadd.f32 %v275, %v290
      %v309 = vadd.f32 %v276, %v290
      %v310 = vadd.f32 %v277, %v290
      %v311 = vadd.f32 %v278, %v290
      %v312 = vadd.f32 %v279, %v290
      %v313 = vadd.f32 %v280, %v290
      %v314 = vadd.f32 %v281, %v290
      %v315 = vadd.f32 %v282, %v290
      %v316 = vadd.f32 %v283, %v290
      %v317 = vadd.f32 %v284, %v290
      %v318 = vadd.f32 %v285, %v290
      %v319 = vadd.f32 %v286, %v290
      %v320 = vadd.f32 %v287, %v290
      %v321 = vadd.f32 %v288, %v290
      %v322 = vadd.f32 %v289, %v290
      %v323 = vmax.f32 %v291, 0.0
      %v324 = vmax.f32 %v292, 0.0
      %v325 = vmax.f32 %v293, 0.0
      %v326 = vmax.f32 %v294, 0.0
      %v327 = vmax.f32 %v295, 0.0
      %v328 = vmax.f32 %v296, 0.0
      %v329 = vmax.f32 %v297, 0.0
      %v330 = vmax.f32 %v298, 0.0
      %v331 = vmax.f32 %v299, 0.0
      %v332 = vmax.f32 %v300, 0.0
      %v333 = vmax.f32 %v301, 0.0
      %v334 = vmax.f32 %v302, 0.0
      %v335 = vmax.f32 %v303, 0.0
      %v336 = vmax.f32 %v304, 0.0
      %v337 = vmax.f32 %v305, 0.0
      %v338 = vmax.f32 %v306, 0.0
      %v339 = vmax.f32 %v307, 0.0
      %v340 = vmax.f32 %v308, 0.0
      %v341 = vmax.f32 %v309, 0.0
      %v342 = vmax.f32 %v310, 0.0
      %v343 = vmax.f32 %v311, 0.0
      %v344 = vmax.f32 %v312, 0.0
      %v345 = vmax.f32 %v313, 0.0
      %v346 = vmax.f32 %v314, 0.0
      %v347 = vmax.f32 %v315, 0.0
      %v348 = vmax.f32 %v316, 0.0
      %v349 = vmax.f32 %v317, 0.0
      %v350 = vmax.f32 %v318, 0.0
      %v351 = vmax.f32 %v319, 0.0
      %v352 = vmax.f32 %v320, 0.0
      %v353 = vmax.f32 %v321, 0.0
      %v354 = vmax.f32 %v322, 0.0
      %vm355 = vcmask 64512
      %356 = vst.msk [vmem:[%s170] sm:$0xff] %vm355, %v323
      %357 = vst.msk [vmem:[%s170 + $0x8] sm:$0xff] %vm355, %v324
      %358 = vst.msk [vmem:[%s170 + $0x10] sm:$0xff] %vm355, %v325
      %359 = vst.msk [vmem:[%s170 + $0x18] sm:$0xff] %vm355, %v326
      %360 = vst.msk [vmem:[%s170 + $0x20] sm:$0xff] %vm355, %v327
      %361 = vst.msk [vmem:[%s170 + $0x28] sm:$0xff] %vm355, %v328
      %362 = vst.msk [vmem:[%s170 + $0x30] sm:$0xff] %vm355, %v329
      %363 = vst.msk [vmem:[%s170 + $0x38] sm:$0xff] %vm355, %v330
      %364 = vst.msk [vmem:[%s170 + $0x40] sm:$0xff] %vm355, %v331
      %365 = vst.msk [vmem:[%s170 + $0x48] sm:$0xff] %vm355, %v332
      %366 = vst.msk [vmem:[%s170 + $0x50] sm:$0xff] %vm355, %v333
      %367 = vst.msk [vmem:[%s170 + $0x58] sm:$0xff] %vm355, %v334
      %368 = vst.msk [vmem:[%s170 + $0x60] sm:$0xff] %vm355, %v335
      %369 = vst.msk [vmem:[%s170 + $0x68] sm:$0xff] %vm355, %v336
      %370 = vst.msk [vmem:[%s170 + $0x70] sm:$0xff] %vm355, %v337
      %371 = vst.msk [vmem:[%s170 + $0x78] sm:$0xff] %vm355, %v338
      %372 = vst.msk [vmem:[%s170 + $0x80] sm:$0xff] %vm355, %v339
      %373 = vst.msk [vmem:[%s170 + $0x88] sm:$0xff] %vm355, %v340
      %374 = vst.msk [vmem:[%s170 + $0x90] sm:$0xff] %vm355, %v341
      %375 = vst.msk [vmem:[%s170 + $0x98] sm:$0xff] %vm355, %v342
      %376 = vst.msk [vmem:[%s170 + $0xa0] sm:$0xff] %vm355, %v343
      %377 = vst.msk [vmem:[%s170 + $0xa8] sm:$0xff] %vm355, %v344
      %378 = vst.msk [vmem:[%s170 + $0xb0] sm:$0xff] %vm355, %v345
      %379 = vst.msk [vmem:[%s170 + $0xb8] sm:$0xff] %vm355, %v346
      %380 = vst.msk [vmem:[%s170 + $0xc0] sm:$0xff] %vm355, %v347
      %381 = vst.msk [vmem:[%s170 + $0xc8] sm:$0xff] %vm355, %v348
      %382 = vst.msk [vmem:[%s170 + $0xd0] sm:$0xff] %vm355, %v349
      %383 = vst.msk [vmem:[%s170 + $0xd8] sm:$0xff] %vm355, %v350
      %384 = vst.msk [vmem:[%s170 + $0xe0] sm:$0xff] %vm355, %v351
      %385 = vst.msk [vmem:[%s170 + $0xe8] sm:$0xff] %vm355, %v352
      %386 = vst.msk [vmem:[%s170 + $0xf0] sm:$0xff] %vm355, %v353
      %387 = vst.msk [vmem:[%s170 + $0xf8] sm:$0xff] %vm355, %v354
      %p388 = scmp.lt.s32.totalorder %s14, 1
      %s389 = scalar_select %p388, %s14, 1
      %s390 = smul.addr %s389, 32
      %s391 = smul.addr %s390, 8
      %s392 = scalar_lea.vmem %s3, %s391
      // Predicated region
      $region33: #{encoder_block_forward.5} parent=31 // pred_check
        %p393 = pneg %p100
      $region34: #{encoder_block_forward.5} parent=31 // pred_check_branch
        %395 = sbr.rel (%p393) target = $region36
      $region35: #{encoder_block_forward.5} parent=31 // pred_region
        _
      $region36: #{encoder_block_forward.5} parent=31 // pred_fallthru
        _
    $region32: #{encoder_block_forward.5} parent=5 // pred_fallthru
      _
    %p396 = scmp.le.s32.totalorder 2, %s9
    // Predicated region
    $region37: #{encoder_block_forward.5} parent=5 // pred_check
      %p397 = pneg %p396
    $region38: #{encoder_block_forward.5} parent=5 // pred_check_branch
      %399 = sbr.rel (%p397) target = $region40
    $region39: #{encoder_block_forward.5} parent=5 // pred_region
      %s400 = ssub.s32 %s9, 2
      // Predicated region
      $region41: #{encoder_block_forward.5} parent=39 // pred_check
        %p401 = pneg %p106
      $region42: #{encoder_block_forward.5} parent=39 // pred_check_branch
        %403 = sbr.rel (%p401) target = $region44
      $region43: #{encoder_block_forward.5} parent=39 // pred_region
        %p404 = scmp.lt.s32.totalorder %s15, 1
        %s405 = scalar_select %p404, %s15, 1
        %s406 = smul.addr %s405, 32
        %s407 = smul.addr %s406, 8
        %s408 = scalar_lea.vmem %s3, %s407
      $region44: #{encoder_block_forward.5} parent=39 // pred_fallthru
        _
    $region40: #{encoder_block_forward.5} parent=5 // pred_fallthru
      _
  $region6: #{encoder_block_forward.5} parent=0 // loop_footer
    %s13 = sadd.s32 1, %s9
  $region7: #{encoder_block_forward.5} parent=0 // loop_footer_branch
    %8 = sbr.rel target = $region3
  $region8: #{encoder_block_forward.5} parent=0 // loop_exit
    _

// kernel: encoder_block_forward.4
$region0: #{encoder_block_forward.4}
  #allocation0 [shape = 'u32[]', space=smem, size = 0x4, offset = 0x4, fixed_abs, tag = 'smem constant byte address 0x4 - core index']
  #allocation1 [shape = 'u32[72,128]{1,0:T(1,128)}', space=vmem, size = 0x9000, scoped, tag = 'internal scratch']
  #allocation2 [shape = 'bf16[440,128]{1,0:T(8,128)(2,1)}', space=vmem, size = 0x1b800, scoped, tag = 'scratch operand']
  %s0 = inlined_call_operand.vmem [shape: bf16[2,384,128], index: 0, kind: input, shape index: {}]
  %s1 = inlined_call_operand.vmem [shape: f32[2,128], index: 1, kind: input, shape index: {}]
  %s2 = inlined_call_operand.vmem [shape: f32[2,128], index: 2, kind: input, shape index: {}]
  %s3 = inlined_call_operand.vmem [shape: bf16[1152,128], index: 3, kind: input, shape index: {}]
  %s4 = inlined_call_operand.vmem [shape: bf16[2,384,128], index: 4, kind: output, shape index: {0}]
  %s5 = inlined_call_operand.vmem [shape: f32[2,2,128], index: 5, kind: output, shape index: {1}]
  %6 = xla_tuple %s4, %s5
  %s7 = sld [smem:[#allocation0]]
  $region57: #{encoder_block_forward.4} parent=0
    _
  %s9 = ssub.s32 1, %s7
  %s10 = scalar_select 0, %s9, %s7
  loop: start=0, step=1, limit=4
  $region2: #{encoder_block_forward.4} parent=0 // loop_pre_header
    _
  $region3: #{encoder_block_forward.4} parent=0 // loop_header
    %s12 = sphi 0, %s16
    %p13 = scmp.ge.s32.totalorder %s12, 4
    %s22 = sphi 0, %s24
    %s25 = sphi 0, %s22
    %s26 = sphi 0, %s25
    %s42 = sphi 0, %s26
    %s46 = sphi 0, %s46
    %s48 = sphi 0, %s46
    %s49 = sphi 0, %s48
    %s63 = sphi 0, %s49
    %s67 = sphi 0, %s67
    %s69 = sphi 0, %s67
    %s70 = sphi 0, %s69
    %s84 = sphi 0, %s70
    %s88 = sphi 0, %s88
    %s90 = sphi 0, %s88
    %s91 = sphi 0, %s90
    %s105 = sphi 0, %s91
    %s111 = sphi 0, %s113
    %s114 = sphi 0, %s111
    %s115 = sphi 0, %s114
    %s131 = sphi 0, %s115
    %s137 = sphi 0, %s139
    %s140 = sphi 0, %s137
    %s141 = sphi 0, %s140
    %s157 = sphi 0, %s141
  $region4: #{encoder_block_forward.4} parent=0 // loop_header_branch
    %15 = sbr.rel (%p13) target = $region8
  $region5: #{encoder_block_forward.4} parent=0 // loop_body
    %s17 = ssub.s32 %s12, 1
    %s18 = ssub.s32 %s12, 2
    %s19 = sadd.s32 %s12, 1
    %s20 = ssub.s32 %s12, %s19
    %p21 = scmp.eq.s32.totalorder %s20, 0
    %s23 = sadd.s32 %s22, 1
    %s24 = scalar_select %p21, %s22, %s23
    %p27 = pneg %p21
    %p28 = scmp.eq.s32.totalorder %s12, 1
    %p29 = por %p27, %p28
    %p30 = scmp.ne.s32.totalorder %s22, %s25
    %p31 = scmp.eq.s32.totalorder %s12, 0
    %p32 = por %p30, %p31
    %p33 = scmp.ne.s32.totalorder %s22, %s25
    %p34 = scmp.eq.s32.totalorder %s17, 1
    %p35 = por %p33, %p34
    %p36 = scmp.ne.s32.totalorder %s25, %s26
    %p37 = scmp.eq.s32.totalorder %s17, 0
    %p38 = por %p36, %p37
    %p39 = scmp.ne.s32.totalorder %s25, %s26
    %p40 = scmp.eq.s32.totalorder %s18, 1
    %p41 = por %p39, %p40
    %p43 = scmp.ne.s32.totalorder %s26, %s42
    %p44 = scmp.eq.s32.totalorder %s18, 0
    %p45 = por %p43, %p44
    %s47 = sadd.s32 %s46, 1
    %p50 = scmp.eq.s32.totalorder %s12, 1
    %p51 = scmp.ne.s32.totalorder %s46, %s48
    %p52 = scmp.eq.s32.totalorder %s12, 0
    %p53 = por %p51, %p52
    %p54 = scmp.ne.s32.totalorder %s46, %s48
    %p55 = scmp.eq.s32.totalorder %s17, 1
    %p56 = por %p54, %p55
    %p57 = scmp.ne.s32.totalorder %s48, %s49
    %p58 = scmp.eq.s32.totalorder %s17, 0
    %p59 = por %p57, %p58
    %p60 = scmp.ne.s32.totalorder %s48, %s49
    %p61 = scmp.eq.s32.totalorder %s18, 1
    %p62 = por %p60, %p61
    %p64 = scmp.ne.s32.totalorder %s49, %s63
    %p65 = scmp.eq.s32.totalorder %s18, 0
    %p66 = por %p64, %p65
    %s68 = sadd.s32 %s67, 1
    %p71 = scmp.eq.s32.totalorder %s12, 1
    %p72 = scmp.ne.s32.totalorder %s67, %s69
    %p73 = scmp.eq.s32.totalorder %s12, 0
    %p74 = por %p72, %p73
    %p75 = scmp.ne.s32.totalorder %s67, %s69
    %p76 = scmp.eq.s32.totalorder %s17, 1
    %p77 = por %p75, %p76
    %p78 = scmp.ne.s32.totalorder %s69, %s70
    %p79 = scmp.eq.s32.totalorder %s17, 0
    %p80 = por %p78, %p79
    %p81 = scmp.ne.s32.totalorder %s69, %s70
    %p82 = scmp.eq.s32.totalorder %s18, 1
    %p83 = por %p81, %p82
    %p85 = scmp.ne.s32.totalorder %s70, %s84
    %p86 = scmp.eq.s32.totalorder %s18, 0
    %p87 = por %p85, %p86
    %s89 = sadd.s32 %s88, 1
    %p92 = scmp.eq.s32.totalorder %s12, 1
    %p93 = scmp.ne.s32.totalorder %s88, %s90
    %p94 = scmp.eq.s32.totalorder %s12, 0
    %p95 = por %p93, %p94
    %p96 = scmp.ne.s32.totalorder %s88, %s90
    %p97 = scmp.eq.s32.totalorder %s17, 1
    %p98 = por %p96, %p97
    %p99 = scmp.ne.s32.totalorder %s90, %s91
    %p100 = scmp.eq.s32.totalorder %s17, 0
    %p101 = por %p99, %p100
    %p102 = scmp.ne.s32.totalorder %s90, %s91
    %p103 = scmp.eq.s32.totalorder %s18, 1
    %p104 = por %p102, %p103
    %p106 = scmp.ne.s32.totalorder %s91, %s105
    %p107 = scmp.eq.s32.totalorder %s18, 0
    %p108 = por %p106, %p107
    %s109 = ssub.s32 %s12, %s19
    %p110 = scmp.eq.s32.totalorder %s109, 0
    %s112 = sadd.s32 %s111, 1
    %s113 = scalar_select %p110, %s111, %s112
    %p116 = pneg %p110
    %p117 = scmp.eq.s32.totalorder %s12, 1
    %p118 = por %p116, %p117
    %p119 = scmp.ne.s32.totalorder %s111, %s114
    %p120 = scmp.eq.s32.totalorder %s12, 0
    %p121 = por %p119, %p120
    %p122 = scmp.ne.s32.totalorder %s111, %s114
    %p123 = scmp.eq.s32.totalorder %s17, 1
    %p124 = por %p122, %p123
    %p125 = scmp.ne.s32.totalorder %s114, %s115
    %p126 = scmp.eq.s32.totalorder %s17, 0
    %p127 = por %p125, %p126
    %p128 = scmp.ne.s32.totalorder %s114, %s115
    %p129 = scmp.eq.s32.totalorder %s18, 1
    %p130 = por %p128, %p129
    %p132 = scmp.ne.s32.totalorder %s115, %s131
    %p133 = scmp.eq.s32.totalorder %s18, 0
    %p134 = por %p132, %p133
    %s135 = ssub.s32 %s12, %s19
    %p136 = scmp.eq.s32.totalorder %s135, 0
    %s138 = sadd.s32 %s137, 1
    %s139 = scalar_select %p136, %s137, %s138
    %p142 = pneg %p136
    %p143 = scmp.eq.s32.totalorder %s12, 1
    %p144 = por %p142, %p143
    %p145 = scmp.ne.s32.totalorder %s137, %s140
    %p146 = scmp.eq.s32.totalorder %s12, 0
    %p147 = por %p145, %p146
    %p148 = scmp.ne.s32.totalorder %s137, %s140
    %p149 = scmp.eq.s32.totalorder %s17, 1
    %p150 = por %p148, %p149
    %p151 = scmp.ne.s32.totalorder %s140, %s141
    %p152 = scmp.eq.s32.totalorder %s17, 0
    %p153 = por %p151, %p152
    %p154 = scmp.ne.s32.totalorder %s140, %s141
    %p155 = scmp.eq.s32.totalorder %s18, 1
    %p156 = por %p154, %p155
    %p158 = scmp.ne.s32.totalorder %s141, %s157
    %p159 = scmp.eq.s32.totalorder %s18, 0
    %p160 = por %p158, %p159
    %p161 = scmp.le.s32.totalorder 1, %s12
    %p162 = scmp.lt.s32.totalorder %s12, 3
    %p163 = pnand %p161, %p162
    %p164 = pneg %p163
    // Predicated region
    $region9: #{encoder_block_forward.4} parent=5 // pred_check
      _
    $region10: #{encoder_block_forward.4} parent=5 // pred_check_branch
      %166 = sbr.rel (%p163) target = $region12
    $region11: #{encoder_block_forward.4} parent=5 // pred_region
      %s167 = ssub.s32 %s12, 1
      // Predicated region
      $region13: #{encoder_block_forward.4} parent=11 // pred_check
        %p168 = pneg %p59
      $region14: #{encoder_block_forward.4} parent=11 // pred_check_branch
        %170 = sbr.rel (%p168) target = $region16
      $region15: #{encoder_block_forward.4} parent=11 // pred_region
        _
      $region16: #{encoder_block_forward.4} parent=11 // pred_fallthru
        _
      // Predicated region
      $region17: #{encoder_block_forward.4} parent=11 // pred_check
        %p171 = pneg %p80
      $region18: #{encoder_block_forward.4} parent=11 // pred_check_branch
        %173 = sbr.rel (%p171) target = $region20
      $region19: #{encoder_block_forward.4} parent=11 // pred_region
        _
      $region20: #{encoder_block_forward.4} parent=11 // pred_fallthru
        _
      // Predicated region
      $region21: #{encoder_block_forward.4} parent=11 // pred_check
        %p174 = pneg %p101
      $region22: #{encoder_block_forward.4} parent=11 // pred_check_branch
        %176 = sbr.rel (%p174) target = $region24
      $region23: #{encoder_block_forward.4} parent=11 // pred_region
        _
      $region24: #{encoder_block_forward.4} parent=11 // pred_fallthru
        _
    $region12: #{encoder_block_forward.4} parent=5 // pred_fallthru
      _
    %p177 = scmp.lt.s32.totalorder %s12, 2
    // Predicated region
    $region25: #{encoder_block_forward.4} parent=5 // pred_check
      %p178 = pneg %p177
    $region26: #{encoder_block_forward.4} parent=5 // pred_check_branch
      %180 = sbr.rel (%p178) target = $region28
    $region27: #{encoder_block_forward.4} parent=5 // pred_region
      // Predicated region
      $region29: #{encoder_block_forward.4} parent=27 // pred_check
        %p181 = pneg %p32
      $region30: #{encoder_block_forward.4} parent=27 // pred_check_branch
        %183 = sbr.rel (%p181) target = $region32
      $region31: #{encoder_block_forward.4} parent=27 // pred_region
        %p184 = scmp.lt.s32.totalorder %s12, 1
        %s185 = scalar_select %p184, %s12, 1
        %s186 = smul.addr %s185, 48
        %s187 = smul.addr %s186, 4
        %s188 = scalar_lea.vmem %s0, %s187
      $region32: #{encoder_block_forward.4} parent=27 // pred_fallthru
        _
    $region28: #{encoder_block_forward.4} parent=5 // pred_fallthru
      _
    %p189 = scmp.le.s32.totalorder 1, %s12
    %p190 = scmp.lt.s32.totalorder %s12, 3
    %p191 = pnand %p189, %p190
    %p192 = pneg %p191
    // Predicated region
    $region33: #{encoder_block_forward.4} parent=5 // pred_check
      _
    $region34: #{encoder_block_forward.4} parent=5 // pred_check_branch
      %194 = sbr.rel (%p191) target = $region36
    $region35: #{encoder_block_forward.4} parent=5 // pred_region
      %s195 = ssub.s32 %s12, 1
      %p196 = scmp.lt.s32.totalorder %s17, 1
      %s197 = scalar_select %p196, %s17, 1
      %s198 = smul.addr %s197, 48
      %s199 = smul.addr %s198, 4
      %s200 = scalar_lea.vmem %s0, %s199
      %p201 = pneg %p38
      %p202 = pneg %p35
      %p203 = pneg %p59
      %p204 = pneg %p56
      %p205 = pneg %p80
      %p206 = pneg %p77
      %p207 = pneg %p101
      %p208 = pneg %p98
      %p209 = pneg %p127
      %p210 = pneg %p124
      %p211 = scmp.lt.s32.totalorder %s17, 1
      %s212 = scalar_select %p211, %s17, 1
      %s213 = smul.addr %s212, 48
      %s214 = smul.addr %s213, 4
      %s215 = scalar_lea.vmem %s4, %s214
      %p216 = pneg %p153
      %p217 = pneg %p150
      %p218 = scmp.lt.s32.totalorder %s17, 1
      %s219 = scalar_select %p218, %s17, 1
      %s220 = smul.addr %s219, 2
      %s221 = scalar_lea.vmem %s5, %s220
      %p222 = scmp.lt.s32.totalorder %s17, 1
      %s223 = scalar_select %p222, %s17, 1
      %s224 = smul.addr %s223, 48
      %s225 = smul.addr %s224, 4
      %s226 = scalar_lea.vmem %s0, %s225
      %p227 = scmp.lt.s32.totalorder %s17, 1
      %s228 = scalar_select %p227, %s17, 1
      %s229 = smul.addr %s228, 48
      %s230 = smul.addr %s229, 4
      %s231 = scalar_lea.vmem %s4, %s230
      %p232 = scmp.lt.s32.totalorder %s17, 1
      %s233 = scalar_select %p232, %s17, 1
      %s234 = smul.addr %s233, 2
      %s235 = scalar_lea.vmem %s5, %s234
      %v237 = vld [vmem:[%s1] sm:$0x1]
      %v238 = vmul.f32 %v237, 0.001953125
      %v239 = vld [vmem:[%s1 + $0x1] sm:$0x1]
      %v240 = vmul.f32 %v239, 0.001953125
      %v241 = vmul.f32 %v238, %v238
      %v242 = vsub.f32 %v240, %v241
      %v243 = vadd.f32 %v242, 1e-05
      %v244 = vrsqrt.pop %v243
      %v245 = vmul.f32 %v244, %v243
      %v246 = vmul.f32 %v245, %v244
      %v247 = vmul.f32 0.5, %v246
      %v248 = vsub.f32 1.5, %v247
      %v249 = vmul.f32 %v244, %v248
      %vm250 = vweird.f32 %v243
      %vm251 = vweird.f32 %v244
      %vm252 = vmor %vm250, %vm251
      %v253 = vsel %vm252, %v244, %v249
      %v254 = vld [vmem:[%s2] sm:$0x1]
      %v255 = vmul.f32 %v253, %v254
      %v256 = vld [vmem:[%s2 + $0x1] sm:$0x1]
      %v257 = vmul.f32 %v238, %v255
      %v258 = vsub.f32 %v256, %v257
      %v259 = vlaneseq
      %v260 = vshrl.u32 %v259, 7
      %v261 = vadd.s32 %v260, 8
      %v262 = vadd.s32 %v260, 16
      %vm263 = vcmp.lt.s32.totalorder %v260, 16
      %vm264 = vcmp.lt.s32.totalorder %v261, 16
      %vm265 = vcmp.lt.s32.totalorder %v262, 16
      %v266 = vsel %vm263, 1, 0
      %v267 = vsel %vm264, 1, 0
      %v268 = vsel %vm265, 1, 0
      %v269 = vcvt.s32.f32 %v266
      %v270 = vcvt.s32.f32 %v267
      %v271 = vcvt.s32.f32 %v268
      %v272 = vld [vmem:[%s226] sm:$0xf]
      %v273 = vld [vmem:[%s226 + $0x4] sm:$0xf]
      %v274 = vld [vmem:[%s226 + $0x8] sm:$0xf]
      %v275 = vld [vmem:[%s226 + $0xc] sm:$0xf]
      %v276 = vld [vmem:[%s226 + $0x10] sm:$0xf]
      %v277 = vld [vmem:[%s226 + $0x14] sm:$0xf]
      %v278 = vld [vmem:[%s226 + $0x18] sm:$0xf]
      %v279 = vld [vmem:[%s226 + $0x1c] sm:$0xf]
      %v280 = vld [vmem:[%s226 + $0x20] sm:$0xf]
      %v281 = vld [vmem:[%s226 + $0x24] sm:$0xf]
      %v282 = vld [vmem:[%s226 + $0x28] sm:$0xf]
      %v283 = vld [vmem:[%s226 + $0x2c] sm:$0xf]
      %v284 = vld [vmem:[%s226 + $0x30] sm:$0xf]
      %v285 = vld [vmem:[%s226 + $0x34] sm:$0xf]
      %v286 = vld [vmem:[%s226 + $0x38] sm:$0xf]
      %v287 = vld [vmem:[%s226 + $0x3c] sm:$0xf]
      %v288 = vld [vmem:[%s226 + $0x40] sm:$0xf]
      %v289 = vld [vmem:[%s226 + $0x44] sm:$0xf]
      %v290 = vld [vmem:[%s226 + $0x48] sm:$0xf]
      %v291 = vld [vmem:[%s226 + $0x4c] sm:$0xf]
      %v292 = vld [vmem:[%s226 + $0x50] sm:$0xf]
      %v293 = vld [vmem:[%s226 + $0x54] sm:$0xf]
      %v294 = vld [vmem:[%s226 + $0x58] sm:$0xf]
      %v295 = vld [vmem:[%s226 + $0x5c] sm:$0xf]
      %v296 = vld [vmem:[%s226 + $0x60] sm:$0xf]
      %v297 = vld [vmem:[%s226 + $0x64] sm:$0xf]
      %v298 = vld [vmem:[%s226 + $0x68] sm:$0xf]
      %v299 = vld [vmem:[%s226 + $0x6c] sm:$0xf]
      %v300 = vld [vmem:[%s226 + $0x70] sm:$0xf]
      %v301 = vld [vmem:[%s226 + $0x74] sm:$0xf]
      %v302 = vld [vmem:[%s226 + $0x78] sm:$0xf]
      %v303 = vld [vmem:[%s226 + $0x7c] sm:$0xf]
      %v304 = vld [vmem:[%s226 + $0x80] sm:$0xf]
      %v305 = vld [vmem:[%s226 + $0x84] sm:$0xf]
      %v306 = vld [vmem:[%s226 + $0x88] sm:$0xf]
      %v307 = vld [vmem:[%s226 + $0x8c] sm:$0xf]
      %v308 = vld [vmem:[%s226 + $0x90] sm:$0xf]
      %v309 = vld [vmem:[%s226 + $0x94] sm:$0xf]
      %v310 = vld [vmem:[%s226 + $0x98] sm:$0xf]
      %v311 = vld [vmem:[%s226 + $0x9c] sm:$0xf]
      %v312 = vld [vmem:[%s226 + $0xa0] sm:$0xf]
      %v313 = vld [vmem:[%s226 + $0xa4] sm:$0xf]
      %v314 = vld [vmem:[%s226 + $0xa8] sm:$0xf]
      %v315 = vld [vmem:[%s226 + $0xac] sm:$0xf]
      %v316 = vld [vmem:[%s226 + $0xb0] sm:$0xf]
      %v317 = vld [vmem:[%s226 + $0xb4] sm:$0xf]
      %v318 = vld [vmem:[%s226 + $0xb8] sm:$0xf]
      %v319 = vld [vmem:[%s226 + $0xbc] sm:$0xf]
      %v320 = vunpack.c.l.bf16 %v272
      %v321 = vunpack.c.l.bf16 %v273
      %v322 = vunpack.c.l.bf16 %v274
      %v323 = vunpack.c.l.bf16 %v275
      %v324 = vunpack.c.l.bf16 %v276
      %v325 = vunpack.c.l.bf16 %v277
      %v326 = vunpack.c.l.bf16 %v278
      %v327 = vunpack.c.l.bf16 %v279
      %v328 = vunpack.c.l.bf16 %v280
      %v329 = vunpack.c.l.bf16 %v281
      %v330 = vunpack.c.l.bf16 %v282
      %v331 = vunpack.c.l.bf16 %v283
      %v332 = vunpack.c.l.bf16 %v284
      %v333 = vunpack.c.l.bf16 %v285
      %v334 = vunpack.c.l.bf16 %v286
      %v335 = vunpack.c.l.bf16 %v287
      %v336 = vunpack.c.l.bf16 %v288
      %v337 = vunpack.c.l.bf16 %v289
      %v338 = vunpack.c.l.bf16 %v290
      %v339 = vunpack.c.l.bf16 %v291
      %v340 = vunpack.c.l.bf16 %v292
      %v341 = vunpack.c.l.bf16 %v293
      %v342 = vunpack.c.l.bf16 %v294
      %v343 = vunpack.c.l.bf16 %v295
      %v344 = vunpack.c.l.bf16 %v296
      %v345 = vunpack.c.l.bf16 %v297
      %v346 = vunpack.c.l.bf16 %v298
      %v347 = vunpack.c.l.bf16 %v299
      %v348 = vunpack.c.l.bf16 %v300
      %v349 = vunpack.c.l.bf16 %v301
      %v350 = vunpack.c.l.bf16 %v302
      %v351 = vunpack.c.l.bf16 %v303
      %v352 = vunpack.c.l.bf16 %v304
      %v353 = vunpack.c.l.bf16 %v305
      %v354 = vunpack.c.l.bf16 %v306
      %v355 = vunpack.c.l.bf16 %v307
      %v356 = vunpack.c.l.bf16 %v308
      %v357 = vunpack.c.l.bf16 %v309
      %v358 = vunpack.c.l.bf16 %v310
      %v359 = vunpack.c.l.bf16 %v311
      %v360 = vunpack.c.l.bf16 %v312
      %v361 = vunpack.c.l.bf16 %v313
      %v362 = vunpack.c.l.bf16 %v314
      %v363 = vunpack.c.l.bf16 %v315
      %v364 = vunpack.c.l.bf16 %v316
      %v365 = vunpack.c.l.bf16 %v317
      %v366 = vunpack.c.l.bf16 %v318
      %v367 = vunpack.c.l.bf16 %v319
      %v368 = vperm.slane %v255, 0
      %v369 = vmul.f32 %v320, %v368
      %v370 = vmul.f32 %v321, %v368
      %v371 = vmul.f32 %v322, %v368
      %v372 = vmul.f32 %v323, %v368
      %v373 = vmul.f32 %v324, %v368
      %v374 = vmul.f32 %v325, %v368
      %v375 = vmul.f32 %v326, %v368
      %v376 = vmul.f32 %v327, %v368
      %v377 = vmul.f32 %v328, %v368
      %v378 = vmul.f32 %v329, %v368
      %v379 = vmul.f32 %v330, %v368
      %v380 = vmul.f32 %v331, %v368
      %v381 = vmul.f32 %v332, %v368
      %v382 = vmul.f32 %v333, %v368
      %v383 = vmul.f32 %v334, %v368
      %v384 = vmul.f32 %v335, %v368
      %v385 = vmul.f32 %v336, %v368
      %v386 = vmul.f32 %v337, %v368
      %v387 = vmul.f32 %v338, %v368
      %v388 = vmul.f32 %v339, %v368
      %v389 = vmul.f32 %v340, %v368
      %v390 = vmul.f32 %v341, %v368
      %v391 = vmul.f32 %v342, %v368
      %v392 = vmul.f32 %v343, %v368
      %v393 = vmul.f32 %v344, %v368
      %v394 = vmul.f32 %v345, %v368
      %v395 = vmul.f32 %v346, %v368
      %v396 = vmul.f32 %v347, %v368
      %v397 = vmul.f32 %v348, %v368
      %v398 = vmul.f32 %v349, %v368
      %v399 = vmul.f32 %v350, %v368
      %v400 = vmul.f32 %v351, %v368
      %v401 = vmul.f32 %v352, %v368
      %v402 = vmul.f32 %v353, %v368
      %v403 = vmul.f32 %v354, %v368
      %v404 = vmul.f32 %v355, %v368
      %v405 = vmul.f32 %v356, %v368
      %v406 = vmul.f32 %v357, %v368
      %v407 = vmul.f32 %v358, %v368
      %v408 = vmul.f32 %v359, %v368
      %v409 = vmul.f32 %v360, %v368
      %v410 = vmul.f32 %v361, %v368
      %v411 = vmul.f32 %v362, %v368
      %v412 = vmul.f32 %v363, %v368
      %v413 = vmul.f32 %v364, %v368
      %v414 = vmul.f32 %v365, %v368
      %v415 = vmul.f32 %v366, %v368
      %v416 = vmul.f32 %v367, %v368
      %v417 = vperm.slane %v258, 0
      %v418 = vadd.f32 %v369, %v417
      %v419 = vadd.f32 %v370, %v417
      %v420 = vadd.f32 %v371, %v417
      %v421 = vadd.f32 %v372, %v417
      %v422 = vadd.f32 %v373, %v417
      %v423 = vadd.f32 %v374, %v417
      %v424 = vadd.f32 %v375, %v417
      %v425 = vadd.f32 %v376, %v417
      %v426 = vadd.f32 %v377, %v417
      %v427 = vadd.f32 %v378, %v417
      %v428 = vadd.f32 %v379, %v417
      %v429 = vadd.f32 %v380, %v417
      %v430 = vadd.f32 %v381, %v417
      %v431 = vadd.f32 %v382, %v417
      %v432 = vadd.f32 %v383, %v417
      %v433 = vadd.f32 %v384, %v417
      %v434 = vadd.f32 %v385, %v417
      %v435 = vadd.f32 %v386, %v417
      %v436 = vadd.f32 %v387, %v417
      %v437 = vadd.f32 %v388, %v417
      %v438 = vadd.f32 %v389, %v417
      %v439 = vadd.f32 %v390, %v417
      %v440 = vadd.f32 %v391, %v417
      %v441 = vadd.f32 %v392, %v417
      %v442 = vadd.f32 %v393, %v417
      %v443 = vadd.f32 %v394, %v417
      %v444 = vadd.f32 %v395, %v417
      %v445 = vadd.f32 %v396, %v417
      %v446 = vadd.f32 %v397, %v417
      %v447 = vadd.f32 %v398, %v417
      %v448 = vadd.f32 %v399, %v417
      %v449 = vadd.f32 %v400, %v417
      %v450 = vadd.f32 %v401, %v417
      %v451 = vadd.f32 %v402, %v417
      %v452 = vadd.f32 %v403, %v417
      %v453 = vadd.f32 %v404, %v417
      %v454 = vadd.f32 %v405, %v417
      %v455 = vadd.f32 %v406, %v417
      %v456 = vadd.f32 %v407, %v417
      %v457 = vadd.f32 %v408, %v417
      %v458 = vadd.f32 %v409, %v417
      %v459 = vadd.f32 %v410, %v417
      %v460 = vadd.f32 %v411, %v417
      %v461 = vadd.f32 %v412, %v417
      %v462 = vadd.f32 %v413, %v417
      %v463 = vadd.f32 %v414, %v417
      %v464 = vadd.f32 %v415, %v417
      %v465 = vadd.f32 %v416, %v417
      %v466 = vmax.f32 %v418, 0.0
      %v467 = vmax.f32 %v419, 0.0
      %v468 = vmax.f32 %v420, 0.0
      %v469 = vmax.f32 %v421, 0.0
      %v470 = vmax.f32 %v422, 0.0
      %v471 = vmax.f32 %v423, 0.0
      %v472 = vmax.f32 %v424, 0.0
      %v473 = vmax.f32 %v425, 0.0
      %v474 = vmax.f32 %v426, 0.0
      %v475 = vmax.f32 %v427, 0.0
      %v476 = vmax.f32 %v428, 0.0
      %v477 = vmax.f32 %v429, 0.0
      %v478 = vmax.f32 %v430, 0.0
      %v479 = vmax.f32 %v431, 0.0
      %v480 = vmax.f32 %v432, 0.0
      %v481 = vmax.f32 %v433, 0.0
      %v482 = vmax.f32 %v434, 0.0
      %v483 = vmax.f32 %v435, 0.0
      %v484 = vmax.f32 %v436, 0.0
      %v485 = vmax.f32 %v437, 0.0
      %v486 = vmax.f32 %v438, 0.0
      %v487 = vmax.f32 %v439, 0.0
      %v488 = vmax.f32 %v440, 0.0
      %v489 = vmax.f32 %v441, 0.0
      %v490 = vmax.f32 %v442, 0.0
      %v491 = vmax.f32 %v443, 0.0
      %v492 = vmax.f32 %v444, 0.0
      %v493 = vmax.f32 %v445, 0.0
      %v494 = vmax.f32 %v446, 0.0
      %v495 = vmax.f32 %v447, 0.0
      %v496 = vmax.f32 %v448, 0.0
      %v497 = vmax.f32 %v449, 0.0
      %v498 = vmax.f32 %v450, 0.0
      %v499 = vmax.f32 %v451, 0.0
      %v500 = vmax.f32 %v452, 0.0
      %v501 = vmax.f32 %v453, 0.0
      %v502 = vmax.f32 %v454, 0.0
      %v503 = vmax.f32 %v455, 0.0
      %v504 = vmax.f32 %v456, 0.0
      %v505 = vmax.f32 %v457, 0.0
      %v506 = vmax.f32 %v458, 0.0
      %v507 = vmax.f32 %v459, 0.0
      %v508 = vmax.f32 %v460, 0.0
      %v509 = vmax.f32 %v461, 0.0
      %v510 = vmax.f32 %v462, 0.0
      %v511 = vmax.f32 %v463, 0.0
      %v512 = vmax.f32 %v464, 0.0
      %v513 = vmax.f32 %v465, 0.0
      %v514 = vmul.f32 %v466, %v269
      %v515 = vmul.f32 %v467, %v270
      %v516 = vmul.f32 %v468, %v271
      %v517 = vmul.f32 %v469, %v269
      %v518 = vmul.f32 %v470, %v270
      %v519 = vmul.f32 %v471, %v271
      %v520 = vmul.f32 %v472, %v269
      %v521 = vmul.f32 %v473, %v270
      %v522 = vmul.f32 %v474, %v271
      %v523 = vmul.f32 %v475, %v269
      %v524 = vmul.f32 %v476, %v270
      %v525 = vmul.f32 %v477, %v271
      %v526 = vmul.f32 %v478, %v269
      %v527 = vmul.f32 %v479, %v270
      %v528 = vmul.f32 %v480, %v271
      %v529 = vmul.f32 %v481, %v269
      %v530 = vmul.f32 %v482, %v270
      %v531 = vmul.f32 %v483, %v271
      %v532 = vmul.f32 %v484, %v269
      %v533 = vmul.f32 %v485, %v270
      %v534 = vmul.f32 %v486, %v271
      %v535 = vmul.f32 %v487, %v269
      %v536 = vmul.f32 %v488, %v270
      %v537 = vmul.f32 %v489, %v271
      %v538 = vmul.f32 %v490, %v269
      %v539 = vmul.f32 %v491, %v270
      %v540 = vmul.f32 %v492, %v271
      %v541 = vmul.f32 %v493, %v269
      %v542 = vmul.f32 %v494, %v270
      %v543 = vmul.f32 %v495, %v271
      %v544 = vmul.f32 %v496, %v269
      %v545 = vmul.f32 %v497, %v270
      %v546 = vmul.f32 %v498, %v271
      %v547 = vmul.f32 %v499, %v269
      %v548 = vmul.f32 %v500, %v270
      %v549 = vmul.f32 %v501, %v271
      %v550 = vmul.f32 %v502, %v269
      %v551 = vmul.f32 %v503, %v270
      %v552 = vmul.f32 %v504, %v271
      %v553 = vmul.f32 %v505, %v269
      %v554 = vmul.f32 %v506, %v270
      %v555 = vmul.f32 %v507, %v271
      %v556 = vmul.f32 %v508, %v269
      %v557 = vmul.f32 %v509, %v270
      %v558 = vmul.f32 %v510, %v271
      %v559 = vmul.f32 %v511, %v269
      %v560 = vmul.f32 %v512, %v270
      %v561 = vmul.f32 %v513, %v271
      %562 = vst [vmem:[#allocation2] sm:$0xf] 0
      %563 = vst [vmem:[#allocation2 + $0x4] sm:$0xf] 0
      %564 = vst [vmem:[#allocation2 + $0x8] sm:$0xf] 0
      %vm565 = vcmask 1040384
      %vm566 = vsmask.f32 256
      %vm567 = vmand %vm565, %vm566
      %v568 = vld [vmem:[#allocation2 + $0xc] sm:$0x1]
      %v569 = vsel %vm567, 0, %v568
      %570 = vst [vmem:[#allocation2 + $0xc] sm:$0x1] %v569
      %vm571 = vcmask 1043456
      %vm572 = vsmask.f32 7938
      %vm573 = vmand %vm571, %vm572
      %v574 = vld [vmem:[#allocation2 + $0xcc] sm:$0xf]
      %v575 = vsel %vm573, 0, %v574
      %576 = vst [vmem:[#allocation2 + $0xcc] sm:$0xf] %v575
      %577 = vst [vmem:[#allocation2 + $0xd0] sm:$0xf] 0
      %578 = vst [vmem:[#allocation2 + $0xd4] sm:$0xf] 0
      %579 = vst [vmem:[#allocation2 + $0xd8] sm:$0xf] 0
      %v580 = vpack.c.bf16 %v514, %v514
      %v581 = vpack.c.bf16 %v515, %v515
      %v582 = vpack.c.bf16 %v516, %v516
      %v583 = vpack.c.bf16 %v517, %v517
      %v584 = vpack.c.bf16 %v518, %v518
      %v585 = vpack.c.bf16 %v519, %v519
      %v586 = vpack.c.bf16 %v520, %v520
      %v587 = vpack.c.bf16 %v521, %v521
      %v588 = vpack.c.bf16 %v522, %v522
      %v589 = vpack.c.bf16 %v523, %v523
      %v590 = vpack.c.bf16 %v524, %v524
      %v591 = vpack.c.bf16 %v525, %v525
      %v592 = vpack.c.bf16 %v526, %v526
      %v593 = vpack.c.bf16 %v527, %v527
      %v594 = vpack.c.bf16 %v528, %v528
      %v595 = vpack.c.bf16 %v529, %v529
      %v596 = vpack.c.bf16 %v530, %v530
      %v597 = vpack.c.bf16 %v531, %v531
      %v598 = vpack.c.bf16 %v532, %v532
      %v599 = vpack.c.bf16 %v533, %v533
      %v600 = vpack.c.bf16 %v534, %v534
      %v601 = vpack.c.bf16 %v535, %v535
      %v602 = vpack.c.bf16 %v536, %v536
      %v603 = vpack.c.bf16 %v537, %v537
      %v604 = vpack.c.bf16 %v538, %v538
      %v605 = vpack.c.bf16 %v539, %v539
      %v606 = vpack.c.bf16 %v540, %v540
      %v607 = vpack.c.bf16 %v541, %v541
      %v608 = vpack.c.bf16 %v542, %v542
      %v609 = vpack.c.bf16 %v543, %v543
      %v610 = vpack.c.bf16 %v544, %v544
      %v611 = vpack.c.bf16 %v545, %v545
      %v612 = vpack.c.bf16 %v546, %v546
      %v613 = vpack.c.bf16 %v547, %v547
      %v614 = vpack.c.bf16 %v548, %v548
      %v615 = vpack.c.bf16 %v549, %v549
      %v616 = vpack.c.bf16 %v550, %v550
      %v617 = vpack.c.bf16 %v551, %v551
      %v618 = vpack.c.bf16 %v552, %v552
      %v619 = vpack.c.bf16 %v553, %v553
      %v620 = vpack.c.bf16 %v554, %v554
      %v621 = vpack.c.bf16 %v555, %v555
      %v622 = vpack.c.bf16 %v556, %v556
      %v623 = vpack.c.bf16 %v557, %v557
      %v624 = vpack.c.bf16 %v558, %v558
      %v625 = vpack.c.bf16 %v559, %v559
      %v626 = vpack.c.bf16 %v560, %v560
      %v627 = vpack.c.bf16 %v561, %v561
      %vm628 = vsmask.f32 4368
      %vm629 = vmor %vm566, %vm628
      %v631 = vshrl.u32 %v580, 16
      %v633 = vrot.slane %v631, 7
      %v634 = vshll.u32 %v580, 16
      %v636 = vor.u32 %v633, %v634
      %v637 = vrot.slane %v633, 4
      %v639 = vshrl.u32 %v581, 16
      %v641 = vrot.slane %v639, 7
      %v642 = vshll.u32 %v581, 16
      %v644 = vor.u32 %v641, %v642
      %v645 = vsel %vm629, %v637, %v644
      %v646 = vrot.slane %v641, 4
      %v648 = vshrl.u32 %v582, 16
      %v650 = vrot.slane %v648, 7
      %v651 = vshll.u32 %v582, 16
      %v653 = vor.u32 %v650, %v651
      %v654 = vsel %vm629, %v646, %v653
      %v655 = vrot.slane %v650, 4
      %v657 = vshrl.u32 %v583, 16
      %v659 = vrot.slane %v657, 7
      %v660 = vshll.u32 %v583, 16
      %v662 = vor.u32 %v659, %v660
      %v663 = vsel %vm629, %v655, %v662
      %v664 = vrot.slane %v659, 4
      %v666 = vshrl.u32 %v584, 16
      %v668 = vrot.slane %v666, 7
      %v669 = vshll.u32 %v584, 16
      %v671 = vor.u32 %v668, %v669
      %v672 = vsel %vm629, %v664, %v671
      %v673 = vrot.slane %v668, 4
      %v675 = vshrl.u32 %v585, 16
      %v677 = vrot.slane %v675, 7
      %v678 = vshll.u32 %v585, 16
      %v680 = vor.u32 %v677, %v678
      %v681 = vsel %vm629, %v673, %v680
      %v682 = vrot.slane %v677, 4
      %v684 = vshrl.u32 %v586, 16
      %v686 = vrot.slane %v684, 7
      %v687 = vshll.u32 %v586, 16
      %v689 = vor.u32 %v686, %v687
      %v690 = vsel %vm629, %v682, %v689
      %v691 = vrot.slane %v686, 4
      %v693 = vshrl.u32 %v587, 16
      %v695 = vrot.slane %v693, 7
      %v696 = vshll.u32 %v587, 16
      %v698 = vor.u32 %v695, %v696
      %v699 = vsel %vm629, %v691, %v698
      %v700 = vrot.slane %v695, 4
      %v702 = vshrl.u32 %v588, 16
      %v704 = vrot.slane %v702, 7
      %v705 = vshll.u32 %v588, 16
      %v707 = vor.u32 %v704, %v705
      %v708 = vsel %vm629, %v700, %v707
      %v709 = vrot.slane %v704, 4
      %v711 = vshrl.u32 %v589, 16
      %v713 = vrot.slane %v711, 7
      %v714 = vshll.u32 %v589, 16
      %v716 = vor.u32 %v713, %v714
      %v717 = vsel %vm629, %v709, %v716
      %v718 = vrot.slane %v713, 4
      %v720 = vshrl.u32 %v590, 16
      %v722 = vrot.slane %v720, 7
      %v723 = vshll.u32 %v590, 16
      %v725 = vor.u32 %v722, %v723
      %v726 = vsel %vm629, %v718, %v725
      %v727 = vrot.slane %v722, 4
      %v729 = vshrl.u32 %v591, 16
      %v731 = vrot.slane %v729, 7
      %v732 = vshll.u32 %v591, 16
      %v734 = vor.u32 %v731, %v732
      %v735 = vsel %vm629, %v727, %v734
      %v736 = vrot.slane %v731, 4
      %v738 = vshrl.u32 %v592, 16
      %v740 = vrot.slane %v738, 7
      %v741 = vshll.u32 %v592, 16
      %v743 = vor.u32 %v740, %v741
      %v744 = vsel %vm629, %v736, %v743
      %v745 = vrot.slane %v740, 4
      %v747 = vshrl.u32 %v593, 16
      %v749 = vrot.slane %v747, 7
      %v750 = vshll.u32 %v593, 16
      %v752 = vor.u32 %v749, %v750
      %v753 = vsel %vm629, %v745, %v752
      %v754 = vrot.slane %v749, 4
      %v756 = vshrl.u32 %v594, 16
      %v758 = vrot.slane %v756, 7
      %v759 = vshll.u32 %v594, 16
      %v761 = vor.u32 %v758, %v759
      %v762 = vsel %vm629, %v754, %v761
      %v763 = vrot.slane %v758, 4
      %v765 = vshrl.u32 %v595, 16
      %v767 = vrot.slane %v765, 7
      %v768 = vshll.u32 %v595, 16
      %v770 = vor.u32 %v767, %v768
      %v771 = vsel %vm629, %v763, %v770
      %v772 = vrot.slane %v767, 4
      %v774 = vshrl.u32 %v596, 16
      %v776 = vrot.slane %v774, 7
      %v777 = vshll.u32 %v596, 16
      %v779 = vor.u32 %v776, %v777
      %v780 = vsel %vm629, %v772, %v779
      %v781 = vrot.slane %v776, 4
      %v783 = vshrl.u32 %v597, 16
      %v785 = vrot.slane %v783, 7
      %v786 = vshll.u32 %v597, 16
      %v788 = vor.u32 %v785, %v786
      %v789 = vsel %vm629, %v781, %v788
      %v790 = vrot.slane %v785, 4
      %v792 = vshrl.u32 %v598, 16
      %v794 = vrot.slane %v792, 7
      %v795 = vshll.u32 %v598, 16
      %v797 = vor.u32 %v794, %v795
      %v798 = vsel %vm629, %v790, %v797
      %v799 = vrot.slane %v794, 4
      %v801 = vshrl.u32 %v599, 16
      %v803 = vrot.slane %v801, 7
      %v804 = vshll.u32 %v599, 16
      %v806 = vor.u32 %v803, %v804
      %v807 = vsel %vm629, %v799, %v806
      %v808 = vrot.slane %v803, 4
      %v810 = vshrl.u32 %v600, 16
      %v812 = vrot.slane %v810, 7
      %v813 = vshll.u32 %v600, 16
      %v815 = vor.u32 %v812, %v813
      %v816 = vsel %vm629, %v808, %v815
      %v817 = vrot.slane %v812, 4
      %v819 = vshrl.u32 %v601, 16
      %v821 = vrot.slane %v819, 7
      %v822 = vshll.u32 %v601, 16
      %v824 = vor.u32 %v821, %v822
      %v825 = vsel %vm629, %v817, %v824
      %v826 = vrot.slane %v821, 4
      %v828 = vshrl.u32 %v602, 16
      %v830 = vrot.slane %v828, 7
      %v831 = vshll.u32 %v602, 16
      %v833 = vor.u32 %v830, %v831
      %v834 = vsel %vm629, %v826, %v833
      %v835 = vrot.slane %v830, 4
      %v837 = vshrl.u32 %v603, 16
      %v839 = vrot.slane %v837, 7
      %v840 = vshll.u32 %v603, 16
      %v842 = vor.u32 %v839, %v840
      %v843 = vsel %vm629, %v835, %v842
      %v844 = vrot.slane %v839, 4
      %v846 = vshrl.u32 %v604, 16
      %v848 = vrot.slane %v846, 7
      %v849 = vshll.u32 %v604, 16
      %v851 = vor.u32 %v848, %v849
      %v852 = vsel %vm629, %v844, %v851
      %v853 = vrot.slane %v848, 4
      %v855 = vshrl.u32 %v605, 16
      %v857 = vrot.slane %v855, 7
      %v858 = vshll.u32 %v605, 16
      %v860 = vor.u32 %v857, %v858
      %v861 = vsel %vm629, %v853, %v860
      %v862 = vrot.slane %v857, 4
      %v864 = vshrl.u32 %v606, 16
      %v866 = vrot.slane %v864, 7
      %v867 = vshll.u32 %v606, 16
      %v869 = vor.u32 %v866, %v867
      %v870 = vsel %vm629, %v862, %v869
      %v871 = vrot.slane %v866, 4
      %v873 = vshrl.u32 %v607, 16
      %v875 = vrot.slane %v873, 7
      %v876 = vshll.u32 %v607, 16
      %v878 = vor.u32 %v875, %v876
      %v879 = vsel %vm629, %v871, %v878
      %v880 = vrot.slane %v875, 4
      %v882 = vshrl.u32 %v608, 16
      %v884 = vrot.slane %v882, 7
      %v885 = vshll.u32 %v608, 16
      %v887 = vor.u32 %v884, %v885
      %v888 = vsel %vm629, %v880, %v887
      %v889 = vrot.slane %v884, 4
      %v891 = vshrl.u32 %v609, 16
      %v893 = vrot.slane %v891, 7
      %v894 = vshll.u32 %v609, 16
      %v896 = vor.u32 %v893, %v894
      %v897 = vsel %vm629, %v889, %v896
      %v898 = vrot.slane %v893, 4
      %v900 = vshrl.u32 %v610, 16
      %v902 = vrot.slane %v900, 7
      %v903 = vshll.u32 %v610, 16
      %v905 = vor.u32 %v902, %v903
      %v906 = vsel %vm629, %v898, %v905
      %v907 = vrot.slane %v902, 4
      %v909 = vshrl.u32 %v611, 16
      %v911 = vrot.slane %v909, 7
      %v912 = vshll.u32 %v611, 16
      %v914 = vor.u32 %v911, %v912
      %v915 = vsel %vm629, %v907, %v914
      %v916 = vrot.slane %v911, 4
      %v918 = vshrl.u32 %v612, 16
      %v920 = vrot.slane %v918, 7
      %v921 = vshll.u32 %v612, 16
      %v923 = vor.u32 %v920, %v921
      %v924 = vsel %vm629, %v916, %v923
      %v925 = vrot.slane %v920, 4
      %v927 = vshrl.u32 %v613, 16
      %v929 = vrot.slane %v927, 7
      %v930 = vshll.u32 %v613, 16
      %v932 = vor.u32 %v929, %v930
      %v933 = vsel %vm629, %v925, %v932
      %v934 = vrot.slane %v929, 4
      %v936 = vshrl.u32 %v614, 16
      %v938 = vrot.slane %v936, 7
      %v939 = vshll.u32 %v614, 16
      %v941 = vor.u32 %v938, %v939
      %v942 = vsel %vm629, %v934, %v941
      %v943 = vrot.slane %v938, 4
      %v945 = vshrl.u32 %v615, 16
      %v947 = vrot.slane %v945, 7
      %v948 = vshll.u32 %v615, 16
      %v950 = vor.u32 %v947, %v948
      %v951 = vsel %vm629, %v943, %v950
      %v952 = vrot.slane %v947, 4
      %v954 = vshrl.u32 %v616, 16
      %v956 = vrot.slane %v954, 7
      %v957 = vshll.u32 %v616, 16
      %v959 = vor.u32 %v956, %v957
      %v960 = vsel %vm629, %v952, %v959
      %v961 = vrot.slane %v956, 4
      %v963 = vshrl.u32 %v617, 16
      %v965 = vrot.slane %v963, 7
      %v966 = vshll.u32 %v617, 16
      %v968 = vor.u32 %v965, %v966
      %v969 = vsel %vm629, %v961, %v968
      %v970 = vrot.slane %v965, 4
      %v972 = vshrl.u32 %v618, 16
      %v974 = vrot.slane %v972, 7
      %v975 = vshll.u32 %v618, 16
      %v977 = vor.u32 %v974, %v975
      %v978 = vsel %vm629, %v970, %v977
      %v979 = vrot.slane %v974, 4
      %v981 = vshrl.u32 %v619, 16
      %v983 = vrot.slane %v981, 7
      %v984 = vshll.u32 %v619, 16
      %v986 = vor.u32 %v983, %v984
      %v987 = vsel %vm629, %v979, %v986
      %v988 = vrot.slane %v983, 4
      %v990 = vshrl.u32 %v620, 16
      %v992 = vrot.slane %v990, 7
      %v993 = vshll.u32 %v620, 16
      %v995 = vor.u32 %v992, %v993
      %v996 = vsel %vm629, %v988, %v995
      %v997 = vrot.slane %v992, 4
      %v999 = vshrl.u32 %v621, 16
      %v1001 = vrot.slane %v999, 7
      %v1002 = vshll.u32 %v621, 16
      %v1004 = vor.u32 %v1001, %v1002
      %v1005 = vsel %vm629, %v997, %v1004
      %v1006 = vrot.slane %v1001, 4
      %v1008 = vshrl.u32 %v622, 16
      %v1010 = vrot.slane %v1008, 7
      %v1011 = vshll.u32 %v622, 16
      %v1013 = vor.u32 %v1010, %v1011
      %v1014 = vsel %vm629, %v1006, %v1013
      %v1015 = vrot.slane %v1010, 4
      %v1017 = vshrl.u32 %v623, 16
      %v1019 = vrot.slane %v1017, 7
      %v1020 = vshll.u32 %v623, 16
      %v1022 = vor.u32 %v1019, %v1020
      %v1023 = vsel %vm629, %v1015, %v1022
      %v1024 = vrot.slane %v1019, 4
      %v1026 = vshrl.u32 %v624, 16
      %v1028 = vrot.slane %v1026, 7
      %v1029 = vshll.u32 %v624, 16
      %v1031 = vor.u32 %v1028, %v1029
      %v1032 = vsel %vm629, %v1024, %v1031
      %v1033 = vrot.slane %v1028, 4
      %v1035 = vshrl.u32 %v625, 16
      %v1037 = vrot.slane %v1035, 7
      %v1038 = vshll.u32 %v625, 16
      %v1040 = vor.u32 %v1037, %v1038
      %v1041 = vsel %vm629, %v1033, %v1040
      %v1042 = vrot.slane %v1037, 4
      %v1044 = vshrl.u32 %v626, 16
      %v1046 = vrot.slane %v1044, 7
      %v1047 = vshll.u32 %v626, 16
      %v1049 = vor.u32 %v1046, %v1047
      %v1050 = vsel %vm629, %v1042, %v1049
      %v1051 = vrot.slane %v1046, 4
      %v1053 = vshrl.u32 %v627, 16
      %v1055 = vrot.slane %v1053, 7
      %v1056 = vshll.u32 %v627, 16
      %v1058 = vor.u32 %v1055, %v1056
      %v1059 = vsel %vm629, %v1051, %v1058
      %v1060 = vrot.slane %v1055, 4
      %v1110 = vld [vmem:[#allocation2 + $0xc] sm:$0xf]
      %v1111 = vsel %vm573, %v636, %v1110
      %1112 = vst [vmem:[#allocation2 + $0xc] sm:$0xf] %v1111
      %1113 = vst [vmem:[#allocation2 + $0x10] sm:$0xf] %v645
      %1114 = vst [vmem:[#allocation2 + $0x14] sm:$0xf] %v654
      %1115 = vst [vmem:[#allocation2 + $0x18] sm:$0xf] %v663
      %1116 = vst [vmem:[#allocation2 + $0x1c] sm:$0xf] %v672
      %1117 = vst [vmem:[#allocation2 + $0x20] sm:$0xf] %v681
      %1118 = vst [vmem:[#allocation2 + $0x24] sm:$0xf] %v690
      %1119 = vst [vmem:[#allocation2 + $0x28] sm:$0xf] %v699
      %1120 = vst [vmem:[#allocation2 + $0x2c] sm:$0xf] %v708
      %1121 = vst [vmem:[#allocation2 + $0x30] sm:$0xf] %v717
      %1122 = vst [vmem:[#allocation2 + $0x34] sm:$0xf] %v726
      %1123 = vst [vmem:[#allocation2 + $0x38] sm:$0xf] %v735
      %1124 = vst [vmem:[#allocation2 + $0x3c] sm:$0xf] %v744
      %1125 = vst [vmem:[#allocation2 + $0x40] sm:$0xf] %v753
      %1126 = vst [vmem:[#allocation2 + $0x44] sm:$0xf] %v762
      %1127 = vst [vmem:[#allocation2 + $0x48] sm:$0xf] %v771
      %1128 = vst [vmem:[#allocation2 + $0x4c] sm:$0xf] %v780
      %1129 = vst [vmem:[#allocation2 + $0x50] sm:$0xf] %v789
      %1130 = vst [vmem:[#allocation2 + $0x54] sm:$0xf] %v798
      %1131 = vst [vmem:[#allocation2 + $0x58] sm:$0xf] %v807
      %1132 = vst [vmem:[#allocation2 + $0x5c] sm:$0xf] %v816
      %1133 = vst [vmem:[#allocation2 + $0x60] sm:$0xf] %v825
      %1134 = vst [vmem:[#allocation2 + $0x64] sm:$0xf] %v834
      %1135 = vst [vmem:[#allocation2 + $0x68] sm:$0xf] %v843
      %1136 = vst [vmem:[#allocation2 + $0x6c] sm:$0xf] %v852
      %1137 = vst [vmem:[#allocation2 + $0x70] sm:$0xf] %v861
      %1138 = vst [vmem:[#allocation2 + $0x74] sm:$0xf] %v870
      %1139 = vst [vmem:[#allocation2 + $0x78] sm:$0xf] %v879
      %1140 = vst [vmem:[#allocation2 + $0x7c] sm:$0xf] %v888
      %1141 = vst [vmem:[#allocation2 + $0x80] sm:$0xf] %v897
      %1142 = vst [vmem:[#allocation2 + $0x84] sm:$0xf] %v906
      %1143 = vst [vmem:[#allocation2 + $0x88] sm:$0xf] %v915
      %1144 = vst [vmem:[#allocation2 + $0x8c] sm:$0xf] %v924
      %1145 = vst [vmem:[#allocation2 + $0x90] sm:$0xf] %v933
      %1146 = vst [vmem:[#allocation2 + $0x94] sm:$0xf] %v942
      %1147 = vst [vmem:[#allocation2 + $0x98] sm:$0xf] %v951
      %1148 = vst [vmem:[#allocation2 + $0x9c] sm:$0xf] %v960
      %1149 = vst [vmem:[#allocation2 + $0xa0] sm:$0xf] %v969
      %1150 = vst [vmem:[#allocation2 + $0xa4] sm:$0xf] %v978
      %1151 = vst [vmem:[#allocation2 + $0xa8] sm:$0xf] %v987
      %1152 = vst [vmem:[#allocation2 + $0xac] sm:$0xf] %v996
      %1153 = vst [vmem:[#allocation2 + $0xb0] sm:$0xf] %v1005
      %1154 = vst [vmem:[#allocation2 + $0xb4] sm:$0xf] %v1014
      %1155 = vst [vmem:[#allocation2 + $0xb8] sm:$0xf] %v1023
      %1156 = vst [vmem:[#allocation2 + $0xbc] sm:$0xf] %v1032
      %1157 = vst [vmem:[#allocation2 + $0xc0] sm:$0xf] %v1041
      %1158 = vst [vmem:[#allocation2 + $0xc4] sm:$0xf] %v1050
      %1159 = vst [vmem:[#allocation2 + $0xc8] sm:$0xf] %v1059
      %v1160 = vld [vmem:[#allocation2 + $0xcc] sm:$0x1]
      %v1161 = vsel %vm567, %v1060, %v1160
      %1162 = vst [vmem:[#allocation2 + $0xcc] sm:$0x1] %v1161
      %v1163 = vld [vmem:[#allocation2] sm:$0xf]
      %v1164 = vld [vmem:[#allocation2 + $0x4] sm:$0xf]
      %v1165 = vld [vmem:[#allocation2 + $0x8] sm:$0xf]
      %v1166 = vld [vmem:[#allocation2 + $0xc] sm:$0xf]
      %v1167 = vld [vmem:[#allocation2 + $0x10] sm:$0xf]
      %v1168 = vld [vmem:[#allocation2 + $0x14] sm:$0xf]
      %v1169 = vld [vmem:[#allocation2 + $0x18] sm:$0xf]
      %v1170 = vld [vmem:[#allocation2 + $0x1c] sm:$0xf]
      %v1171 = vld [vmem:[#allocation2 + $0x20] sm:$0xf]
      %v1172 = vld [vmem:[#allocation2 + $0x24] sm:$0xf]
      %v1173 = vld [vmem:[#allocation2 + $0x28] sm:$0xf]
      %v1174 = vld [vmem:[#allocation2 + $0x2c] sm:$0xf]
      %v1175 = vld [vmem:[#allocation2 + $0x30] sm:$0xf]
      %v1176 = vld [vmem:[#allocation2 + $0x34] sm:$0xf]
      %v1177 = vld [vmem:[#allocation2 + $0x38] sm:$0xf]
      %v1178 = vld [vmem:[#allocation2 + $0x3c] sm:$0xf]
      %v1179 = vld [vmem:[#allocation2 + $0x40] sm:$0xf]
      %v1180 = vld [vmem:[#allocation2 + $0x44] sm:$0xf]
      %v1181 = vld [vmem:[#allocation2 + $0x48] sm:$0xf]
      %v1182 = vld [vmem:[#allocation2 + $0x4c] sm:$0xf]
      %v1183 = vld [vmem:[#allocation2 + $0x50] sm:$0xf]
      %v1184 = vld [vmem:[#allocation2 + $0x54] sm:$0xf]
      %v1185 = vld [vmem:[#allocation2 + $0x58] sm:$0xf]
      %v1186 = vld [vmem:[#allocation2 + $0x5c] sm:$0xf]
      %v1187 = vld [vmem:[#allocation2 + $0x60] sm:$0xf]
      %v1188 = vld [vmem:[#allocation2 + $0x64] sm:$0xf]
      %v1189 = vld [vmem:[#allocation2 + $0x68] sm:$0xf]
      %v1190 = vld [vmem:[#allocation2 + $0x6c] sm:$0xf]
      %v1191 = vld [vmem:[#allocation2 + $0x70] sm:$0xf]
      %v1192 = vld [vmem:[#allocation2 + $0x74] sm:$0xf]
      %v1193 = vld [vmem:[#allocation2 + $0x78] sm:$0xf]
      %v1194 = vld [vmem:[#allocation2 + $0x7c] sm:$0xf]
      %v1195 = vld [vmem:[#allocation2 + $0x80] sm:$0xf]
      %v1196 = vld [vmem:[#allocation2 + $0x84] sm:$0xf]
      %v1197 = vld [vmem:[#allocation2 + $0x88] sm:$0xf]
      %v1198 = vld [vmem:[#allocation2 + $0x8c] sm:$0xf]
      %v1199 = vld [vmem:[#allocation2 + $0x90] sm:$0xf]
      %v1200 = vld [vmem:[#allocation2 + $0x94] sm:$0xf]
      %v1201 = vld [vmem:[#allocation2 + $0x98] sm:$0xf]
      %v1202 = vld [vmem:[#allocation2 + $0x9c] sm:$0xf]
      %v1203 = vld [vmem:[#allocation2 + $0xa0] sm:$0xf]
      %v1204 = vld [vmem:[#allocation2 + $0xa4] sm:$0xf]
      %v1205 = vld [vmem:[#allocation2 + $0xa8] sm:$0xf]
      %v1206 = vld [vmem:[#allocation2 + $0xac] sm:$0xf]
      %v1207 = vld [vmem:[#allocation2 + $0xb0] sm:$0xf]
      %v1208 = vld [vmem:[#allocation2 + $0xb4] sm:$0xf]
      %v1209 = vld [vmem:[#allocation2 + $0xb8] sm:$0xf]
      %v1210 = vld [vmem:[#allocation2 + $0xbc] sm:$0xf]
      %v1211 = vld [vmem:[#allocation2 + $0xc0] sm:$0x1]
      %v1212 = vld [vmem:[#allocation2] sm:$0xe]
      %v1213 = vld [vmem:[#allocation2 + $0xc0] sm:$0xf]
      %v1214 = vld [vmem:[#allocation2 + $0xc4] sm:$0xf]
      %v1215 = vld [vmem:[#allocation2 + $0xc8] sm:$0xf]
      %v1216 = vld [vmem:[#allocation2 + $0xcc] sm:$0x1]
      %v1217 = vld [vmem:[#allocation2 + $0xc] sm:$0xe]
      %v1218 = vld [vmem:[#allocation2 + $0xcc] sm:$0xf]
      %v1219 = vld [vmem:[#allocation2 + $0xd0] sm:$0xf]
      %v1220 = vld [vmem:[#allocation2 + $0xd4] sm:$0xf]
      %v1221 = vld [vmem:[#allocation2 + $0x18] sm:$0xf]
      %v1222 = vld [vmem:[#allocation2 + $0x1c] sm:$0xf]
      %v1223 = vld [vmem:[#allocation2 + $0x20] sm:$0xf]
      %v1224 = vld [vmem:[#allocation2 + $0x24] sm:$0xf]
      %v1225 = vld [vmem:[#allocation2 + $0x28] sm:$0xf]
      %v1226 = vld [vmem:[#allocation2 + $0x2c] sm:$0xf]
      %v1227 = vld [vmem:[#allocation2 + $0x30] sm:$0xf]
      %v1228 = vld [vmem:[#allocation2 + $0x34] sm:$0xf]
      %v1229 = vld [vmem:[#allocation2 + $0x38] sm:$0xf]
      %v1230 = vld [vmem:[#allocation2 + $0x3c] sm:$0xf]
      %v1231 = vld [vmem:[#allocation2 + $0x40] sm:$0xf]
      %v1232 = vld [vmem:[#allocation2 + $0x44] sm:$0xf]
      %v1233 = vld [vmem:[#allocation2 + $0x48] sm:$0xf]
      %v1234 = vld [vmem:[#allocation2 + $0x4c] sm:$0xf]
      %v1235 = vld [vmem:[#allocation2 + $0x50] sm:$0xf]
      %v1236 = vld [vmem:[#allocation2 + $0x54] sm:$0xf]
      %v1237 = vld [vmem:[#allocation2 + $0x58] sm:$0xf]
      %v1238 = vld [vmem:[#allocation2 + $0x5c] sm:$0xf]
      %v1239 = vld [vmem:[#allocation2 + $0x60] sm:$0xf]
      %v1240 = vld [vmem:[#allocation2 + $0x64] sm:$0xf]
      %v1241 = vld [vmem:[#allocation2 + $0x68] sm:$0xf]
      %v1242 = vld [vmem:[#allocation2 + $0x6c] sm:$0xf]
      %v1243 = vld [vmem:[#allocation2 + $0x70] sm:$0xf]
      %v1244 = vld [vmem:[#allocation2 + $0x74] sm:$0xf]
      %v1245 = vld [vmem:[#allocation2 + $0x78] sm:$0xf]
      %v1246 = vld [vmem:[#allocation2 + $0x7c] sm:$0xf]
      %v1247 = vld [vmem:[#allocation2 + $0x80] sm:$0xf]
      %v1248 = vld [vmem:[#allocation2 + $0x84] sm:$0xf]
      %v1249 = vld [vmem:[#allocation2 + $0x88] sm:$0xf]
      %v1250 = vld [vmem:[#allocation2 + $0x8c] sm:$0xf]
      %v1251 = vld [vmem:[#allocation2 + $0x90] sm:$0xf]
      %v1252 = vld [vmem:[#allocation2 + $0x94] sm:$0xf]
      %v1253 = vld [vmem:[#allocation2 + $0x98] sm:$0xf]
      %v1254 = vld [vmem:[#allocation2 + $0x9c] sm:$0xf]
      %v1255 = vld [vmem:[#allocation2 + $0xa0] sm:$0xf]
      %v1256 = vld [vmem:[#allocation2 + $0xa4] sm:$0xf]
      %v1257 = vld [vmem:[#allocation2 + $0xa8] sm:$0xf]
      %v1258 = vld [vmem:[#allocation2 + $0xac] sm:$0xf]
      %v1259 = vld [vmem:[#allocation2 + $0xb0] sm:$0xf]
      %v1260 = vld [vmem:[#allocation2 + $0xb4] sm:$0xf]
      %v1261 = vld [vmem:[#allocation2 + $0xb8] sm:$0xf]
      %v1262 = vld [vmem:[#allocation2 + $0xbc] sm:$0xf]
      %v1263 = vld [vmem:[#allocation2 + $0xc0] sm:$0xf]
      %v1264 = vld [vmem:[#allocation2 + $0xc4] sm:$0xf]
      %v1265 = vld [vmem:[#allocation2 + $0xc8] sm:$0xf]
      %v1266 = vld [vmem:[#allocation2 + $0xcc] sm:$0xf]
      %v1267 = vld [vmem:[#allocation2 + $0xd0] sm:$0xf]
      %v1268 = vld [vmem:[#allocation2 + $0xd4] sm:$0xf]
      %v1269 = vld [vmem:[#allocation2 + $0xd8] sm:$0x1]
      %v1270 = vld [vmem:[#allocation2 + $0x18] sm:$0xe]
      %v1319 = vunpack.c.l.b16 %v1163
      %v1320 = vunpack.c.l.b16 %v1164
      %v1321 = vunpack.c.l.b16 %v1165
      %v1322 = vunpack.c.l.b16 %v1166
      %v1323 = vunpack.c.l.b16 %v1167
      %v1324 = vunpack.c.l.b16 %v1168
      %v1325 = vunpack.c.l.b16 %v1169
      %v1326 = vunpack.c.l.b16 %v1170
      %v1327 = vunpack.c.l.b16 %v1171
      %v1328 = vunpack.c.l.b16 %v1172
      %v1329 = vunpack.c.l.b16 %v1173
      %v1330 = vunpack.c.l.b16 %v1174
      %v1331 = vunpack.c.l.b16 %v1175
      %v1332 = vunpack.c.l.b16 %v1176
      %v1333 = vunpack.c.l.b16 %v1177
      %v1334 = vunpack.c.l.b16 %v1178
      %v1335 = vunpack.c.l.b16 %v1179
      %v1336 = vunpack.c.l.b16 %v1180
      %v1337 = vunpack.c.l.b16 %v1181
      %v1338 = vunpack.c.l.b16 %v1182
      %v1339 = vunpack.c.l.b16 %v1183
      %v1340 = vunpack.c.l.b16 %v1184
      %v1341 = vunpack.c.l.b16 %v1185
      %v1342 = vunpack.c.l.b16 %v1186
      %v1343 = vunpack.c.l.b16 %v1187
      %v1344 = vunpack.c.l.b16 %v1188
      %v1345 = vunpack.c.l.b16 %v1189
      %v1346 = vunpack.c.l.b16 %v1190
      %v1347 = vunpack.c.l.b16 %v1191
      %v1348 = vunpack.c.l.b16 %v1192
      %v1349 = vunpack.c.l.b16 %v1193
      %v1350 = vunpack.c.l.b16 %v1194
      %v1351 = vunpack.c.l.b16 %v1195
      %v1352 = vunpack.c.l.b16 %v1196
      %v1353 = vunpack.c.l.b16 %v1197
      %v1354 = vunpack.c.l.b16 %v1198
      %v1355 = vunpack.c.l.b16 %v1199
      %v1356 = vunpack.c.l.b16 %v1200
      %v1357 = vunpack.c.l.b16 %v1201
      %v1358 = vunpack.c.l.b16 %v1202
      %v1359 = vunpack.c.l.b16 %v1203
      %v1360 = vunpack.c.l.b16 %v1204
      %v1361 = vunpack.c.l.b16 %v1205
      %v1362 = vunpack.c.l.b16 %v1206
      %v1363 = vunpack.c.l.b16 %v1207
      %v1364 = vunpack.c.l.b16 %v1208
      %v1365 = vunpack.c.l.b16 %v1209
      %v1366 = vunpack.c.l.b16 %v1210
      %v1367 = vpack.c.b16 %v1320, %v1319
      %v1368 = vpack.c.b16 %v1322, %v1321
      %v1369 = vpack.c.b16 %v1324, %v1323
      %v1370 = vpack.c.b16 %v1326, %v1325
      %v1371 = vpack.c.b16 %v1328, %v1327
      %v1372 = vpack.c.b16 %v1330, %v1329
      %v1373 = vpack.c.b16 %v1332, %v1331
      %v1374 = vpack.c.b16 %v1334, %v1333
      %v1375 = vpack.c.b16 %v1336, %v1335
      %v1376 = vpack.c.b16 %v1338, %v1337
      %v1377 = vpack.c.b16 %v1340, %v1339
      %v1378 = vpack.c.b16 %v1342, %v1341
      %v1379 = vpack.c.b16 %v1344, %v1343
      %v1380 = vpack.c.b16 %v1346, %v1345
      %v1381 = vpack.c.b16 %v1348, %v1347
      %v1382 = vpack.c.b16 %v1350, %v1349
      %v1383 = vpack.c.b16 %v1352, %v1351
      %v1384 = vpack.c.b16 %v1354, %v1353
      %v1385 = vpack.c.b16 %v1356, %v1355
      %v1386 = vpack.c.b16 %v1358, %v1357
      %v1387 = vpack.c.b16 %v1360, %v1359
      %v1388 = vpack.c.b16 %v1362, %v1361
      %v1389 = vpack.c.b16 %v1364, %v1363
      %v1390 = vpack.c.b16 %v1366, %v1365
      %v1416 = vunpack.c.l.b16 %v1211
      %v1417 = vpack.c.b16 %v1416, %v1416
      %vm1418 = vsmask.f32 7424
      %v1420 = vshrl.u32 %v1367, 16
      %v1422 = vshll.u32 %v1367, 16
      %v1424 = vrot.slane %v1422, 1
      %v1425 = vor.u32 %v1420, %v1424
      %v1427 = vshll.u32 %v1368, 16
      %v1429 = vrot.slane %v1427, 1
      %v1430 = vsel %vm1418, %v1425, %v1429
      %v1431 = vshrl.u32 %v1368, 16
      %v1433 = vor.u32 %v1431, %v1429
      %v1435 = vshll.u32 %v1369, 16
      %v1437 = vrot.slane %v1435, 1
      %v1438 = vsel %vm1418, %v1433, %v1437
      %v1439 = vshrl.u32 %v1369, 16
      %v1441 = vor.u32 %v1439, %v1437
      %v1443 = vshll.u32 %v1370, 16
      %v1445 = vrot.slane %v1443, 1
      %v1446 = vsel %vm1418, %v1441, %v1445
      %v1447 = vshrl.u32 %v1370, 16
      %v1449 = vor.u32 %v1447, %v1445
      %v1451 = vshll.u32 %v1371, 16
      %v1453 = vrot.slane %v1451, 1
      %v1454 = vsel %vm1418, %v1449, %v1453
      %v1455 = vshrl.u32 %v1371, 16
      %v1457 = vor.u32 %v1455, %v1453
      %v1459 = vshll.u32 %v1372, 16
      %v1461 = vrot.slane %v1459, 1
      %v1462 = vsel %vm1418, %v1457, %v1461
      %v1463 = vshrl.u32 %v1372, 16
      %v1465 = vor.u32 %v1463, %v1461
      %v1467 = vshll.u32 %v1373, 16
      %v1469 = vrot.slane %v1467, 1
      %v1470 = vsel %vm1418, %v1465, %v1469
      %v1471 = vshrl.u32 %v1373, 16
      %v1473 = vor.u32 %v1471, %v1469
      %v1475 = vshll.u32 %v1374, 16
      %v1477 = vrot.slane %v1475, 1
      %v1478 = vsel %vm1418, %v1473, %v1477
      %v1479 = vshrl.u32 %v1374, 16
      %v1481 = vor.u32 %v1479, %v1477
      %v1483 = vshll.u32 %v1375, 16
      %v1485 = vrot.slane %v1483, 1
      %v1486 = vsel %vm1418, %v1481, %v1485
      %v1487 = vshrl.u32 %v1375, 16
      %v1489 = vor.u32 %v1487, %v1485
      %v1491 = vshll.u32 %v1376, 16
      %v1493 = vrot.slane %v1491, 1
      %v1494 = vsel %vm1418, %v1489, %v1493
      %v1495 = vshrl.u32 %v1376, 16
      %v1497 = vor.u32 %v1495, %v1493
      %v1499 = vshll.u32 %v1377, 16
      %v1501 = vrot.slane %v1499, 1
      %v1502 = vsel %vm1418, %v1497, %v1501
      %v1503 = vshrl.u32 %v1377, 16
      %v1505 = vor.u32 %v1503, %v1501
      %v1507 = vshll.u32 %v1378, 16
      %v1509 = vrot.slane %v1507, 1
      %v1510 = vsel %vm1418, %v1505, %v1509
      %v1511 = vshrl.u32 %v1378, 16
      %v1513 = vor.u32 %v1511, %v1509
      %v1515 = vshll.u32 %v1379, 16
      %v1517 = vrot.slane %v1515, 1
      %v1518 = vsel %vm1418, %v1513, %v1517
      %v1519 = vshrl.u32 %v1379, 16
      %v1521 = vor.u32 %v1519, %v1517
      %v1523 = vshll.u32 %v1380, 16
      %v1525 = vrot.slane %v1523, 1
      %v1526 = vsel %vm1418, %v1521, %v1525
      %v1527 = vshrl.u32 %v1380, 16
      %v1529 = vor.u32 %v1527, %v1525
      %v1531 = vshll.u32 %v1381, 16
      %v1533 = vrot.slane %v1531, 1
      %v1534 = vsel %vm1418, %v1529, %v1533
      %v1535 = vshrl.u32 %v1381, 16
      %v1537 = vor.u32 %v1535, %v1533
      %v1539 = vshll.u32 %v1382, 16
      %v1541 = vrot.slane %v1539, 1
      %v1542 = vsel %vm1418, %v1537, %v1541
      %v1543 = vshrl.u32 %v1382, 16
      %v1545 = vor.u32 %v1543, %v1541
      %v1547 = vshll.u32 %v1383, 16
      %v1549 = vrot.slane %v1547, 1
      %v1550 = vsel %vm1418, %v1545, %v1549
      %v1551 = vshrl.u32 %v1383, 16
      %v1553 = vor.u32 %v1551, %v1549
      %v1555 = vshll.u32 %v1384, 16
      %v1557 = vrot.slane %v1555, 1
      %v1558 = vsel %vm1418, %v1553, %v1557
      %v1559 = vshrl.u32 %v1384, 16
      %v1561 = vor.u32 %v1559, %v1557
      %v1563 = vshll.u32 %v1385, 16
      %v1565 = vrot.slane %v1563, 1
      %v1566 = vsel %vm1418, %v1561, %v1565
      %v1567 = vshrl.u32 %v1385, 16
      %v1569 = vor.u32 %v1567, %v1565
      %v1571 = vshll.u32 %v1386, 16
      %v1573 = vrot.slane %v1571, 1
      %v1574 = vsel %vm1418, %v1569, %v1573
      %v1575 = vshrl.u32 %v1386, 16
      %v1577 = vor.u32 %v1575, %v1573
      %v1579 = vshll.u32 %v1387, 16
      %v1581 = vrot.slane %v1579, 1
      %v1582 = vsel %vm1418, %v1577, %v1581
      %v1583 = vshrl.u32 %v1387, 16
      %v1585 = vor.u32 %v1583, %v1581
      %v1587 = vshll.u32 %v1388, 16
      %v1589 = vrot.slane %v1587, 1
      %v1590 = vsel %vm1418, %v1585, %v1589
      %v1591 = vshrl.u32 %v1388, 16
      %v1593 = vor.u32 %v1591, %v1589
      %v1595 = vshll.u32 %v1389, 16
      %v1597 = vrot.slane %v1595, 1
      %v1598 = vsel %vm1418, %v1593, %v1597
      %v1599 = vshrl.u32 %v1389, 16
      %v1601 = vor.u32 %v1599, %v1597
      %v1603 = vshll.u32 %v1390, 16
      %v1605 = vrot.slane %v1603, 1
      %v1606 = vsel %vm1418, %v1601, %v1605
      %v1607 = vshrl.u32 %v1390, 16
      %v1609 = vor.u32 %v1607, %v1605
      %v1611 = vshll.u32 %v1417, 16
      %v1613 = vrot.slane %v1611, 1
      %v1614 = vsel %vm1418, %v1609, %v1613
      %v1640 = vunpack.c.l.b16 %v1212
      %v1641 = vpack.c.b16 %v1320, %v1640
      %vm1642 = vcmask 1046528
      %v1643 = vrot.slane %v1641, 1
      %v1644 = vrot.slane %v1368, 1
      %v1645 = vsel %vm1642, %v1643, %v1644
      %v1646 = vrot.slane %v1369, 1
      %v1647 = vsel %vm1642, %v1644, %v1646
      %v1648 = vrot.slane %v1370, 1
      %v1649 = vsel %vm1642, %v1646, %v1648
      %v1650 = vrot.slane %v1371, 1
      %v1651 = vsel %vm1642, %v1648, %v1650
      %v1652 = vrot.slane %v1372, 1
      %v1653 = vsel %vm1642, %v1650, %v1652
      %v1654 = vrot.slane %v1373, 1
      %v1655 = vsel %vm1642, %v1652, %v1654
      %v1656 = vrot.slane %v1374, 1
      %v1657 = vsel %vm1642, %v1654, %v1656
      %v1658 = vrot.slane %v1375, 1
      %v1659 = vsel %vm1642, %v1656, %v1658
      %v1660 = vrot.slane %v1376, 1
      %v1661 = vsel %vm1642, %v1658, %v1660
      %v1662 = vrot.slane %v1377, 1
      %v1663 = vsel %vm1642, %v1660, %v1662
      %v1664 = vrot.slane %v1378, 1
      %v1665 = vsel %vm1642, %v1662, %v1664
      %v1666 = vrot.slane %v1379, 1
      %v1667 = vsel %vm1642, %v1664, %v1666
      %v1668 = vrot.slane %v1380, 1
      %v1669 = vsel %vm1642, %v1666, %v1668
      %v1670 = vrot.slane %v1381, 1
      %v1671 = vsel %vm1642, %v1668, %v1670
      %v1672 = vrot.slane %v1382, 1
      %v1673 = vsel %vm1642, %v1670, %v1672
      %v1674 = vrot.slane %v1383, 1
      %v1675 = vsel %vm1642, %v1672, %v1674
      %v1676 = vrot.slane %v1384, 1
      %v1677 = vsel %vm1642, %v1674, %v1676
      %v1678 = vrot.slane %v1385, 1
      %v1679 = vsel %vm1642, %v1676, %v1678
      %v1680 = vrot.slane %v1386, 1
      %v1681 = vsel %vm1642, %v1678, %v1680
      %v1682 = vrot.slane %v1387, 1
      %v1683 = vsel %vm1642, %v1680, %v1682
      %v1684 = vrot.slane %v1388, 1
      %v1685 = vsel %vm1642, %v1682, %v1684
      %v1686 = vrot.slane %v1389, 1
      %v1687 = vsel %vm1642, %v1684, %v1686
      %v1688 = vrot.slane %v1390, 1
      %v1689 = vsel %vm1642, %v1686, %v1688
      %v1690 = vrot.slane %v1417, 1
      %v1691 = vsel %vm1642, %v1688, %v1690
      %v1719 = vunpack.c.l.b16 %v1213
      %v1720 = vunpack.c.l.b16 %v1214
      %v1721 = vunpack.c.l.b16 %v1215
      %v1722 = vpack.c.b16 %v1323, %v1322
      %v1723 = vpack.c.b16 %v1325, %v1324
      %v1724 = vpack.c.b16 %v1327, %v1326
      %v1725 = vpack.c.b16 %v1329, %v1328
      %v1726 = vpack.c.b16 %v1331, %v1330
      %v1727 = vpack.c.b16 %v1333, %v1332
      %v1728 = vpack.c.b16 %v1335, %v1334
      %v1729 = vpack.c.b16 %v1337, %v1336
      %v1730 = vpack.c.b16 %v1339, %v1338
      %v1731 = vpack.c.b16 %v1341, %v1340
      %v1732 = vpack.c.b16 %v1343, %v1342
      %v1733 = vpack.c.b16 %v1345, %v1344
      %v1734 = vpack.c.b16 %v1347, %v1346
      %v1735 = vpack.c.b16 %v1349, %v1348
      %v1736 = vpack.c.b16 %v1351, %v1350
      %v1737 = vpack.c.b16 %v1353, %v1352
      %v1738 = vpack.c.b16 %v1355, %v1354
      %v1739 = vpack.c.b16 %v1357, %v1356
      %v1740 = vpack.c.b16 %v1359, %v1358
      %v1741 = vpack.c.b16 %v1361, %v1360
      %v1742 = vpack.c.b16 %v1363, %v1362
      %v1743 = vpack.c.b16 %v1365, %v1364
      %v1744 = vpack.c.b16 %v1719, %v1366
      %v1745 = vpack.c.b16 %v1721, %v1720
      %v1771 = vunpack.c.l.b16 %v1216
      %v1772 = vpack.c.b16 %v1771, %v1771
      %v1774 = vshrl.u32 %v1722, 16
      %v1776 = vshll.u32 %v1722, 16
      %v1778 = vrot.slane %v1776, 1
      %v1779 = vor.u32 %v1774, %v1778
      %v1781 = vshll.u32 %v1723, 16
      %v1783 = vrot.slane %v1781, 1
      %v1784 = vsel %vm1418, %v1779, %v1783
      %v1785 = vshrl.u32 %v1723, 16
      %v1787 = vor.u32 %v1785, %v1783
      %v1789 = vshll.u32 %v1724, 16
      %v1791 = vrot.slane %v1789, 1
      %v1792 = vsel %vm1418, %v1787, %v1791
      %v1793 = vshrl.u32 %v1724, 16
      %v1795 = vor.u32 %v1793, %v1791
      %v1797 = vshll.u32 %v1725, 16
      %v1799 = vrot.slane %v1797, 1
      %v1800 = vsel %vm1418, %v1795, %v1799
      %v1801 = vshrl.u32 %v1725, 16
      %v1803 = vor.u32 %v1801, %v1799
      %v1805 = vshll.u32 %v1726, 16
      %v1807 = vrot.slane %v1805, 1
      %v1808 = vsel %vm1418, %v1803, %v1807
      %v1809 = vshrl.u32 %v1726, 16
      %v1811 = vor.u32 %v1809, %v1807
      %v1813 = vshll.u32 %v1727, 16
      %v1815 = vrot.slane %v1813, 1
      %v1816 = vsel %vm1418, %v1811, %v1815
      %v1817 = vshrl.u32 %v1727, 16
      %v1819 = vor.u32 %v1817, %v1815
      %v1821 = vshll.u32 %v1728, 16
      %v1823 = vrot.slane %v1821, 1
      %v1824 = vsel %vm1418, %v1819, %v1823
      %v1825 = vshrl.u32 %v1728, 16
      %v1827 = vor.u32 %v1825, %v1823
      %v1829 = vshll.u32 %v1729, 16
      %v1831 = vrot.slane %v1829, 1
      %v1832 = vsel %vm1418, %v1827, %v1831
      %v1833 = vshrl.u32 %v1729, 16
      %v1835 = vor.u32 %v1833, %v1831
      %v1837 = vshll.u32 %v1730, 16
      %v1839 = vrot.slane %v1837, 1
      %v1840 = vsel %vm1418, %v1835, %v1839
      %v1841 = vshrl.u32 %v1730, 16
      %v1843 = vor.u32 %v1841, %v1839
      %v1845 = vshll.u32 %v1731, 16
      %v1847 = vrot.slane %v1845, 1
      %v1848 = vsel %vm1418, %v1843, %v1847
      %v1849 = vshrl.u32 %v1731, 16
      %v1851 = vor.u32 %v1849, %v1847
      %v1853 = vshll.u32 %v1732, 16
      %v1855 = vrot.slane %v1853, 1
      %v1856 = vsel %vm1418, %v1851, %v1855
      %v1857 = vshrl.u32 %v1732, 16
      %v1859 = vor.u32 %v1857, %v1855
      %v1861 = vshll.u32 %v1733, 16
      %v1863 = vrot.slane %v1861, 1
      %v1864 = vsel %vm1418, %v1859, %v1863
      %v1865 = vshrl.u32 %v1733, 16
      %v1867 = vor.u32 %v1865, %v1863
      %v1869 = vshll.u32 %v1734, 16
      %v1871 = vrot.slane %v1869, 1
      %v1872 = vsel %vm1418, %v1867, %v1871
      %v1873 = vshrl.u32 %v1734, 16
      %v1875 = vor.u32 %v1873, %v1871
      %v1877 = vshll.u32 %v1735, 16
      %v1879 = vrot.slane %v1877, 1
      %v1880 = vsel %vm1418, %v1875, %v1879
      %v1881 = vshrl.u32 %v1735, 16
      %v1883 = vor.u32 %v1881, %v1879
      %v1885 = vshll.u32 %v1736, 16
      %v1887 = vrot.slane %v1885, 1
      %v1888 = vsel %vm1418, %v1883, %v1887
      %v1889 = vshrl.u32 %v1736, 16
      %v1891 = vor.u32 %v1889, %v1887
      %v1893 = vshll.u32 %v1737, 16
      %v1895 = vrot.slane %v1893, 1
      %v1896 = vsel %vm1418, %v1891, %v1895
      %v1897 = vshrl.u32 %v1737, 16
      %v1899 = vor.u32 %v1897, %v1895
      %v1901 = vshll.u32 %v1738, 16
      %v1903 = vrot.slane %v1901, 1
      %v1904 = vsel %vm1418, %v1899, %v1903
      %v1905 = vshrl.u32 %v1738, 16
      %v1907 = vor.u32 %v1905, %v1903
      %v1909 = vshll.u32 %v1739, 16
      %v1911 = vrot.slane %v1909, 1
      %v1912 = vsel %vm1418, %v1907, %v1911
      %v1913 = vshrl.u32 %v1739, 16
      %v1915 = vor.u32 %v1913, %v1911
      %v1917 = vshll.u32 %v1740, 16
      %v1919 = vrot.slane %v1917, 1
      %v1920 = vsel %vm1418, %v1915, %v1919
      %v1921 = vshrl.u32 %v1740, 16
      %v1923 = vor.u32 %v1921, %v1919
      %v1925 = vshll.u32 %v1741, 16
      %v1927 = vrot.slane %v1925, 1
      %v1928 = vsel %vm1418, %v1923, %v1927
      %v1929 = vshrl.u32 %v1741, 16
      %v1931 = vor.u32 %v1929, %v1927
      %v1933 = vshll.u32 %v1742, 16
      %v1935 = vrot.slane %v1933, 1
      %v1936 = vsel %vm1418, %v1931, %v1935
      %v1937 = vshrl.u32 %v1742, 16
      %v1939 = vor.u32 %v1937, %v1935
      %v1941 = vshll.u32 %v1743, 16
      %v1943 = vrot.slane %v1941, 1
      %v1944 = vsel %vm1418, %v1939, %v1943
      %v1945 = vshrl.u32 %v1743, 16
      %v1947 = vor.u32 %v1945, %v1943
      %v1949 = vshll.u32 %v1744, 16
      %v1951 = vrot.slane %v1949, 1
      %v1952 = vsel %vm1418, %v1947, %v1951
      %v1953 = vshrl.u32 %v1744, 16
      %v1955 = vor.u32 %v1953, %v1951
      %v1957 = vshll.u32 %v1745, 16
      %v1959 = vrot.slane %v1957, 1
      %v1960 = vsel %vm1418, %v1955, %v1959
      %v1961 = vshrl.u32 %v1745, 16
      %v1963 = vor.u32 %v1961, %v1959
      %v1965 = vshll.u32 %v1772, 16
      %v1967 = vrot.slane %v1965, 1
      %v1968 = vsel %vm1418, %v1963, %v1967
      %v1994 = vunpack.c.l.b16 %v1217
      %v1995 = vpack.c.b16 %v1323, %v1994
      %v1996 = vrot.slane %v1995, 1
      %v1997 = vrot.slane %v1723, 1
      %v1998 = vsel %vm1642, %v1996, %v1997
      %v1999 = vrot.slane %v1724, 1
      %v2000 = vsel %vm1642, %v1997, %v1999
      %v2001 = vrot.slane %v1725, 1
      %v2002 = vsel %vm1642, %v1999, %v2001
      %v2003 = vrot.slane %v1726, 1
      %v2004 = vsel %vm1642, %v2001, %v2003
      %v2005 = vrot.slane %v1727, 1
      %v2006 = vsel %vm1642, %v2003, %v2005
      %v2007 = vrot.slane %v1728, 1
      %v2008 = vsel %vm1642, %v2005, %v2007
      %v2009 = vrot.slane %v1729, 1
      %v2010 = vsel %vm1642, %v2007, %v2009
      %v2011 = vrot.slane %v1730, 1
      %v2012 = vsel %vm1642, %v2009, %v2011
      %v2013 = vrot.slane %v1731, 1
      %v2014 = vsel %vm1642, %v2011, %v2013
      %v2015 = vrot.slane %v1732, 1
      %v2016 = vsel %vm1642, %v2013, %v2015
      %v2017 = vrot.slane %v1733, 1
      %v2018 = vsel %vm1642, %v2015, %v2017
      %v2019 = vrot.slane %v1734, 1
      %v2020 = vsel %vm1642, %v2017, %v2019
      %v2021 = vrot.slane %v1735, 1
      %v2022 = vsel %vm1642, %v2019, %v2021
      %v2023 = vrot.slane %v1736, 1
      %v2024 = vsel %vm1642, %v2021, %v2023
      %v2025 = vrot.slane %v1737, 1
      %v2026 = vsel %vm1642, %v2023, %v2025
      %v2027 = vrot.slane %v1738, 1
      %v2028 = vsel %vm1642, %v2025, %v2027
      %v2029 = vrot.slane %v1739, 1
      %v2030 = vsel %vm1642, %v2027, %v2029
      %v2031 = vrot.slane %v1740, 1
      %v2032 = vsel %vm1642, %v2029, %v2031
      %v2033 = vrot.slane %v1741, 1
      %v2034 = vsel %vm1642, %v2031, %v2033
      %v2035 = vrot.slane %v1742, 1
      %v2036 = vsel %vm1642, %v2033, %v2035
      %v2037 = vrot.slane %v1743, 1
      %v2038 = vsel %vm1642, %v2035, %v2037
      %v2039 = vrot.slane %v1744, 1
      %v2040 = vsel %vm1642, %v2037, %v2039
      %v2041 = vrot.slane %v1745, 1
      %v2042 = vsel %vm1642, %v2039, %v2041
      %v2043 = vrot.slane %v1772, 1
      %v2044 = vsel %vm1642, %v2041, %v2043
      %v2072 = vunpack.c.l.b16 %v1218
      %v2073 = vunpack.c.l.b16 %v1219
      %v2074 = vunpack.c.l.b16 %v1220
      %v2075 = vpack.c.b16 %v1720, %v1719
      %v2076 = vpack.c.b16 %v2072, %v1721
      %v2077 = vpack.c.b16 %v2074, %v2073
      %v2130 = vunpack.c.l.b16 %v1221
      %v2131 = vunpack.c.l.b16 %v1222
      %v2132 = vunpack.c.l.b16 %v1223
      %v2133 = vunpack.c.l.b16 %v1224
      %v2134 = vunpack.c.l.b16 %v1225
      %v2135 = vunpack.c.l.b16 %v1226
      %v2136 = vunpack.c.l.b16 %v1227
      %v2137 = vunpack.c.l.b16 %v1228
      %v2138 = vunpack.c.l.b16 %v1229
      %v2139 = vunpack.c.l.b16 %v1230
      %v2140 = vunpack.c.l.b16 %v1231
      %v2141 = vunpack.c.l.b16 %v1232
      %v2142 = vunpack.c.l.b16 %v1233
      %v2143 = vunpack.c.l.b16 %v1234
      %v2144 = vunpack.c.l.b16 %v1235
      %v2145 = vunpack.c.l.b16 %v1236
      %v2146 = vunpack.c.l.b16 %v1237
      %v2147 = vunpack.c.l.b16 %v1238
      %v2148 = vunpack.c.l.b16 %v1239
      %v2149 = vunpack.c.l.b16 %v1240
      %v2150 = vunpack.c.l.b16 %v1241
      %v2151 = vunpack.c.l.b16 %v1242
      %v2152 = vunpack.c.l.b16 %v1243
      %v2153 = vunpack.c.l.b16 %v1244
      %v2154 = vunpack.c.l.b16 %v1245
      %v2155 = vunpack.c.l.b16 %v1246
      %v2156 = vunpack.c.l.b16 %v1247
      %v2157 = vunpack.c.l.b16 %v1248
      %v2158 = vunpack.c.l.b16 %v1249
      %v2159 = vunpack.c.l.b16 %v1250
      %v2160 = vunpack.c.l.b16 %v1251
      %v2161 = vunpack.c.l.b16 %v1252
      %v2162 = vunpack.c.l.b16 %v1253
      %v2163 = vunpack.c.l.b16 %v1254
      %v2164 = vunpack.c.l.b16 %v1255
      %v2165 = vunpack.c.l.b16 %v1256
      %v2166 = vunpack.c.l.b16 %v1257
      %v2167 = vunpack.c.l.b16 %v1258
      %v2168 = vunpack.c.l.b16 %v1259
      %v2169 = vunpack.c.l.b16 %v1260
      %v2170 = vunpack.c.l.b16 %v1261
      %v2171 = vunpack.c.l.b16 %v1262
      %v2172 = vunpack.c.l.b16 %v1263
      %v2173 = vunpack.c.l.b16 %v1264
      %v2174 = vunpack.c.l.b16 %v1265
      %v2175 = vunpack.c.l.b16 %v1266
      %v2176 = vunpack.c.l.b16 %v1267
      %v2177 = vunpack.c.l.b16 %v1268
      %v2178 = vunpack.c.l.b16 %v1269
      %v2179 = vpack.c.b16 %v2131, %v2130
      %v2180 = vpack.c.b16 %v2133, %v2132
      %v2181 = vpack.c.b16 %v2135, %v2134
      %v2182 = vpack.c.b16 %v2137, %v2136
      %v2183 = vpack.c.b16 %v2139, %v2138
      %v2184 = vpack.c.b16 %v2141, %v2140
      %v2185 = vpack.c.b16 %v2143, %v2142
      %v2186 = vpack.c.b16 %v2145, %v2144
      %v2187 = vpack.c.b16 %v2147, %v2146
      %v2188 = vpack.c.b16 %v2149, %v2148
      %v2189 = vpack.c.b16 %v2151, %v2150
      %v2190 = vpack.c.b16 %v2153, %v2152
      %v2191 = vpack.c.b16 %v2155, %v2154
      %v2192 = vpack.c.b16 %v2157, %v2156
      %v2193 = vpack.c.b16 %v2159, %v2158
      %v2194 = vpack.c.b16 %v2161, %v2160
      %v2195 = vpack.c.b16 %v2163, %v2162
      %v2196 = vpack.c.b16 %v2165, %v2164
      %v2197 = vpack.c.b16 %v2167, %v2166
      %v2198 = vpack.c.b16 %v2169, %v2168
      %v2199 = vpack.c.b16 %v2171, %v2170
      %v2200 = vpack.c.b16 %v2173, %v2172
      %v2201 = vpack.c.b16 %v2175, %v2174
      %v2202 = vpack.c.b16 %v2177, %v2176
      %v2203 = vpack.c.b16 %v2178, %v2178
      %v2205 = vshrl.u32 %v2179, 16
      %v2207 = vshll.u32 %v2179, 16
      %v2209 = vrot.slane %v2207, 1
      %v2210 = vor.u32 %v2205, %v2209
      %v2212 = vshll.u32 %v2180, 16
      %v2214 = vrot.slane %v2212, 1
      %v2215 = vsel %vm1418, %v2210, %v2214
      %v2216 = vshrl.u32 %v2180, 16
      %v2218 = vor.u32 %v2216, %v2214
      %v2220 = vshll.u32 %v2181, 16
      %v2222 = vrot.slane %v2220, 1
      %v2223 = vsel %vm1418, %v2218, %v2222
      %v2224 = vshrl.u32 %v2181, 16
      %v2226 = vor.u32 %v2224, %v2222
      %v2228 = vshll.u32 %v2182, 16
      %v2230 = vrot.slane %v2228, 1
      %v2231 = vsel %vm1418, %v2226, %v2230
      %v2232 = vshrl.u32 %v2182, 16
      %v2234 = vor.u32 %v2232, %v2230
      %v2236 = vshll.u32 %v2183, 16
      %v2238 = vrot.slane %v2236, 1
      %v2239 = vsel %vm1418, %v2234, %v2238
      %v2240 = vshrl.u32 %v2183, 16
      %v2242 = vor.u32 %v2240, %v2238
      %v2244 = vshll.u32 %v2184, 16
      %v2246 = vrot.slane %v2244, 1
      %v2247 = vsel %vm1418, %v2242, %v2246
      %v2248 = vshrl.u32 %v2184, 16
      %v2250 = vor.u32 %v2248, %v2246
      %v2252 = vshll.u32 %v2185, 16
      %v2254 = vrot.slane %v2252, 1
      %v2255 = vsel %vm1418, %v2250, %v2254
      %v2256 = vshrl.u32 %v2185, 16
      %v2258 = vor.u32 %v2256, %v2254
      %v2260 = vshll.u32 %v2186, 16
      %v2262 = vrot.slane %v2260, 1
      %v2263 = vsel %vm1418, %v2258, %v2262
      %v2264 = vshrl.u32 %v2186, 16
      %v2266 = vor.u32 %v2264, %v2262
      %v2268 = vshll.u32 %v2187, 16
      %v2270 = vrot.slane %v2268, 1
      %v2271 = vsel %vm1418, %v2266, %v2270
      %v2272 = vshrl.u32 %v2187, 16
      %v2274 = vor.u32 %v2272, %v2270
      %v2276 = vshll.u32 %v2188, 16
      %v2278 = vrot.slane %v2276, 1
      %v2279 = vsel %vm1418, %v2274, %v2278
      %v2280 = vshrl.u32 %v2188, 16
      %v2282 = vor.u32 %v2280, %v2278
      %v2284 = vshll.u32 %v2189, 16
      %v2286 = vrot.slane %v2284, 1
      %v2287 = vsel %vm1418, %v2282, %v2286
      %v2288 = vshrl.u32 %v2189, 16
      %v2290 = vor.u32 %v2288, %v2286
      %v2292 = vshll.u32 %v2190, 16
      %v2294 = vrot.slane %v2292, 1
      %v2295 = vsel %vm1418, %v2290, %v2294
      %v2296 = vshrl.u32 %v2190, 16
      %v2298 = vor.u32 %v2296, %v2294
      %v2300 = vshll.u32 %v2191, 16
      %v2302 = vrot.slane %v2300, 1
      %v2303 = vsel %vm1418, %v2298, %v2302
      %v2304 = vshrl.u32 %v2191, 16
      %v2306 = vor.u32 %v2304, %v2302
      %v2308 = vshll.u32 %v2192, 16
      %v2310 = vrot.slane %v2308, 1
      %v2311 = vsel %vm1418, %v2306, %v2310
      %v2312 = vshrl.u32 %v2192, 16
      %v2314 = vor.u32 %v2312, %v2310
      %v2316 = vshll.u32 %v2193, 16
      %v2318 = vrot.slane %v2316, 1
      %v2319 = vsel %vm1418, %v2314, %v2318
      %v2320 = vshrl.u32 %v2193, 16
      %v2322 = vor.u32 %v2320, %v2318
      %v2324 = vshll.u32 %v2194, 16
      %v2326 = vrot.slane %v2324, 1
      %v2327 = vsel %vm1418, %v2322, %v2326
      %v2328 = vshrl.u32 %v2194, 16
      %v2330 = vor.u32 %v2328, %v2326
      %v2332 = vshll.u32 %v2195, 16
      %v2334 = vrot.slane %v2332, 1
      %v2335 = vsel %vm1418, %v2330, %v2334
      %v2336 = vshrl.u32 %v2195, 16
      %v2338 = vor.u32 %v2336, %v2334
      %v2340 = vshll.u32 %v2196, 16
      %v2342 = vrot.slane %v2340, 1
      %v2343 = vsel %vm1418, %v2338, %v2342
      %v2344 = vshrl.u32 %v2196, 16
      %v2346 = vor.u32 %v2344, %v2342
      %v2348 = vshll.u32 %v2197, 16
      %v2350 = vrot.slane %v2348, 1
      %v2351 = vsel %vm1418, %v2346, %v2350
      %v2352 = vshrl.u32 %v2197, 16
      %v2354 = vor.u32 %v2352, %v2350
      %v2356 = vshll.u32 %v2198, 16
      %v2358 = vrot.slane %v2356, 1
      %v2359 = vsel %vm1418, %v2354, %v2358
      %v2360 = vshrl.u32 %v2198, 16
      %v2362 = vor.u32 %v2360, %v2358
      %v2364 = vshll.u32 %v2199, 16
      %v2366 = vrot.slane %v2364, 1
      %v2367 = vsel %vm1418, %v2362, %v2366
      %v2368 = vshrl.u32 %v2199, 16
      %v2370 = vor.u32 %v2368, %v2366
      %v2372 = vshll.u32 %v2200, 16
      %v2374 = vrot.slane %v2372, 1
      %v2375 = vsel %vm1418, %v2370, %v2374
      %v2376 = vshrl.u32 %v2200, 16
      %v2378 = vor.u32 %v2376, %v2374
      %v2380 = vshll.u32 %v2201, 16
      %v2382 = vrot.slane %v2380, 1
      %v2383 = vsel %vm1418, %v2378, %v2382
      %v2384 = vshrl.u32 %v2201, 16
      %v2386 = vor.u32 %v2384, %v2382
      %v2388 = vshll.u32 %v2202, 16
      %v2390 = vrot.slane %v2388, 1
      %v2391 = vsel %vm1418, %v2386, %v2390
      %v2392 = vshrl.u32 %v2202, 16
      %v2394 = vor.u32 %v2392, %v2390
      %v2396 = vshll.u32 %v2203, 16
      %v2398 = vrot.slane %v2396, 1
      %v2399 = vsel %vm1418, %v2394, %v2398
      %v2425 = vunpack.c.l.b16 %v1270
      %v2426 = vpack.c.b16 %v2131, %v2425
      %v2427 = vrot.slane %v2426, 1
      %v2428 = vrot.slane %v2180, 1
      %v2429 = vsel %vm1642, %v2427, %v2428
      %v2430 = vrot.slane %v2181, 1
      %v2431 = vsel %vm1642, %v2428, %v2430
      %v2432 = vrot.slane %v2182, 1
      %v2433 = vsel %vm1642, %v2430, %v2432
      %v2434 = vrot.slane %v2183, 1
      %v2435 = vsel %vm1642, %v2432, %v2434
      %v2436 = vrot.slane %v2184, 1
      %v2437 = vsel %vm1642, %v2434, %v2436
      %v2438 = vrot.slane %v2185, 1
      %v2439 = vsel %vm1642, %v2436, %v2438
      %v2440 = vrot.slane %v2186, 1
      %v2441 = vsel %vm1642, %v2438, %v2440
      %v2442 = vrot.slane %v2187, 1
      %v2443 = vsel %vm1642, %v2440, %v2442
      %v2444 = vrot.slane %v2188, 1
      %v2445 = vsel %vm1642, %v2442, %v2444
      %v2446 = vrot.slane %v2189, 1
      %v2447 = vsel %vm1642, %v2444, %v2446
      %v2448 = vrot.slane %v2190, 1
      %v2449 = vsel %vm1642, %v2446, %v2448
      %v2450 = vrot.slane %v2191, 1
      %v2451 = vsel %vm1642, %v2448, %v2450
      %v2452 = vrot.slane %v2192, 1
      %v2453 = vsel %vm1642, %v2450, %v2452
      %v2454 = vrot.slane %v2193, 1
      %v2455 = vsel %vm1642, %v2452, %v2454
      %v2456 = vrot.slane %v2194, 1
      %v2457 = vsel %vm1642, %v2454, %v2456
      %v2458 = vrot.slane %v2195, 1
      %v2459 = vsel %vm1642, %v2456, %v2458
      %v2460 = vrot.slane %v2196, 1
      %v2461 = vsel %vm1642, %v2458, %v2460
      %v2462 = vrot.slane %v2197, 1
      %v2463 = vsel %vm1642, %v2460, %v2462
      %v2464 = vrot.slane %v2198, 1
      %v2465 = vsel %vm1642, %v2462, %v2464
      %v2466 = vrot.slane %v2199, 1
      %v2467 = vsel %vm1642, %v2464, %v2466
      %v2468 = vrot.slane %v2200, 1
      %v2469 = vsel %vm1642, %v2466, %v2468
      %v2470 = vrot.slane %v2201, 1
      %v2471 = vsel %vm1642, %v2468, %v2470
      %v2472 = vrot.slane %v2202, 1
      %v2473 = vsel %vm1642, %v2470, %v2472
      %v2474 = vrot.slane %v2203, 1
      %v2475 = vsel %vm1642, %v2472, %v2474
      %v2500 = vld [vmem:[%s3] sm:$0xf]
      %v2501 = vld [vmem:[%s3 + $0x4] sm:$0xf]
      %v2502 = vld [vmem:[%s3 + $0x8] sm:$0xf]
      %v2503 = vld [vmem:[%s3 + $0xc] sm:$0xf]
      %v2504 = vld [vmem:[%s3 + $0x10] sm:$0xf]
      %v2505 = vld [vmem:[%s3 + $0x14] sm:$0xf]
      %v2506 = vld [vmem:[%s3 + $0x18] sm:$0xf]
      %v2507 = vld [vmem:[%s3 + $0x1c] sm:$0xf]
      %v2508 = vld [vmem:[%s3 + $0x20] sm:$0xf]
      %v2509 = vld [vmem:[%s3 + $0x24] sm:$0xf]
      %v2510 = vld [vmem:[%s3 + $0x28] sm:$0xf]
      %v2511 = vld [vmem:[%s3 + $0x2c] sm:$0xf]
      %v2512 = vld [vmem:[%s3 + $0x30] sm:$0xf]
      %v2513 = vld [vmem:[%s3 + $0x34] sm:$0xf]
      %v2514 = vld [vmem:[%s3 + $0x38] sm:$0xf]
      %v2515 = vld [vmem:[%s3 + $0x3c] sm:$0xf]
      %v2516 = vld [vmem:[%s3 + $0x40] sm:$0xf]
      %v2517 = vld [vmem:[%s3 + $0x44] sm:$0xf]
      %v2518 = vld [vmem:[%s3 + $0x48] sm:$0xf]
      %v2519 = vld [vmem:[%s3 + $0x4c] sm:$0xf]
      %v2520 = vld [vmem:[%s3 + $0x50] sm:$0xf]
      %v2521 = vld [vmem:[%s3 + $0x54] sm:$0xf]
      %v2522 = vld [vmem:[%s3 + $0x58] sm:$0xf]
      %v2523 = vld [vmem:[%s3 + $0x5c] sm:$0xf]
      %v2524 = vld [vmem:[%s3 + $0x60] sm:$0xf]
      %v2525 = vld [vmem:[%s3 + $0x64] sm:$0xf]
      %v2526 = vld [vmem:[%s3 + $0x68] sm:$0xf]
      %v2527 = vld [vmem:[%s3 + $0x6c] sm:$0xf]
      %v2528 = vld [vmem:[%s3 + $0x70] sm:$0xf]
      %v2529 = vld [vmem:[%s3 + $0x74] sm:$0xf]
      %v2530 = vld [vmem:[%s3 + $0x78] sm:$0xf]
      %v2531 = vld [vmem:[%s3 + $0x7c] sm:$0xf]
      %v2532 = vld [vmem:[%s3 + $0x80] sm:$0xf]
      %v2533 = vld [vmem:[%s3 + $0x84] sm:$0xf]
      %v2534 = vld [vmem:[%s3 + $0x88] sm:$0xf]
      %v2535 = vld [vmem:[%s3 + $0x8c] sm:$0xf]
      %v2536 = vld [vmem:[%s3 + $0x90] sm:$0xf]
      %v2537 = vld [vmem:[%s3 + $0x94] sm:$0xf]
      %v2538 = vld [vmem:[%s3 + $0x98] sm:$0xf]
      %v2539 = vld [vmem:[%s3 + $0x9c] sm:$0xf]
      %v2540 = vld [vmem:[%s3 + $0xa0] sm:$0xf]
      %v2541 = vld [vmem:[%s3 + $0xa4] sm:$0xf]
      %v2542 = vld [vmem:[%s3 + $0xa8] sm:$0xf]
      %v2543 = vld [vmem:[%s3 + $0xac] sm:$0xf]
      %v2544 = vld [vmem:[%s3 + $0xb0] sm:$0xf]
      %v2545 = vld [vmem:[%s3 + $0xb4] sm:$0xf]
      %v2546 = vld [vmem:[%s3 + $0xb8] sm:$0xf]
      %v2547 = vld [vmem:[%s3 + $0xbc] sm:$0xf]
      %v2548 = vld [vmem:[%s3 + $0xc0] sm:$0xf]
      %v2549 = vld [vmem:[%s3 + $0xc4] sm:$0xf]
      %v2550 = vld [vmem:[%s3 + $0xc8] sm:$0xf]
      %v2551 = vld [vmem:[%s3 + $0xcc] sm:$0xf]
      %v2552 = vld [vmem:[%s3 + $0xd0] sm:$0xf]
      %v2553 = vld [vmem:[%s3 + $0xd4] sm:$0xf]
      %v2554 = vld [vmem:[%s3 + $0xd8] sm:$0xf]
      %v2555 = vld [vmem:[%s3 + $0xdc] sm:$0xf]
      %v2556 = vld [vmem:[%s3 + $0xe0] sm:$0xf]
      %v2557 = vld [vmem:[%s3 + $0xe4] sm:$0xf]
      %v2558 = vld [vmem:[%s3 + $0xe8] sm:$0xf]
      %v2559 = vld [vmem:[%s3 + $0xec] sm:$0xf]
      %v2560 = vld [vmem:[%s3 + $0xf0] sm:$0xf]
      %v2561 = vld [vmem:[%s3 + $0xf4] sm:$0xf]
      %v2562 = vld [vmem:[%s3 + $0xf8] sm:$0xf]
      %v2563 = vld [vmem:[%s3 + $0xfc] sm:$0xf]
      %v2564 = vld [vmem:[%s3 + $0x100] sm:$0xf]
      %v2565 = vld [vmem:[%s3 + $0x104] sm:$0xf]
      %v2566 = vld [vmem:[%s3 + $0x108] sm:$0xf]
      %v2567 = vld [vmem:[%s3 + $0x10c] sm:$0xf]
      %v2568 = vld [vmem:[%s3 + $0x110] sm:$0xf]
      %v2569 = vld [vmem:[%s3 + $0x114] sm:$0xf]
      %v2570 = vld [vmem:[%s3 + $0x118] sm:$0xf]
      %v2571 = vld [vmem:[%s3 + $0x11c] sm:$0xf]
      %v2572 = vld [vmem:[%s3 + $0x120] sm:$0xf]
      %v2573 = vld [vmem:[%s3 + $0x124] sm:$0xf]
      %v2574 = vld [vmem:[%s3 + $0x128] sm:$0xf]
      %v2575 = vld [vmem:[%s3 + $0x12c] sm:$0xf]
      %v2576 = vld [vmem:[%s3 + $0x130] sm:$0xf]
      %v2577 = vld [vmem:[%s3 + $0x134] sm:$0xf]
      %v2578 = vld [vmem:[%s3 + $0x138] sm:$0xf]
      %v2579 = vld [vmem:[%s3 + $0x13c] sm:$0xf]
      %v2580 = vld [vmem:[%s3 + $0x140] sm:$0xf]
      %v2581 = vld [vmem:[%s3 + $0x144] sm:$0xf]
      %v2582 = vld [vmem:[%s3 + $0x148] sm:$0xf]
      %v2583 = vld [vmem:[%s3 + $0x14c] sm:$0xf]
      %v2584 = vld [vmem:[%s3 + $0x150] sm:$0xf]
      %v2585 = vld [vmem:[%s3 + $0x154] sm:$0xf]
      %v2586 = vld [vmem:[%s3 + $0x158] sm:$0xf]
      %v2587 = vld [vmem:[%s3 + $0x15c] sm:$0xf]
      %v2588 = vld [vmem:[%s3 + $0x160] sm:$0xf]
      %v2589 = vld [vmem:[%s3 + $0x164] sm:$0xf]
      %v2590 = vld [vmem:[%s3 + $0x168] sm:$0xf]
      %v2591 = vld [vmem:[%s3 + $0x16c] sm:$0xf]
      %v2592 = vld [vmem:[%s3 + $0x170] sm:$0xf]
      %v2593 = vld [vmem:[%s3 + $0x174] sm:$0xf]
      %v2594 = vld [vmem:[%s3 + $0x178] sm:$0xf]
      %v2595 = vld [vmem:[%s3 + $0x17c] sm:$0xf]
      %v2596 = vld [vmem:[%s3 + $0x180] sm:$0xf]
      %v2597 = vld [vmem:[%s3 + $0x184] sm:$0xf]
      %v2598 = vld [vmem:[%s3 + $0x188] sm:$0xf]
      %v2599 = vld [vmem:[%s3 + $0x18c] sm:$0xf]
      %v2600 = vld [vmem:[%s3 + $0x190] sm:$0xf]
      %v2601 = vld [vmem:[%s3 + $0x194] sm:$0xf]
      %v2602 = vld [vmem:[%s3 + $0x198] sm:$0xf]
      %v2603 = vld [vmem:[%s3 + $0x19c] sm:$0xf]
      %v2604 = vld [vmem:[%s3 + $0x1a0] sm:$0xf]
      %v2605 = vld [vmem:[%s3 + $0x1a4] sm:$0xf]
      %v2606 = vld [vmem:[%s3 + $0x1a8] sm:$0xf]
      %v2607 = vld [vmem:[%s3 + $0x1ac] sm:$0xf]
      %v2608 = vld [vmem:[%s3 + $0x1b0] sm:$0xf]
      %v2609 = vld [vmem:[%s3 + $0x1b4] sm:$0xf]
      %v2610 = vld [vmem:[%s3 + $0x1b8] sm:$0xf]
      %v2611 = vld [vmem:[%s3 + $0x1bc] sm:$0xf]
      %v2612 = vld [vmem:[%s3 + $0x1c0] sm:$0xf]
      %v2613 = vld [vmem:[%s3 + $0x1c4] sm:$0xf]
      %v2614 = vld [vmem:[%s3 + $0x1c8] sm:$0xf]
      %v2615 = vld [vmem:[%s3 + $0x1cc] sm:$0xf]
      %v2616 = vld [vmem:[%s3 + $0x1d0] sm:$0xf]
      %v2617 = vld [vmem:[%s3 + $0x1d4] sm:$0xf]
      %v2618 = vld [vmem:[%s3 + $0x1d8] sm:$0xf]
      %v2619 = vld [vmem:[%s3 + $0x1dc] sm:$0xf]
      %v2620 = vld [vmem:[%s3 + $0x1e0] sm:$0xf]
      %v2621 = vld [vmem:[%s3 + $0x1e4] sm:$0xf]
      %v2622 = vld [vmem:[%s3 + $0x1e8] sm:$0xf]
      %v2623 = vld [vmem:[%s3 + $0x1ec] sm:$0xf]
      %v2624 = vld [vmem:[%s3 + $0x1f0] sm:$0xf]
      %v2625 = vld [vmem:[%s3 + $0x1f4] sm:$0xf]
      %v2626 = vld [vmem:[%s3 + $0x1f8] sm:$0xf]
      %v2627 = vld [vmem:[%s3 + $0x1fc] sm:$0xf]
      %v2628 = vld [vmem:[%s3 + $0x200] sm:$0xf]
      %v2629 = vld [vmem:[%s3 + $0x204] sm:$0xf]
      %v2630 = vld [vmem:[%s3 + $0x208] sm:$0xf]
      %v2631 = vld [vmem:[%s3 + $0x20c] sm:$0xf]
      %v2632 = vld [vmem:[%s3 + $0x210] sm:$0xf]
      %v2633 = vld [vmem:[%s3 + $0x214] sm:$0xf]
      %v2634 = vld [vmem:[%s3 + $0x218] sm:$0xf]
      %v2635 = vld [vmem:[%s3 + $0x21c] sm:$0xf]
      %v2636 = vld [vmem:[%s3 + $0x220] sm:$0xf]
      %v2637 = vld [vmem:[%s3 + $0x224] sm:$0xf]
      %v2638 = vld [vmem:[%s3 + $0x228] sm:$0xf]
      %v2639 = vld [vmem:[%s3 + $0x22c] sm:$0xf]
      %v2640 = vld [vmem:[%s3 + $0x230] sm:$0xf]
      %v2641 = vld [vmem:[%s3 + $0x234] sm:$0xf]
      %v2642 = vld [vmem:[%s3 + $0x238] sm:$0xf]
      %v2643 = vld [vmem:[%s3 + $0x23c] sm:$0xf]
      %v2788 = vunpack.c.l.b16 %v2500
      %v2789 = vunpack.c.l.b16 %v2501
      %v2790 = vunpack.c.l.b16 %v2502
      %v2791 = vunpack.c.l.b16 %v2503
      %v2792 = vunpack.c.l.b16 %v2504
      %v2793 = vunpack.c.l.b16 %v2505
      %v2794 = vunpack.c.l.b16 %v2506
      %v2795 = vunpack.c.l.b16 %v2507
      %v2796 = vunpack.c.l.b16 %v2508
      %v2797 = vunpack.c.l.b16 %v2509
      %v2798 = vunpack.c.l.b16 %v2510
      %v2799 = vunpack.c.l.b16 %v2511
      %v2800 = vunpack.c.l.b16 %v2512
      %v2801 = vunpack.c.l.b16 %v2513
      %v2802 = vunpack.c.l.b16 %v2514
      %v2803 = vunpack.c.l.b16 %v2515
      %v2804 = vunpack.c.l.b16 %v2516
      %v2805 = vunpack.c.l.b16 %v2517
      %v2806 = vunpack.c.l.b16 %v2518
      %v2807 = vunpack.c.l.b16 %v2519
      %v2808 = vunpack.c.l.b16 %v2520
      %v2809 = vunpack.c.l.b16 %v2521
      %v2810 = vunpack.c.l.b16 %v2522
      %v2811 = vunpack.c.l.b16 %v2523
      %v2812 = vunpack.c.l.b16 %v2524
      %v2813 = vunpack.c.l.b16 %v2525
      %v2814 = vunpack.c.l.b16 %v2526
      %v2815 = vunpack.c.l.b16 %v2527
      %v2816 = vunpack.c.l.b16 %v2528
      %v2817 = vunpack.c.l.b16 %v2529
      %v2818 = vunpack.c.l.b16 %v2530
      %v2819 = vunpack.c.l.b16 %v2531
      %v2820 = vunpack.c.l.b16 %v2532
      %v2821 = vunpack.c.l.b16 %v2533
      %v2822 = vunpack.c.l.b16 %v2534
      %v2823 = vunpack.c.l.b16 %v2535
      %v2824 = vunpack.c.l.b16 %v2536
      %v2825 = vunpack.c.l.b16 %v2537
      %v2826 = vunpack.c.l.b16 %v2538
      %v2827 = vunpack.c.l.b16 %v2539
      %v2828 = vunpack.c.l.b16 %v2540
      %v2829 = vunpack.c.l.b16 %v2541
      %v2830 = vunpack.c.l.b16 %v2542
      %v2831 = vunpack.c.l.b16 %v2543
      %v2832 = vunpack.c.l.b16 %v2544
      %v2833 = vunpack.c.l.b16 %v2545
      %v2834 = vunpack.c.l.b16 %v2546
      %v2835 = vunpack.c.l.b16 %v2547
      %v2836 = vunpack.c.l.b16 %v2548
      %v2837 = vunpack.c.l.b16 %v2549
      %v2838 = vunpack.c.l.b16 %v2550
      %v2839 = vunpack.c.l.b16 %v2551
      %v2840 = vunpack.c.l.b16 %v2552
      %v2841 = vunpack.c.l.b16 %v2553
      %v2842 = vunpack.c.l.b16 %v2554
      %v2843 = vunpack.c.l.b16 %v2555
      %v2844 = vunpack.c.l.b16 %v2556
      %v2845 = vunpack.c.l.b16 %v2557
      %v2846 = vunpack.c.l.b16 %v2558
      %v2847 = vunpack.c.l.b16 %v2559
      %v2848 = vunpack.c.l.b16 %v2560
      %v2849 = vunpack.c.l.b16 %v2561
      %v2850 = vunpack.c.l.b16 %v2562
      %v2851 = vunpack.c.l.b16 %v2563
      %v2852 = vunpack.c.l.b16 %v2564
      %v2853 = vunpack.c.l.b16 %v2565
      %v2854 = vunpack.c.l.b16 %v2566
      %v2855 = vunpack.c.l.b16 %v2567
      %v2856 = vunpack.c.l.b16 %v2568
      %v2857 = vunpack.c.l.b16 %v2569
      %v2858 = vunpack.c.l.b16 %v2570
      %v2859 = vunpack.c.l.b16 %v2571
      %v2860 = vunpack.c.l.b16 %v2572
      %v2861 = vunpack.c.l.b16 %v2573
      %v2862 = vunpack.c.l.b16 %v2574
      %v2863 = vunpack.c.l.b16 %v2575
      %v2864 = vunpack.c.l.b16 %v2576
      %v2865 = vunpack.c.l.b16 %v2577
      %v2866 = vunpack.c.l.b16 %v2578
      %v2867 = vunpack.c.l.b16 %v2579
      %v2868 = vunpack.c.l.b16 %v2580
      %v2869 = vunpack.c.l.b16 %v2581
      %v2870 = vunpack.c.l.b16 %v2582
      %v2871 = vunpack.c.l.b16 %v2583
      %v2872 = vunpack.c.l.b16 %v2584
      %v2873 = vunpack.c.l.b16 %v2585
      %v2874 = vunpack.c.l.b16 %v2586
      %v2875 = vunpack.c.l.b16 %v2587
      %v2876 = vunpack.c.l.b16 %v2588
      %v2877 = vunpack.c.l.b16 %v2589
      %v2878 = vunpack.c.l.b16 %v2590
      %v2879 = vunpack.c.l.b16 %v2591
      %v2880 = vunpack.c.l.b16 %v2592
      %v2881 = vunpack.c.l.b16 %v2593
      %v2882 = vunpack.c.l.b16 %v2594
      %v2883 = vunpack.c.l.b16 %v2595
      %v2884 = vunpack.c.l.b16 %v2596
      %v2885 = vunpack.c.l.b16 %v2597
      %v2886 = vunpack.c.l.b16 %v2598
      %v2887 = vunpack.c.l.b16 %v2599
      %v2888 = vunpack.c.l.b16 %v2600
      %v2889 = vunpack.c.l.b16 %v2601
      %v2890 = vunpack.c.l.b16 %v2602
      %v2891 = vunpack.c.l.b16 %v2603
      %v2892 = vunpack.c.l.b16 %v2604
      %v2893 = vunpack.c.l.b16 %v2605
      %v2894 = vunpack.c.l.b16 %v2606
      %v2895 = vunpack.c.l.b16 %v2607
      %v2896 = vunpack.c.l.b16 %v2608
      %v2897 = vunpack.c.l.b16 %v2609
      %v2898 = vunpack.c.l.b16 %v2610
      %v2899 = vunpack.c.l.b16 %v2611
      %v2900 = vunpack.c.l.b16 %v2612
      %v2901 = vunpack.c.l.b16 %v2613
      %v2902 = vunpack.c.l.b16 %v2614
      %v2903 = vunpack.c.l.b16 %v2615
      %v2904 = vunpack.c.l.b16 %v2616
      %v2905 = vunpack.c.l.b16 %v2617
      %v2906 = vunpack.c.l.b16 %v2618
      %v2907 = vunpack.c.l.b16 %v2619
      %v2908 = vunpack.c.l.b16 %v2620
      %v2909 = vunpack.c.l.b16 %v2621
      %v2910 = vunpack.c.l.b16 %v2622
      %v2911 = vunpack.c.l.b16 %v2623
      %v2912 = vunpack.c.l.b16 %v2624
      %v2913 = vunpack.c.l.b16 %v2625
      %v2914 = vunpack.c.l.b16 %v2626
      %v2915 = vunpack.c.l.b16 %v2627
      %v2916 = vunpack.c.l.b16 %v2628
      %v2917 = vunpack.c.l.b16 %v2629
      %v2918 = vunpack.c.l.b16 %v2630
      %v2919 = vunpack.c.l.b16 %v2631
      %v2920 = vunpack.c.l.b16 %v2632
      %v2921 = vunpack.c.l.b16 %v2633
      %v2922 = vunpack.c.l.b16 %v2634
      %v2923 = vunpack.c.l.b16 %v2635
      %v2924 = vunpack.c.l.b16 %v2636
      %v2925 = vunpack.c.l.b16 %v2637
      %v2926 = vunpack.c.l.b16 %v2638
      %v2927 = vunpack.c.l.b16 %v2639
      %v2928 = vunpack.c.l.b16 %v2640
      %v2929 = vunpack.c.l.b16 %v2641
      %v2930 = vunpack.c.l.b16 %v2642
      %v2931 = vunpack.c.l.b16 %v2643
      %v2932 = vpack.c.b16 %v2789, %v2788
      %v2933 = vpack.c.b16 %v2791, %v2790
      %v2934 = vpack.c.b16 %v2793, %v2792
      %v2935 = vpack.c.b16 %v2795, %v2794
      %v2936 = vpack.c.b16 %v2797, %v2796
      %v2937 = vpack.c.b16 %v2799, %v2798
      %v2938 = vpack.c.b16 %v2801, %v2800
      %v2939 = vpack.c.b16 %v2803, %v2802
      %v2940 = vpack.c.b16 %v2805, %v2804
      %v2941 = vpack.c.b16 %v2807, %v2806
      %v2942 = vpack.c.b16 %v2809, %v2808
      %v2943 = vpack.c.b16 %v2811, %v2810
      %v2944 = vpack.c.b16 %v2813, %v2812
      %v2945 = vpack.c.b16 %v2815, %v2814
      %v2946 = vpack.c.b16 %v2817, %v2816
      %v2947 = vpack.c.b16 %v2819, %v2818
      %v2948 = vpack.c.b16 %v2821, %v2820
      %v2949 = vpack.c.b16 %v2823, %v2822
      %v2950 = vpack.c.b16 %v2825, %v2824
      %v2951 = vpack.c.b16 %v2827, %v2826
      %v2952 = vpack.c.b16 %v2829, %v2828
      %v2953 = vpack.c.b16 %v2831, %v2830
      %v2954 = vpack.c.b16 %v2833, %v2832
      %v2955 = vpack.c.b16 %v2835, %v2834
      %v2956 = vpack.c.b16 %v2837, %v2836
      %v2957 = vpack.c.b16 %v2839, %v2838
      %v2958 = vpack.c.b16 %v2841, %v2840
      %v2959 = vpack.c.b16 %v2843, %v2842
      %v2960 = vpack.c.b16 %v2845, %v2844
      %v2961 = vpack.c.b16 %v2847, %v2846
      %v2962 = vpack.c.b16 %v2849, %v2848
      %v2963 = vpack.c.b16 %v2851, %v2850
      %v2964 = vpack.c.b16 %v2853, %v2852
      %v2965 = vpack.c.b16 %v2855, %v2854
      %v2966 = vpack.c.b16 %v2857, %v2856
      %v2967 = vpack.c.b16 %v2859, %v2858
      %v2968 = vpack.c.b16 %v2861, %v2860
      %v2969 = vpack.c.b16 %v2863, %v2862
      %v2970 = vpack.c.b16 %v2865, %v2864
      %v2971 = vpack.c.b16 %v2867, %v2866
      %v2972 = vpack.c.b16 %v2869, %v2868
      %v2973 = vpack.c.b16 %v2871, %v2870
      %v2974 = vpack.c.b16 %v2873, %v2872
      %v2975 = vpack.c.b16 %v2875, %v2874
      %v2976 = vpack.c.b16 %v2877, %v2876
      %v2977 = vpack.c.b16 %v2879, %v2878
      %v2978 = vpack.c.b16 %v2881, %v2880
      %v2979 = vpack.c.b16 %v2883, %v2882
      %v2980 = vpack.c.b16 %v2885, %v2884
      %v2981 = vpack.c.b16 %v2887, %v2886
      %v2982 = vpack.c.b16 %v2889, %v2888
      %v2983 = vpack.c.b16 %v2891, %v2890
      %v2984 = vpack.c.b16 %v2893, %v2892
      %v2985 = vpack.c.b16 %v2895, %v2894
      %v2986 = vpack.c.b16 %v2897, %v2896
      %v2987 = vpack.c.b16 %v2899, %v2898
      %v2988 = vpack.c.b16 %v2901, %v2900
      %v2989 = vpack.c.b16 %v2903, %v2902
      %v2990 = vpack.c.b16 %v2905, %v2904
      %v2991 = vpack.c.b16 %v2907, %v2906
      %v2992 = vpack.c.b16 %v2909, %v2908
      %v2993 = vpack.c.b16 %v2911, %v2910
      %v2994 = vpack.c.b16 %v2913, %v2912
      %v2995 = vpack.c.b16 %v2915, %v2914
      %v2996 = vpack.c.b16 %v2917, %v2916
      %v2997 = vpack.c.b16 %v2919, %v2918
      %v2998 = vpack.c.b16 %v2921, %v2920
      %v2999 = vpack.c.b16 %v2923, %v2922
      %v3000 = vpack.c.b16 %v2925, %v2924
      %v3001 = vpack.c.b16 %v2927, %v2926
      %v3002 = vpack.c.b16 %v2929, %v2928
      %v3003 = vpack.c.b16 %v2931, %v2930
      %3076 = vmatpush.bf16.msra.mxu0 %v2939
      %3077 = vmatpush.bf16.msra.mxu0 %v2938
      %3078 = vmatpush.bf16.msra.mxu0 %v2937
      %3079 = vmatpush.bf16.msra.mxu0 %v2936
      %3080 = vmatpush.bf16.msra.mxu0 %v2935
      %3081 = vmatpush.bf16.msra.mxu0 %v2934
      %3082 = vmatpush.bf16.msra.mxu0 %v2933
      %3083 = vmatpush.bf16.msra.mxu0 %v2932
      %3084 = vmatmul.bf16.gmra.mxu0 %v1367
      %v3085 = vpop.f32.mrf.mxu0
      %v3086 = vadd.f32 0.0, %v3085
      %v3087 = vpop.f32.mrf.mxu0
      %v3088 = vadd.f32 0.0, %v3087
      %3089 = vmatmul.bf16.gmra.mxu0 %v1368
      %v3090 = vpop.f32.mrf.mxu0
      %v3091 = vadd.f32 0.0, %v3090
      %v3092 = vpop.f32.mrf.mxu0
      %v3093 = vadd.f32 0.0, %v3092
      %3094 = vmatmul.bf16.gmra.mxu0 %v1369
      %v3095 = vpop.f32.mrf.mxu0
      %v3096 = vadd.f32 0.0, %v3095
      %v3097 = vpop.f32.mrf.mxu0
      %v3098 = vadd.f32 0.0, %v3097
      %3099 = vmatmul.bf16.gmra.mxu0 %v1370
      %v3100 = vpop.f32.mrf.mxu0
      %v3101 = vadd.f32 0.0, %v3100
      %v3102 = vpop.f32.mrf.mxu0
      %v3103 = vadd.f32 0.0, %v3102
      %3104 = vmatmul.bf16.gmra.mxu0 %v1371
      %v3105 = vpop.f32.mrf.mxu0
      %v3106 = vadd.f32 0.0, %v3105
      %v3107 = vpop.f32.mrf.mxu0
      %v3108 = vadd.f32 0.0, %v3107
      %3109 = vmatmul.bf16.gmra.mxu0 %v1372
      %v3110 = vpop.f32.mrf.mxu0
      %v3111 = vadd.f32 0.0, %v3110
      %v3112 = vpop.f32.mrf.mxu0
      %v3113 = vadd.f32 0.0, %v3112
      %3114 = vmatmul.bf16.gmra.mxu0 %v1373
      %v3115 = vpop.f32.mrf.mxu0
      %v3116 = vadd.f32 0.0, %v3115
      %v3117 = vpop.f32.mrf.mxu0
      %v3118 = vadd.f32 0.0, %v3117
      %3119 = vmatmul.bf16.gmra.mxu0 %v1374
      %v3120 = vpop.f32.mrf.mxu0
      %v3121 = vadd.f32 0.0, %v3120
      %v3122 = vpop.f32.mrf.mxu0
      %v3123 = vadd.f32 0.0, %v3122
      %3124 = vmatmul.bf16.gmra.mxu0 %v1375
      %v3125 = vpop.f32.mrf.mxu0
      %v3126 = vadd.f32 0.0, %v3125
      %v3127 = vpop.f32.mrf.mxu0
      %v3128 = vadd.f32 0.0, %v3127
      %3129 = vmatmul.bf16.gmra.mxu0 %v1376
      %v3130 = vpop.f32.mrf.mxu0
      %v3131 = vadd.f32 0.0, %v3130
      %v3132 = vpop.f32.mrf.mxu0
      %v3133 = vadd.f32 0.0, %v3132
      %3134 = vmatmul.bf16.gmra.mxu0 %v1377
      %v3135 = vpop.f32.mrf.mxu0
      %v3136 = vadd.f32 0.0, %v3135
      %v3137 = vpop.f32.mrf.mxu0
      %v3138 = vadd.f32 0.0, %v3137
      %3139 = vmatmul.bf16.gmra.mxu0 %v1378
      %v3140 = vpop.f32.mrf.mxu0
      %v3141 = vadd.f32 0.0, %v3140
      %v3142 = vpop.f32.mrf.mxu0
      %v3143 = vadd.f32 0.0, %v3142
      %3144 = vmatmul.bf16.gmra.mxu0 %v1379
      %v3145 = vpop.f32.mrf.mxu0
      %v3146 = vadd.f32 0.0, %v3145
      %v3147 = vpop.f32.mrf.mxu0
      %v3148 = vadd.f32 0.0, %v3147
      %3149 = vmatmul.bf16.gmra.mxu0 %v1380
      %v3150 = vpop.f32.mrf.mxu0
      %v3151 = vadd.f32 0.0, %v3150
      %v3152 = vpop.f32.mrf.mxu0
      %v3153 = vadd.f32 0.0, %v3152
      %3154 = vmatmul.bf16.gmra.mxu0 %v1381
      %v3155 = vpop.f32.mrf.mxu0
      %v3156 = vadd.f32 0.0, %v3155
      %v3157 = vpop.f32.mrf.mxu0
      %v3158 = vadd.f32 0.0, %v3157
      %3159 = vmatmul.bf16.gmra.mxu0 %v1382
      %v3160 = vpop.f32.mrf.mxu0
      %v3161 = vadd.f32 0.0, %v3160
      %v3162 = vpop.f32.mrf.mxu0
      %v3163 = vadd.f32 0.0, %v3162
      %3164 = vmatmul.bf16.gmra.mxu0 %v1383
      %v3165 = vpop.f32.mrf.mxu0
      %v3166 = vadd.f32 0.0, %v3165
      %v3167 = vpop.f32.mrf.mxu0
      %v3168 = vadd.f32 0.0, %v3167
      %3169 = vmatmul.bf16.gmra.mxu0 %v1384
      %v3170 = vpop.f32.mrf.mxu0
      %v3171 = vadd.f32 0.0, %v3170
      %v3172 = vpop.f32.mrf.mxu0
      %v3173 = vadd.f32 0.0, %v3172
      %3174 = vmatmul.bf16.gmra.mxu0 %v1385
      %v3175 = vpop.f32.mrf.mxu0
      %v3176 = vadd.f32 0.0, %v3175
      %v3177 = vpop.f32.mrf.mxu0
      %v3178 = vadd.f32 0.0, %v3177
      %3179 = vmatmul.bf16.gmra.mxu0 %v1386
      %v3180 = vpop.f32.mrf.mxu0
      %v3181 = vadd.f32 0.0, %v3180
      %v3182 = vpop.f32.mrf.mxu0
      %v3183 = vadd.f32 0.0, %v3182
      %3184 = vmatmul.bf16.gmra.mxu0 %v1387
      %v3185 = vpop.f32.mrf.mxu0
      %v3186 = vadd.f32 0.0, %v3185
      %v3187 = vpop.f32.mrf.mxu0
      %v3188 = vadd.f32 0.0, %v3187
      %3189 = vmatmul.bf16.gmra.mxu0 %v1388
      %v3190 = vpop.f32.mrf.mxu0
      %v3191 = vadd.f32 0.0, %v3190
      %v3192 = vpop.f32.mrf.mxu0
      %v3193 = vadd.f32 0.0, %v3192
      %3194 = vmatmul.bf16.gmra.mxu0 %v1389
      %v3195 = vpop.f32.mrf.mxu0
      %v3196 = vadd.f32 0.0, %v3195
      %v3197 = vpop.f32.mrf.mxu0
      %v3198 = vadd.f32 0.0, %v3197
      %3199 = vmatmul.bf16.gmra.mxu0 %v1390
      %v3200 = vpop.f32.mrf.mxu0
      %v3201 = vadd.f32 0.0, %v3200
      %v3202 = vpop.f32.mrf.mxu0
      %v3203 = vadd.f32 0.0, %v3202
      %3204 = vdwg.mxu0
      %3205 = vmatpush.bf16.msra.mxu0 %v2947
      %3206 = vmatpush.bf16.msra.mxu0 %v2946
      %3207 = vmatpush.bf16.msra.mxu0 %v2945
      %3208 = vmatpush.bf16.msra.mxu0 %v2944
      %3209 = vmatpush.bf16.msra.mxu0 %v2943
      %3210 = vmatpush.bf16.msra.mxu0 %v2942
      %3211 = vmatpush.bf16.msra.mxu0 %v2941
      %3212 = vmatpush.bf16.msra.mxu0 %v2940
      %3213 = vmatmul.bf16.gmra.mxu0 %v1430
      %v3214 = vpop.f32.mrf.mxu0
      %v3215 = vadd.f32 %v3086, %v3214
      %v3216 = vpop.f32.mrf.mxu0
      %v3217 = vadd.f32 %v3088, %v3216
      %3218 = vmatmul.bf16.gmra.mxu0 %v1438
      %v3219 = vpop.f32.mrf.mxu0
      %v3220 = vadd.f32 %v3091, %v3219
      %v3221 = vpop.f32.mrf.mxu0
      %v3222 = vadd.f32 %v3093, %v3221
      %3223 = vmatmul.bf16.gmra.mxu0 %v1446
      %v3224 = vpop.f32.mrf.mxu0
      %v3225 = vadd.f32 %v3096, %v3224
      %v3226 = vpop.f32.mrf.mxu0
      %v3227 = vadd.f32 %v3098, %v3226
      %3228 = vmatmul.bf16.gmra.mxu0 %v1454
      %v3229 = vpop.f32.mrf.mxu0
      %v3230 = vadd.f32 %v3101, %v3229
      %v3231 = vpop.f32.mrf.mxu0
      %v3232 = vadd.f32 %v3103, %v3231
      %3233 = vmatmul.bf16.gmra.mxu0 %v1462
      %v3234 = vpop.f32.mrf.mxu0
      %v3235 = vadd.f32 %v3106, %v3234
      %v3236 = vpop.f32.mrf.mxu0
      %v3237 = vadd.f32 %v3108, %v3236
      %3238 = vmatmul.bf16.gmra.mxu0 %v1470
      %v3239 = vpop.f32.mrf.mxu0
      %v3240 = vadd.f32 %v3111, %v3239
      %v3241 = vpop.f32.mrf.mxu0
      %v3242 = vadd.f32 %v3113, %v3241
      %3243 = vmatmul.bf16.gmra.mxu0 %v1478
      %v3244 = vpop.f32.mrf.mxu0
      %v3245 = vadd.f32 %v3116, %v3244
      %v3246 = vpop.f32.mrf.mxu0
      %v3247 = vadd.f32 %v3118, %v3246
      %3248 = vmatmul.bf16.gmra.mxu0 %v1486
      %v3249 = vpop.f32.mrf.mxu0
      %v3250 = vadd.f32 %v3121, %v3249
      %v3251 = vpop.f32.mrf.mxu0
      %v3252 = vadd.f32 %v3123, %v3251
      %3253 = vmatmul.bf16.gmra.mxu0 %v1494
      %v3254 = vpop.f32.mrf.mxu0
      %v3255 = vadd.f32 %v3126, %v3254
      %v3256 = vpop.f32.mrf.mxu0
      %v3257 = vadd.f32 %v3128, %v3256
      %3258 = vmatmul.bf16.gmra.mxu0 %v1502
      %v3259 = vpop.f32.mrf.mxu0
      %v3260 = vadd.f32 %v3131, %v3259
      %v3261 = vpop.f32.mrf.mxu0
      %v3262 = vadd.f32 %v3133, %v3261
      %3263 = vmatmul.bf16.gmra.mxu0 %v1510
      %v3264 = vpop.f32.mrf.mxu0
      %v3265 = vadd.f32 %v3136, %v3264
      %v3266 = vpop.f32.mrf.mxu0
      %v3267 = vadd.f32 %v3138, %v3266
      %3268 = vmatmul.bf16.gmra.mxu0 %v1518
      %v3269 = vpop.f32.mrf.mxu0
      %v3270 = vadd.f32 %v3141, %v3269
      %v3271 = vpop.f32.mrf.mxu0
      %v3272 = vadd.f32 %v3143, %v3271
      %3273 = vmatmul.bf16.gmra.mxu0 %v1526
      %v3274 = vpop.f32.mrf.mxu0
      %v3275 = vadd.f32 %v3146, %v3274
      %v3276 = vpop.f32.mrf.mxu0
      %v3277 = vadd.f32 %v3148, %v3276
      %3278 = vmatmul.bf16.gmra.mxu0 %v1534
      %v3279 = vpop.f32.mrf.mxu0
      %v3280 = vadd.f32 %v3151, %v3279
      %v3281 = vpop.f32.mrf.mxu0
      %v3282 = vadd.f32 %v3153, %v3281
      %3283 = vmatmul.bf16.gmra.mxu0 %v1542
      %v3284 = vpop.f32.mrf.mxu0
      %v3285 = vadd.f32 %v3156, %v3284
      %v3286 = vpop.f32.mrf.mxu0
      %v3287 = vadd.f32 %v3158, %v3286
      %3288 = vmatmul.bf16.gmra.mxu0 %v1550
      %v3289 = vpop.f32.mrf.mxu0
      %v3290 = vadd.f32 %v3161, %v3289
      %v3291 = vpop.f32.mrf.mxu0
      %v3292 = vadd.f32 %v3163, %v3291
      %3293 = vmatmul.bf16.gmra.mxu0 %v1558
      %v3294 = vpop.f32.mrf.mxu0
      %v3295 = vadd.f32 %v3166, %v3294
      %v3296 = vpop.f32.mrf.mxu0
      %v3297 = vadd.f32 %v3168, %v3296
      %3298 = vmatmul.bf16.gmra.mxu0 %v1566
      %v3299 = vpop.f32.mrf.mxu0
      %v3300 = vadd.f32 %v3171, %v3299
      %v3301 = vpop.f32.mrf.mxu0
      %v3302 = vadd.f32 %v3173, %v3301
      %3303 = vmatmul.bf16.gmra.mxu0 %v1574
      %v3304 = vpop.f32.mrf.mxu0
      %v3305 = vadd.f32 %v3176, %v3304
      %v3306 = vpop.f32.mrf.mxu0
      %v3307 = vadd.f32 %v3178, %v3306
      %3308 = vmatmul.bf16.gmra.mxu0 %v1582
      %v3309 = vpop.f32.mrf.mxu0
      %v3310 = vadd.f32 %v3181, %v3309
      %v3311 = vpop.f32.mrf.mxu0
      %v3312 = vadd.f32 %v3183, %v3311
      %3313 = vmatmul.bf16.gmra.mxu0 %v1590
      %v3314 = vpop.f32.mrf.mxu0
      %v3315 = vadd.f32 %v3186, %v3314
      %v3316 = vpop.f32.mrf.mxu0
      %v3317 = vadd.f32 %v3188, %v3316
      %3318 = vmatmul.bf16.gmra.mxu0 %v1598
      %v3319 = vpop.f32.mrf.mxu0
      %v3320 = vadd.f32 %v3191, %v3319
      %v3321 = vpop.f32.mrf.mxu0
      %v3322 = vadd.f32 %v3193, %v3321
      %3323 = vmatmul.bf16.gmra.mxu0 %v1606
      %v3324 = vpop.f32.mrf.mxu0
      %v3325 = vadd.f32 %v3196, %v3324
      %v3326 = vpop.f32.mrf.mxu0
      %v3327 = vadd.f32 %v3198, %v3326
      %3328 = vmatmul.bf16.gmra.mxu0 %v1614
      %v3329 = vpop.f32.mrf.mxu0
      %v3330 = vadd.f32 %v3201, %v3329
      %v3331 = vpop.f32.mrf.mxu0
      %v3332 = vadd.f32 %v3203, %v3331
      %3333 = vdwg.mxu0
      %3334 = vmatpush.bf16.msra.mxu0 %v2955
      %3335 = vmatpush.bf16.msra.mxu0 %v2954
      %3336 = vmatpush.bf16.msra.mxu0 %v2953
      %3337 = vmatpush.bf16.msra.mxu0 %v2952
      %3338 = vmatpush.bf16.msra.mxu0 %v2951
      %3339 = vmatpush.bf16.msra.mxu0 %v2950
      %3340 = vmatpush.bf16.msra.mxu0 %v2949
      %3341 = vmatpush.bf16.msra.mxu0 %v2948
      %3342 = vmatmul.bf16.gmra.mxu0 %v1645
      %v3343 = vpop.f32.mrf.mxu0
      %v3344 = vadd.f32 %v3215, %v3343
      %v3345 = vpop.f32.mrf.mxu0
      %v3346 = vadd.f32 %v3217, %v3345
      %3347 = vmatmul.bf16.gmra.mxu0 %v1647
      %v3348 = vpop.f32.mrf.mxu0
      %v3349 = vadd.f32 %v3220, %v3348
      %v3350 = vpop.f32.mrf.mxu0
      %v3351 = vadd.f32 %v3222, %v3350
      %3352 = vmatmul.bf16.gmra.mxu0 %v1649
      %v3353 = vpop.f32.mrf.mxu0
      %v3354 = vadd.f32 %v3225, %v3353
      %v3355 = vpop.f32.mrf.mxu0
      %v3356 = vadd.f32 %v3227, %v3355
      %3357 = vmatmul.bf16.gmra.mxu0 %v1651
      %v3358 = vpop.f32.mrf.mxu0
      %v3359 = vadd.f32 %v3230, %v3358
      %v3360 = vpop.f32.mrf.mxu0
      %v3361 = vadd.f32 %v3232, %v3360
      %3362 = vmatmul.bf16.gmra.mxu0 %v1653
      %v3363 = vpop.f32.mrf.mxu0
      %v3364 = vadd.f32 %v3235, %v3363
      %v3365 = vpop.f32.mrf.mxu0
      %v3366 = vadd.f32 %v3237, %v3365
      %3367 = vmatmul.bf16.gmra.mxu0 %v1655
      %v3368 = vpop.f32.mrf.mxu0
      %v3369 = vadd.f32 %v3240, %v3368
      %v3370 = vpop.f32.mrf.mxu0
      %v3371 = vadd.f32 %v3242, %v3370
      %3372 = vmatmul.bf16.gmra.mxu0 %v1657
      %v3373 = vpop.f32.mrf.mxu0
      %v3374 = vadd.f32 %v3245, %v3373
      %v3375 = vpop.f32.mrf.mxu0
      %v3376 = vadd.f32 %v3247, %v3375
      %3377 = vmatmul.bf16.gmra.mxu0 %v1659
      %v3378 = vpop.f32.mrf.mxu0
      %v3379 = vadd.f32 %v3250, %v3378
      %v3380 = vpop.f32.mrf.mxu0
      %v3381 = vadd.f32 %v3252, %v3380
      %3382 = vmatmul.bf16.gmra.mxu0 %v1661
      %v3383 = vpop.f32.mrf.mxu0
      %v3384 = vadd.f32 %v3255, %v3383
      %v3385 = vpop.f32.mrf.mxu0
      %v3386 = vadd.f32 %v3257, %v3385
      %3387 = vmatmul.bf16.gmra.mxu0 %v1663
      %v3388 = vpop.f32.mrf.mxu0
      %v3389 = vadd.f32 %v3260, %v3388
      %v3390 = vpop.f32.mrf.mxu0
      %v3391 = vadd.f32 %v3262, %v3390
      %3392 = vmatmul.bf16.gmra.mxu0 %v1665
      %v3393 = vpop.f32.mrf.mxu0
      %v3394 = vadd.f32 %v3265, %v3393
      %v3395 = vpop.f32.mrf.mxu0
      %v3396 = vadd.f32 %v3267, %v3395
      %3397 = vmatmul.bf16.gmra.mxu0 %v1667
      %v3398 = vpop.f32.mrf.mxu0
      %v3399 = vadd.f32 %v3270, %v3398
      %v3400 = vpop.f32.mrf.mxu0
      %v3401 = vadd.f32 %v3272, %v3400
      %3402 = vmatmul.bf16.gmra.mxu0 %v1669
      %v3403 = vpop.f32.mrf.mxu0
      %v3404 = vadd.f32 %v3275, %v3403
      %v3405 = vpop.f32.mrf.mxu0
      %v3406 = vadd.f32 %v3277, %v3405
      %3407 = vmatmul.bf16.gmra.mxu0 %v1671
      %v3408 = vpop.f32.mrf.mxu0
      %v3409 = vadd.f32 %v3280, %v3408
      %v3410 = vpop.f32.mrf.mxu0
      %v3411 = vadd.f32 %v3282, %v3410
      %3412 = vmatmul.bf16.gmra.mxu0 %v1673
      %v3413 = vpop.f32.mrf.mxu0
      %v3414 = vadd.f32 %v3285, %v3413
      %v3415 = vpop.f32.mrf.mxu0
      %v3416 = vadd.f32 %v3287, %v3415
      %3417 = vmatmul.bf16.gmra.mxu0 %v1675
      %v3418 = vpop.f32.mrf.mxu0
      %v3419 = vadd.f32 %v3290, %v3418
      %v3420 = vpop.f32.mrf.mxu0
      %v3421 = vadd.f32 %v3292, %v3420
      %3422 = vmatmul.bf16.gmra.mxu0 %v1677
      %v3423 = vpop.f32.mrf.mxu0
      %v3424 = vadd.f32 %v3295, %v3423
      %v3425 = vpop.f32.mrf.mxu0
      %v3426 = vadd.f32 %v3297, %v3425
      %3427 = vmatmul.bf16.gmra.mxu0 %v1679
      %v3428 = vpop.f32.mrf.mxu0
      %v3429 = vadd.f32 %v3300, %v3428
      %v3430 = vpop.f32.mrf.mxu0
      %v3431 = vadd.f32 %v3302, %v3430
      %3432 = vmatmul.bf16.gmra.mxu0 %v1681
      %v3433 = vpop.f32.mrf.mxu0
      %v3434 = vadd.f32 %v3305, %v3433
      %v3435 = vpop.f32.mrf.mxu0
      %v3436 = vadd.f32 %v3307, %v3435
      %3437 = vmatmul.bf16.gmra.mxu0 %v1683
      %v3438 = vpop.f32.mrf.mxu0
      %v3439 = vadd.f32 %v3310, %v3438
      %v3440 = vpop.f32.mrf.mxu0
      %v3441 = vadd.f32 %v3312, %v3440
      %3442 = vmatmul.bf16.gmra.mxu0 %v1685
      %v3443 = vpop.f32.mrf.mxu0
      %v3444 = vadd.f32 %v3315, %v3443
      %v3445 = vpop.f32.mrf.mxu0
      %v3446 = vadd.f32 %v3317, %v3445
      %3447 = vmatmul.bf16.gmra.mxu0 %v1687
      %v3448 = vpop.f32.mrf.mxu0
      %v3449 = vadd.f32 %v3320, %v3448
      %v3450 = vpop.f32.mrf.mxu0
      %v3451 = vadd.f32 %v3322, %v3450
      %3452 = vmatmul.bf16.gmra.mxu0 %v1689
      %v3453 = vpop.f32.mrf.mxu0
      %v3454 = vadd.f32 %v3325, %v3453
      %v3455 = vpop.f32.mrf.mxu0
      %v3456 = vadd.f32 %v3327, %v3455
      %3457 = vmatmul.bf16.gmra.mxu0 %v1691
      %v3458 = vpop.f32.mrf.mxu0
      %v3459 = vadd.f32 %v3330, %v3458
      %v3460 = vpop.f32.mrf.mxu0
      %v3461 = vadd.f32 %v3332, %v3460
      %3462 = vdwg.mxu0
      %3463 = vmatpush.bf16.msra.mxu0 %v2963
      %3464 = vmatpush.bf16.msra.mxu0 %v2962
      %3465 = vmatpush.bf16.msra.mxu0 %v2961
      %3466 = vmatpush.bf16.msra.mxu0 %v2960
      %3467 = vmatpush.bf16.msra.mxu0 %v2959
      %3468 = vmatpush.bf16.msra.mxu0 %v2958
      %3469 = vmatpush.bf16.msra.mxu0 %v2957
      %3470 = vmatpush.bf16.msra.mxu0 %v2956
      %3471 = vmatmul.bf16.gmra.mxu0 %v1722
      %v3472 = vpop.f32.mrf.mxu0
      %v3473 = vadd.f32 %v3344, %v3472
      %v3474 = vpop.f32.mrf.mxu0
      %v3475 = vadd.f32 %v3346, %v3474
      %3476 = vmatmul.bf16.gmra.mxu0 %v1723
      %v3477 = vpop.f32.mrf.mxu0
      %v3478 = vadd.f32 %v3349, %v3477
      %v3479 = vpop.f32.mrf.mxu0
      %v3480 = vadd.f32 %v3351, %v3479
      %3481 = vmatmul.bf16.gmra.mxu0 %v1724
      %v3482 = vpop.f32.mrf.mxu0
      %v3483 = vadd.f32 %v3354, %v3482
      %v3484 = vpop.f32.mrf.mxu0
      %v3485 = vadd.f32 %v3356, %v3484
      %3486 = vmatmul.bf16.gmra.mxu0 %v1725
      %v3487 = vpop.f32.mrf.mxu0
      %v3488 = vadd.f32 %v3359, %v3487
      %v3489 = vpop.f32.mrf.mxu0
      %v3490 = vadd.f32 %v3361, %v3489
      %3491 = vmatmul.bf16.gmra.mxu0 %v1726
      %v3492 = vpop.f32.mrf.mxu0
      %v3493 = vadd.f32 %v3364, %v3492
      %v3494 = vpop.f32.mrf.mxu0
      %v3495 = vadd.f32 %v3366, %v3494
      %3496 = vmatmul.bf16.gmra.mxu0 %v1727
      %v3497 = vpop.f32.mrf.mxu0
      %v3498 = vadd.f32 %v3369, %v3497
      %v3499 = vpop.f32.mrf.mxu0
      %v3500 = vadd.f32 %v3371, %v3499
      %3501 = vmatmul.bf16.gmra.mxu0 %v1728
      %v3502 = vpop.f32.mrf.mxu0
      %v3503 = vadd.f32 %v3374, %v3502
      %v3504 = vpop.f32.mrf.mxu0
      %v3505 = vadd.f32 %v3376, %v3504
      %3506 = vmatmul.bf16.gmra.mxu0 %v1729
      %v3507 = vpop.f32.mrf.mxu0
      %v3508 = vadd.f32 %v3379, %v3507
      %v3509 = vpop.f32.mrf.mxu0
      %v3510 = vadd.f32 %v3381, %v3509
      %3511 = vmatmul.bf16.gmra.mxu0 %v1730
      %v3512 = vpop.f32.mrf.mxu0
      %v3513 = vadd.f32 %v3384, %v3512
      %v3514 = vpop.f32.mrf.mxu0
      %v3515 = vadd.f32 %v3386, %v3514
      %3516 = vmatmul.bf16.gmra.mxu0 %v1731
      %v3517 = vpop.f32.mrf.mxu0
      %v3518 = vadd.f32 %v3389, %v3517
      %v3519 = vpop.f32.mrf.mxu0
      %v3520 = vadd.f32 %v3391, %v3519
      %3521 = vmatmul.bf16.gmra.mxu0 %v1732
      %v3522 = vpop.f32.mrf.mxu0
      %v3523 = vadd.f32 %v3394, %v3522
      %v3524 = vpop.f32.mrf.mxu0
      %v3525 = vadd.f32 %v3396, %v3524
      %3526 = vmatmul.bf16.gmra.mxu0 %v1733
      %v3527 = vpop.f32.mrf.mxu0
      %v3528 = vadd.f32 %v3399, %v3527
      %v3529 = vpop.f32.mrf.mxu0
      %v3530 = vadd.f32 %v3401, %v3529
      %3531 = vmatmul.bf16.gmra.mxu0 %v1734
      %v3532 = vpop.f32.mrf.mxu0
      %v3533 = vadd.f32 %v3404, %v3532
      %v3534 = vpop.f32.mrf.mxu0
      %v3535 = vadd.f32 %v3406, %v3534
      %3536 = vmatmul.bf16.gmra.mxu0 %v1735
      %v3537 = vpop.f32.mrf.mxu0
      %v3538 = vadd.f32 %v3409, %v3537
      %v3539 = vpop.f32.mrf.mxu0
      %v3540 = vadd.f32 %v3411, %v3539
      %3541 = vmatmul.bf16.gmra.mxu0 %v1736
      %v3542 = vpop.f32.mrf.mxu0
      %v3543 = vadd.f32 %v3414, %v3542
      %v3544 = vpop.f32.mrf.mxu0
      %v3545 = vadd.f32 %v3416, %v3544
      %3546 = vmatmul.bf16.gmra.mxu0 %v1737
      %v3547 = vpop.f32.mrf.mxu0
      %v3548 = vadd.f32 %v3419, %v3547
      %v3549 = vpop.f32.mrf.mxu0
      %v3550 = vadd.f32 %v3421, %v3549
      %3551 = vmatmul.bf16.gmra.mxu0 %v1738
      %v3552 = vpop.f32.mrf.mxu0
      %v3553 = vadd.f32 %v3424, %v3552
      %v3554 = vpop.f32.mrf.mxu0
      %v3555 = vadd.f32 %v3426, %v3554
      %3556 = vmatmul.bf16.gmra.mxu0 %v1739
      %v3557 = vpop.f32.mrf.mxu0
      %v3558 = vadd.f32 %v3429, %v3557
      %v3559 = vpop.f32.mrf.mxu0
      %v3560 = vadd.f32 %v3431, %v3559
      %3561 = vmatmul.bf16.gmra.mxu0 %v1740
      %v3562 = vpop.f32.mrf.mxu0
      %v3563 = vadd.f32 %v3434, %v3562
      %v3564 = vpop.f32.mrf.mxu0
      %v3565 = vadd.f32 %v3436, %v3564
      %3566 = vmatmul.bf16.gmra.mxu0 %v1741
      %v3567 = vpop.f32.mrf.mxu0
      %v3568 = vadd.f32 %v3439, %v3567
      %v3569 = vpop.f32.mrf.mxu0
      %v3570 = vadd.f32 %v3441, %v3569
      %3571 = vmatmul.bf16.gmra.mxu0 %v1742
      %v3572 = vpop.f32.mrf.mxu0
      %v3573 = vadd.f32 %v3444, %v3572
      %v3574 = vpop.f32.mrf.mxu0
      %v3575 = vadd.f32 %v3446, %v3574
      %3576 = vmatmul.bf16.gmra.mxu0 %v1743
      %v3577 = vpop.f32.mrf.mxu0
      %v3578 = vadd.f32 %v3449, %v3577
      %v3579 = vpop.f32.mrf.mxu0
      %v3580 = vadd.f32 %v3451, %v3579
      %3581 = vmatmul.bf16.gmra.mxu0 %v1744
      %v3582 = vpop.f32.mrf.mxu0
      %v3583 = vadd.f32 %v3454, %v3582
      %v3584 = vpop.f32.mrf.mxu0
      %v3585 = vadd.f32 %v3456, %v3584
      %3586 = vmatmul.bf16.gmra.mxu0 %v1745
      %v3587 = vpop.f32.mrf.mxu0
      %v3588 = vadd.f32 %v3459, %v3587
      %v3589 = vpop.f32.mrf.mxu0
      %v3590 = vadd.f32 %v3461, %v3589
      %3591 = vdwg.mxu0
      %3592 = vmatpush.bf16.msra.mxu0 %v2971
      %3593 = vmatpush.bf16.msra.mxu0 %v2970
      %3594 = vmatpush.bf16.msra.mxu0 %v2969
      %3595 = vmatpush.bf16.msra.mxu0 %v2968
      %3596 = vmatpush.bf16.msra.mxu0 %v2967
      %3597 = vmatpush.bf16.msra.mxu0 %v2966
      %3598 = vmatpush.bf16.msra.mxu0 %v2965
      %3599 = vmatpush.bf16.msra.mxu0 %v2964
      %3600 = vmatmul.bf16.gmra.mxu0 %v1784
      %v3601 = vpop.f32.mrf.mxu0
      %v3602 = vadd.f32 %v3473, %v3601
      %v3603 = vpop.f32.mrf.mxu0
      %v3604 = vadd.f32 %v3475, %v3603
      %3605 = vmatmul.bf16.gmra.mxu0 %v1792
      %v3606 = vpop.f32.mrf.mxu0
      %v3607 = vadd.f32 %v3478, %v3606
      %v3608 = vpop.f32.mrf.mxu0
      %v3609 = vadd.f32 %v3480, %v3608
      %3610 = vmatmul.bf16.gmra.mxu0 %v1800
      %v3611 = vpop.f32.mrf.mxu0
      %v3612 = vadd.f32 %v3483, %v3611
      %v3613 = vpop.f32.mrf.mxu0
      %v3614 = vadd.f32 %v3485, %v3613
      %3615 = vmatmul.bf16.gmra.mxu0 %v1808
      %v3616 = vpop.f32.mrf.mxu0
      %v3617 = vadd.f32 %v3488, %v3616
      %v3618 = vpop.f32.mrf.mxu0
      %v3619 = vadd.f32 %v3490, %v3618
      %3620 = vmatmul.bf16.gmra.mxu0 %v1816
      %v3621 = vpop.f32.mrf.mxu0
      %v3622 = vadd.f32 %v3493, %v3621
      %v3623 = vpop.f32.mrf.mxu0
      %v3624 = vadd.f32 %v3495, %v3623
      %3625 = vmatmul.bf16.gmra.mxu0 %v1824
      %v3626 = vpop.f32.mrf.mxu0
      %v3627 = vadd.f32 %v3498, %v3626
      %v3628 = vpop.f32.mrf.mxu0
      %v3629 = vadd.f32 %v3500, %v3628
      %3630 = vmatmul.bf16.gmra.mxu0 %v1832
      %v3631 = vpop.f32.mrf.mxu0
      %v3632 = vadd.f32 %v3503, %v3631
      %v3633 = vpop.f32.mrf.mxu0
      %v3634 = vadd.f32 %v3505, %v3633
      %3635 = vmatmul.bf16.gmra.mxu0 %v1840
      %v3636 = vpop.f32.mrf.mxu0
      %v3637 = vadd.f32 %v3508, %v3636
      %v3638 = vpop.f32.mrf.mxu0
      %v3639 = vadd.f32 %v3510, %v3638
      %3640 = vmatmul.bf16.gmra.mxu0 %v1848
      %v3641 = vpop.f32.mrf.mxu0
      %v3642 = vadd.f32 %v3513, %v3641
      %v3643 = vpop.f32.mrf.mxu0
      %v3644 = vadd.f32 %v3515, %v3643
      %3645 = vmatmul.bf16.gmra.mxu0 %v1856
      %v3646 = vpop.f32.mrf.mxu0
      %v3647 = vadd.f32 %v3518, %v3646
      %v3648 = vpop.f32.mrf.mxu0
      %v3649 = vadd.f32 %v3520, %v3648
      %3650 = vmatmul.bf16.gmra.mxu0 %v1864
      %v3651 = vpop.f32.mrf.mxu0
      %v3652 = vadd.f32 %v3523, %v3651
      %v3653 = vpop.f32.mrf.mxu0
      %v3654 = vadd.f32 %v3525, %v3653
      %3655 = vmatmul.bf16.gmra.mxu0 %v1872
      %v3656 = vpop.f32.mrf.mxu0
      %v3657 = vadd.f32 %v3528, %v3656
      %v3658 = vpop.f32.mrf.mxu0
      %v3659 = vadd.f32 %v3530, %v3658
      %3660 = vmatmul.bf16.gmra.mxu0 %v1880
      %v3661 = vpop.f32.mrf.mxu0
      %v3662 = vadd.f32 %v3533, %v3661
      %v3663 = vpop.f32.mrf.mxu0
      %v3664 = vadd.f32 %v3535, %v3663
      %3665 = vmatmul.bf16.gmra.mxu0 %v1888
      %v3666 = vpop.f32.mrf.mxu0
      %v3667 = vadd.f32 %v3538, %v3666
      %v3668 = vpop.f32.mrf.mxu0
      %v3669 = vadd.f32 %v3540, %v3668
      %3670 = vmatmul.bf16.gmra.mxu0 %v1896
      %v3671 = vpop.f32.mrf.mxu0
      %v3672 = vadd.f32 %v3543, %v3671
      %v3673 = vpop.f32.mrf.mxu0
      %v3674 = vadd.f32 %v3545, %v3673
      %3675 = vmatmul.bf16.gmra.mxu0 %v1904
      %v3676 = vpop.f32.mrf.mxu0
      %v3677 = vadd.f32 %v3548, %v3676
      %v3678 = vpop.f32.mrf.mxu0
      %v3679 = vadd.f32 %v3550, %v3678
      %3680 = vmatmul.bf16.gmra.mxu0 %v1912
      %v3681 = vpop.f32.mrf.mxu0
      %v3682 = vadd.f32 %v3553, %v3681
      %v3683 = vpop.f32.mrf.mxu0
      %v3684 = vadd.f32 %v3555, %v3683
      %3685 = vmatmul.bf16.gmra.mxu0 %v1920
      %v3686 = vpop.f32.mrf.mxu0
      %v3687 = vadd.f32 %v3558, %v3686
      %v3688 = vpop.f32.mrf.mxu0
      %v3689 = vadd.f32 %v3560, %v3688
      %3690 = vmatmul.bf16.gmra.mxu0 %v1928
      %v3691 = vpop.f32.mrf.mxu0
      %v3692 = vadd.f32 %v3563, %v3691
      %v3693 = vpop.f32.mrf.mxu0
      %v3694 = vadd.f32 %v3565, %v3693
      %3695 = vmatmul.bf16.gmra.mxu0 %v1936
      %v3696 = vpop.f32.mrf.mxu0
      %v3697 = vadd.f32 %v3568, %v3696
      %v3698 = vpop.f32.mrf.mxu0
      %v3699 = vadd.f32 %v3570, %v3698
      %3700 = vmatmul.bf16.gmra.mxu0 %v1944
      %v3701 = vpop.f32.mrf.mxu0
      %v3702 = vadd.f32 %v3573, %v3701
      %v3703 = vpop.f32.mrf.mxu0
      %v3704 = vadd.f32 %v3575, %v3703
      %3705 = vmatmul.bf16.gmra.mxu0 %v1952
      %v3706 = vpop.f32.mrf.mxu0
      %v3707 = vadd.f32 %v3578, %v3706
      %v3708 = vpop.f32.mrf.mxu0
      %v3709 = vadd.f32 %v3580, %v3708
      %3710 = vmatmul.bf16.gmra.mxu0 %v1960
      %v3711 = vpop.f32.mrf.mxu0
      %v3712 = vadd.f32 %v3583, %v3711
      %v3713 = vpop.f32.mrf.mxu0
      %v3714 = vadd.f32 %v3585, %v3713
      %3715 = vmatmul.bf16.gmra.mxu0 %v1968
      %v3716 = vpop.f32.mrf.mxu0
      %v3717 = vadd.f32 %v3588, %v3716
      %v3718 = vpop.f32.mrf.mxu0
      %v3719 = vadd.f32 %v3590, %v3718
      %3720 = vdwg.mxu0
      %3721 = vmatpush.bf16.msra.mxu0 %v2979
      %3722 = vmatpush.bf16.msra.mxu0 %v2978
      %3723 = vmatpush.bf16.msra.mxu0 %v2977
      %3724 = vmatpush.bf16.msra.mxu0 %v2976
      %3725 = vmatpush.bf16.msra.mxu0 %v2975
      %3726 = vmatpush.bf16.msra.mxu0 %v2974
      %3727 = vmatpush.bf16.msra.mxu0 %v2973
      %3728 = vmatpush.bf16.msra.mxu0 %v2972
      %3729 = vmatmul.bf16.gmra.mxu0 %v1998
      %v3730 = vpop.f32.mrf.mxu0
      %v3731 = vadd.f32 %v3602, %v3730
      %v3732 = vpop.f32.mrf.mxu0
      %v3733 = vadd.f32 %v3604, %v3732
      %3734 = vmatmul.bf16.gmra.mxu0 %v2000
      %v3735 = vpop.f32.mrf.mxu0
      %v3736 = vadd.f32 %v3607, %v3735
      %v3737 = vpop.f32.mrf.mxu0
      %v3738 = vadd.f32 %v3609, %v3737
      %3739 = vmatmul.bf16.gmra.mxu0 %v2002
      %v3740 = vpop.f32.mrf.mxu0
      %v3741 = vadd.f32 %v3612, %v3740
      %v3742 = vpop.f32.mrf.mxu0
      %v3743 = vadd.f32 %v3614, %v3742
      %3744 = vmatmul.bf16.gmra.mxu0 %v2004
      %v3745 = vpop.f32.mrf.mxu0
      %v3746 = vadd.f32 %v3617, %v3745
      %v3747 = vpop.f32.mrf.mxu0
      %v3748 = vadd.f32 %v3619, %v3747
      %3749 = vmatmul.bf16.gmra.mxu0 %v2006
      %v3750 = vpop.f32.mrf.mxu0
      %v3751 = vadd.f32 %v3622, %v3750
      %v3752 = vpop.f32.mrf.mxu0
      %v3753 = vadd.f32 %v3624, %v3752
      %3754 = vmatmul.bf16.gmra.mxu0 %v2008
      %v3755 = vpop.f32.mrf.mxu0
      %v3756 = vadd.f32 %v3627, %v3755
      %v3757 = vpop.f32.mrf.mxu0
      %v3758 = vadd.f32 %v3629, %v3757
      %3759 = vmatmul.bf16.gmra.mxu0 %v2010
      %v3760 = vpop.f32.mrf.mxu0
      %v3761 = vadd.f32 %v3632, %v3760
      %v3762 = vpop.f32.mrf.mxu0
      %v3763 = vadd.f32 %v3634, %v3762
      %3764 = vmatmul.bf16.gmra.mxu0 %v2012
      %v3765 = vpop.f32.mrf.mxu0
      %v3766 = vadd.f32 %v3637, %v3765
      %v3767 = vpop.f32.mrf.mxu0
      %v3768 = vadd.f32 %v3639, %v3767
      %3769 = vmatmul.bf16.gmra.mxu0 %v2014
      %v3770 = vpop.f32.mrf.mxu0
      %v3771 = vadd.f32 %v3642, %v3770
      %v3772 = vpop.f32.mrf.mxu0
      %v3773 = vadd.f32 %v3644, %v3772
      %3774 = vmatmul.bf16.gmra.mxu0 %v2016
      %v3775 = vpop.f32.mrf.mxu0
      %v3776 = vadd.f32 %v3647, %v3775
      %v3777 = vpop.f32.mrf.mxu0
      %v3778 = vadd.f32 %v3649, %v3777
      %3779 = vmatmul.bf16.gmra.mxu0 %v2018
      %v3780 = vpop.f32.mrf.mxu0
      %v3781 = vadd.f32 %v3652, %v3780
      %v3782 = vpop.f32.mrf.mxu0
      %v3783 = vadd.f32 %v3654, %v3782
      %3784 = vmatmul.bf16.gmra.mxu0 %v2020
      %v3785 = vpop.f32.mrf.mxu0
      %v3786 = vadd.f32 %v3657, %v3785
      %v3787 = vpop.f32.mrf.mxu0
      %v3788 = vadd.f32 %v3659, %v3787
      %3789 = vmatmul.bf16.gmra.mxu0 %v2022
      %v3790 = vpop.f32.mrf.mxu0
      %v3791 = vadd.f32 %v3662, %v3790
      %v3792 = vpop.f32.mrf.mxu0
      %v3793 = vadd.f32 %v3664, %v3792
      %3794 = vmatmul.bf16.gmra.mxu0 %v2024
      %v3795 = vpop.f32.mrf.mxu0
      %v3796 = vadd.f32 %v3667, %v3795
      %v3797 = vpop.f32.mrf.mxu0
      %v3798 = vadd.f32 %v3669, %v3797
      %3799 = vmatmul.bf16.gmra.mxu0 %v2026
      %v3800 = vpop.f32.mrf.mxu0
      %v3801 = vadd.f32 %v3672, %v3800
      %v3802 = vpop.f32.mrf.mxu0
      %v3803 = vadd.f32 %v3674, %v3802
      %3804 = vmatmul.bf16.gmra.mxu0 %v2028
      %v3805 = vpop.f32.mrf.mxu0
      %v3806 = vadd.f32 %v3677, %v3805
      %v3807 = vpop.f32.mrf.mxu0
      %v3808 = vadd.f32 %v3679, %v3807
      %3809 = vmatmul.bf16.gmra.mxu0 %v2030
      %v3810 = vpop.f32.mrf.mxu0
      %v3811 = vadd.f32 %v3682, %v3810
      %v3812 = vpop.f32.mrf.mxu0
      %v3813 = vadd.f32 %v3684, %v3812
      %3814 = vmatmul.bf16.gmra.mxu0 %v2032
      %v3815 = vpop.f32.mrf.mxu0
      %v3816 = vadd.f32 %v3687, %v3815
      %v3817 = vpop.f32.mrf.mxu0
      %v3818 = vadd.f32 %v3689, %v3817
      %3819 = vmatmul.bf16.gmra.mxu0 %v2034
      %v3820 = vpop.f32.mrf.mxu0
      %v3821 = vadd.f32 %v3692, %v3820
      %v3822 = vpop.f32.mrf.mxu0
      %v3823 = vadd.f32 %v3694, %v3822
      %3824 = vmatmul.bf16.gmra.mxu0 %v2036
      %v3825 = vpop.f32.mrf.mxu0
      %v3826 = vadd.f32 %v3697, %v3825
      %v3827 = vpop.f32.mrf.mxu0
      %v3828 = vadd.f32 %v3699, %v3827
      %3829 = vmatmul.bf16.gmra.mxu0 %v2038
      %v3830 = vpop.f32.mrf.mxu0
      %v3831 = vadd.f32 %v3702, %v3830
      %v3832 = vpop.f32.mrf.mxu0
      %v3833 = vadd.f32 %v3704, %v3832
      %3834 = vmatmul.bf16.gmra.mxu0 %v2040
      %v3835 = vpop.f32.mrf.mxu0
      %v3836 = vadd.f32 %v3707, %v3835
      %v3837 = vpop.f32.mrf.mxu0
      %v3838 = vadd.f32 %v3709, %v3837
      %3839 = vmatmul.bf16.gmra.mxu0 %v2042
      %v3840 = vpop.f32.mrf.mxu0
      %v3841 = vadd.f32 %v3712, %v3840
      %v3842 = vpop.f32.mrf.mxu0
      %v3843 = vadd.f32 %v3714, %v3842
      %3844 = vmatmul.bf16.gmra.mxu0 %v2044
      %v3845 = vpop.f32.mrf.mxu0
      %v3846 = vadd.f32 %v3717, %v3845
      %v3847 = vpop.f32.mrf.mxu0
      %v3848 = vadd.f32 %v3719, %v3847
      %3849 = vdwg.mxu0
      %3850 = vmatpush.bf16.msra.mxu0 %v2987
      %3851 = vmatpush.bf16.msra.mxu0 %v2986
      %3852 = vmatpush.bf16.msra.mxu0 %v2985
      %3853 = vmatpush.bf16.msra.mxu0 %v2984
      %3854 = vmatpush.bf16.msra.mxu0 %v2983
      %3855 = vmatpush.bf16.msra.mxu0 %v2982
      %3856 = vmatpush.bf16.msra.mxu0 %v2981
      %3857 = vmatpush.bf16.msra.mxu0 %v2980
      %3858 = vmatmul.bf16.gmra.mxu0 %v1370
      %v3859 = vpop.f32.mrf.mxu0
      %v3860 = vadd.f32 %v3731, %v3859
      %v3861 = vpop.f32.mrf.mxu0
      %v3862 = vadd.f32 %v3733, %v3861
      %3863 = vmatmul.bf16.gmra.mxu0 %v1371
      %v3864 = vpop.f32.mrf.mxu0
      %v3865 = vadd.f32 %v3736, %v3864
      %v3866 = vpop.f32.mrf.mxu0
      %v3867 = vadd.f32 %v3738, %v3866
      %3868 = vmatmul.bf16.gmra.mxu0 %v1372
      %v3869 = vpop.f32.mrf.mxu0
      %v3870 = vadd.f32 %v3741, %v3869
      %v3871 = vpop.f32.mrf.mxu0
      %v3872 = vadd.f32 %v3743, %v3871
      %3873 = vmatmul.bf16.gmra.mxu0 %v1373
      %v3874 = vpop.f32.mrf.mxu0
      %v3875 = vadd.f32 %v3746, %v3874
      %v3876 = vpop.f32.mrf.mxu0
      %v3877 = vadd.f32 %v3748, %v3876
      %3878 = vmatmul.bf16.gmra.mxu0 %v1374
      %v3879 = vpop.f32.mrf.mxu0
      %v3880 = vadd.f32 %v3751, %v3879
      %v3881 = vpop.f32.mrf.mxu0
      %v3882 = vadd.f32 %v3753, %v3881
      %3883 = vmatmul.bf16.gmra.mxu0 %v1375
      %v3884 = vpop.f32.mrf.mxu0
      %v3885 = vadd.f32 %v3756, %v3884
      %v3886 = vpop.f32.mrf.mxu0
      %v3887 = vadd.f32 %v3758, %v3886
      %3888 = vmatmul.bf16.gmra.mxu0 %v1376
      %v3889 = vpop.f32.mrf.mxu0
      %v3890 = vadd.f32 %v3761, %v3889
      %v3891 = vpop.f32.mrf.mxu0
      %v3892 = vadd.f32 %v3763, %v3891
      %3893 = vmatmul.bf16.gmra.mxu0 %v1377
      %v3894 = vpop.f32.mrf.mxu0
      %v3895 = vadd.f32 %v3766, %v3894
      %v3896 = vpop.f32.mrf.mxu0
      %v3897 = vadd.f32 %v3768, %v3896
      %3898 = vmatmul.bf16.gmra.mxu0 %v1378
      %v3899 = vpop.f32.mrf.mxu0
      %v3900 = vadd.f32 %v3771, %v3899
      %v3901 = vpop.f32.mrf.mxu0
      %v3902 = vadd.f32 %v3773, %v3901
      %3903 = vmatmul.bf16.gmra.mxu0 %v1379
      %v3904 = vpop.f32.mrf.mxu0
      %v3905 = vadd.f32 %v3776, %v3904
      %v3906 = vpop.f32.mrf.mxu0
      %v3907 = vadd.f32 %v3778, %v3906
      %3908 = vmatmul.bf16.gmra.mxu0 %v1380
      %v3909 = vpop.f32.mrf.mxu0
      %v3910 = vadd.f32 %v3781, %v3909
      %v3911 = vpop.f32.mrf.mxu0
      %v3912 = vadd.f32 %v3783, %v3911
      %3913 = vmatmul.bf16.gmra.mxu0 %v1381
      %v3914 = vpop.f32.mrf.mxu0
      %v3915 = vadd.f32 %v3786, %v3914
      %v3916 = vpop.f32.mrf.mxu0
      %v3917 = vadd.f32 %v3788, %v3916
      %3918 = vmatmul.bf16.gmra.mxu0 %v1382
      %v3919 = vpop.f32.mrf.mxu0
      %v3920 = vadd.f32 %v3791, %v3919
      %v3921 = vpop.f32.mrf.mxu0
      %v3922 = vadd.f32 %v3793, %v3921
      %3923 = vmatmul.bf16.gmra.mxu0 %v1383
      %v3924 = vpop.f32.mrf.mxu0
      %v3925 = vadd.f32 %v3796, %v3924
      %v3926 = vpop.f32.mrf.mxu0
      %v3927 = vadd.f32 %v3798, %v3926
      %3928 = vmatmul.bf16.gmra.mxu0 %v1384
      %v3929 = vpop.f32.mrf.mxu0
      %v3930 = vadd.f32 %v3801, %v3929
      %v3931 = vpop.f32.mrf.mxu0
      %v3932 = vadd.f32 %v3803, %v3931
      %3933 = vmatmul.bf16.gmra.mxu0 %v1385
      %v3934 = vpop.f32.mrf.mxu0
      %v3935 = vadd.f32 %v3806, %v3934
      %v3936 = vpop.f32.mrf.mxu0
      %v3937 = vadd.f32 %v3808, %v3936
      %3938 = vmatmul.bf16.gmra.mxu0 %v1386
      %v3939 = vpop.f32.mrf.mxu0
      %v3940 = vadd.f32 %v3811, %v3939
      %v3941 = vpop.f32.mrf.mxu0
      %v3942 = vadd.f32 %v3813, %v3941
      %3943 = vmatmul.bf16.gmra.mxu0 %v1387
      %v3944 = vpop.f32.mrf.mxu0
      %v3945 = vadd.f32 %v3816, %v3944
      %v3946 = vpop.f32.mrf.mxu0
      %v3947 = vadd.f32 %v3818, %v3946
      %3948 = vmatmul.bf16.gmra.mxu0 %v1388
      %v3949 = vpop.f32.mrf.mxu0
      %v3950 = vadd.f32 %v3821, %v3949
      %v3951 = vpop.f32.mrf.mxu0
      %v3952 = vadd.f32 %v3823, %v3951
      %3953 = vmatmul.bf16.gmra.mxu0 %v1389
      %v3954 = vpop.f32.mrf.mxu0
      %v3955 = vadd.f32 %v3826, %v3954
      %v3956 = vpop.f32.mrf.mxu0
      %v3957 = vadd.f32 %v3828, %v3956
      %3958 = vmatmul.bf16.gmra.mxu0 %v1390
      %v3959 = vpop.f32.mrf.mxu0
      %v3960 = vadd.f32 %v3831, %v3959
      %v3961 = vpop.f32.mrf.mxu0
      %v3962 = vadd.f32 %v3833, %v3961
      %3963 = vmatmul.bf16.gmra.mxu0 %v2075
      %v3964 = vpop.f32.mrf.mxu0
      %v3965 = vadd.f32 %v3836, %v3964
      %v3966 = vpop.f32.mrf.mxu0
      %v3967 = vadd.f32 %v3838, %v3966
      %3968 = vmatmul.bf16.gmra.mxu0 %v2076
      %v3969 = vpop.f32.mrf.mxu0
      %v3970 = vadd.f32 %v3841, %v3969
      %v3971 = vpop.f32.mrf.mxu0
      %v3972 = vadd.f32 %v3843, %v3971
      %3973 = vmatmul.bf16.gmra.mxu0 %v2077
      %v3974 = vpop.f32.mrf.mxu0
      %v3975 = vadd.f32 %v3846, %v3974
      %v3976 = vpop.f32.mrf.mxu0
      %v3977 = vadd.f32 %v3848, %v3976
      %3978 = vdwg.mxu0
      %3979 = vmatpush.bf16.msra.mxu0 %v2995
      %3980 = vmatpush.bf16.msra.mxu0 %v2994
      %3981 = vmatpush.bf16.msra.mxu0 %v2993
      %3982 = vmatpush.bf16.msra.mxu0 %v2992
      %3983 = vmatpush.bf16.msra.mxu0 %v2991
      %3984 = vmatpush.bf16.msra.mxu0 %v2990
      %3985 = vmatpush.bf16.msra.mxu0 %v2989
      %3986 = vmatpush.bf16.msra.mxu0 %v2988
      %3987 = vmatmul.bf16.gmra.mxu0 %v2215
      %v3988 = vpop.f32.mrf.mxu0
      %v3989 = vadd.f32 %v3860, %v3988
      %v3990 = vpop.f32.mrf.mxu0
      %v3991 = vadd.f32 %v3862, %v3990
      %3992 = vmatmul.bf16.gmra.mxu0 %v2223
      %v3993 = vpop.f32.mrf.mxu0
      %v3994 = vadd.f32 %v3865, %v3993
      %v3995 = vpop.f32.mrf.mxu0
      %v3996 = vadd.f32 %v3867, %v3995
      %3997 = vmatmul.bf16.gmra.mxu0 %v2231
      %v3998 = vpop.f32.mrf.mxu0
      %v3999 = vadd.f32 %v3870, %v3998
      %v4000 = vpop.f32.mrf.mxu0
      %v4001 = vadd.f32 %v3872, %v4000
      %4002 = vmatmul.bf16.gmra.mxu0 %v2239
      %v4003 = vpop.f32.mrf.mxu0
      %v4004 = vadd.f32 %v3875, %v4003
      %v4005 = vpop.f32.mrf.mxu0
      %v4006 = vadd.f32 %v3877, %v4005
      %4007 = vmatmul.bf16.gmra.mxu0 %v2247
      %v4008 = vpop.f32.mrf.mxu0
      %v4009 = vadd.f32 %v3880, %v4008
      %v4010 = vpop.f32.mrf.mxu0
      %v4011 = vadd.f32 %v3882, %v4010
      %4012 = vmatmul.bf16.gmra.mxu0 %v2255
      %v4013 = vpop.f32.mrf.mxu0
      %v4014 = vadd.f32 %v3885, %v4013
      %v4015 = vpop.f32.mrf.mxu0
      %v4016 = vadd.f32 %v3887, %v4015
      %4017 = vmatmul.bf16.gmra.mxu0 %v2263
      %v4018 = vpop.f32.mrf.mxu0
      %v4019 = vadd.f32 %v3890, %v4018
      %v4020 = vpop.f32.mrf.mxu0
      %v4021 = vadd.f32 %v3892, %v4020
      %4022 = vmatmul.bf16.gmra.mxu0 %v2271
      %v4023 = vpop.f32.mrf.mxu0
      %v4024 = vadd.f32 %v3895, %v4023
      %v4025 = vpop.f32.mrf.mxu0
      %v4026 = vadd.f32 %v3897, %v4025
      %4027 = vmatmul.bf16.gmra.mxu0 %v2279
      %v4028 = vpop.f32.mrf.mxu0
      %v4029 = vadd.f32 %v3900, %v4028
      %v4030 = vpop.f32.mrf.mxu0
      %v4031 = vadd.f32 %v3902, %v4030
      %4032 = vmatmul.bf16.gmra.mxu0 %v2287
      %v4033 = vpop.f32.mrf.mxu0
      %v4034 = vadd.f32 %v3905, %v4033
      %v4035 = vpop.f32.mrf.mxu0
      %v4036 = vadd.f32 %v3907, %v4035
      %4037 = vmatmul.bf16.gmra.mxu0 %v2295
      %v4038 = vpop.f32.mrf.mxu0
      %v4039 = vadd.f32 %v3910, %v4038
      %v4040 = vpop.f32.mrf.mxu0
      %v4041 = vadd.f32 %v3912, %v4040
      %4042 = vmatmul.bf16.gmra.mxu0 %v2303
      %v4043 = vpop.f32.mrf.mxu0
      %v4044 = vadd.f32 %v3915, %v4043
      %v4045 = vpop.f32.mrf.mxu0
      %v4046 = vadd.f32 %v3917, %v4045
      %4047 = vmatmul.bf16.gmra.mxu0 %v2311
      %v4048 = vpop.f32.mrf.mxu0
      %v4049 = vadd.f32 %v3920, %v4048
      %v4050 = vpop.f32.mrf.mxu0
      %v4051 = vadd.f32 %v3922, %v4050
      %4052 = vmatmul.bf16.gmra.mxu0 %v2319
      %v4053 = vpop.f32.mrf.mxu0
      %v4054 = vadd.f32 %v3925, %v4053
      %v4055 = vpop.f32.mrf.mxu0
      %v4056 = vadd.f32 %v3927, %v4055
      %4057 = vmatmul.bf16.gmra.mxu0 %v2327
      %v4058 = vpop.f32.mrf.mxu0
      %v4059 = vadd.f32 %v3930, %v4058
      %v4060 = vpop.f32.mrf.mxu0
      %v4061 = vadd.f32 %v3932, %v4060
      %4062 = vmatmul.bf16.gmra.mxu0 %v2335
      %v4063 = vpop.f32.mrf.mxu0
      %v4064 = vadd.f32 %v3935, %v4063
      %v4065 = vpop.f32.mrf.mxu0
      %v4066 = vadd.f32 %v3937, %v4065
      %4067 = vmatmul.bf16.gmra.mxu0 %v2343
      %v4068 = vpop.f32.mrf.mxu0
      %v4069 = vadd.f32 %v3940, %v4068
      %v4070 = vpop.f32.mrf.mxu0
      %v4071 = vadd.f32 %v3942, %v4070
      %4072 = vmatmul.bf16.gmra.mxu0 %v2351
      %v4073 = vpop.f32.mrf.mxu0
      %v4074 = vadd.f32 %v3945, %v4073
      %v4075 = vpop.f32.mrf.mxu0
      %v4076 = vadd.f32 %v3947, %v4075
      %4077 = vmatmul.bf16.gmra.mxu0 %v2359
      %v4078 = vpop.f32.mrf.mxu0
      %v4079 = vadd.f32 %v3950, %v4078
      %v4080 = vpop.f32.mrf.mxu0
      %v4081 = vadd.f32 %v3952, %v4080
      %4082 = vmatmul.bf16.gmra.mxu0 %v2367
      %v4083 = vpop.f32.mrf.mxu0
      %v4084 = vadd.f32 %v3955, %v4083
      %v4085 = vpop.f32.mrf.mxu0
      %v4086 = vadd.f32 %v3957, %v4085
      %4087 = vmatmul.bf16.gmra.mxu0 %v2375
      %v4088 = vpop.f32.mrf.mxu0
      %v4089 = vadd.f32 %v3960, %v4088
      %v4090 = vpop.f32.mrf.mxu0
      %v4091 = vadd.f32 %v3962, %v4090
      %4092 = vmatmul.bf16.gmra.mxu0 %v2383
      %v4093 = vpop.f32.mrf.mxu0
      %v4094 = vadd.f32 %v3965, %v4093
      %v4095 = vpop.f32.mrf.mxu0
      %v4096 = vadd.f32 %v3967, %v4095
      %4097 = vmatmul.bf16.gmra.mxu0 %v2391
      %v4098 = vpop.f32.mrf.mxu0
      %v4099 = vadd.f32 %v3970, %v4098
      %v4100 = vpop.f32.mrf.mxu0
      %v4101 = vadd.f32 %v3972, %v4100
      %4102 = vmatmul.bf16.gmra.mxu0 %v2399
      %v4103 = vpop.f32.mrf.mxu0
      %v4104 = vadd.f32 %v3975, %v4103
      %v4105 = vpop.f32.mrf.mxu0
      %v4106 = vadd.f32 %v3977, %v4105
      %4107 = vdwg.mxu0
      %4108 = vmatpush.bf16.msra.mxu0 %v3003
      %4109 = vmatpush.bf16.msra.mxu0 %v3002
      %4110 = vmatpush.bf16.msra.mxu0 %v3001
      %4111 = vmatpush.bf16.msra.mxu0 %v3000
      %4112 = vmatpush.bf16.msra.mxu0 %v2999
      %4113 = vmatpush.bf16.msra.mxu0 %v2998
      %4114 = vmatpush.bf16.msra.mxu0 %v2997
      %4115 = vmatpush.bf16.msra.mxu0 %v2996
      %4116 = vmatmul.bf16.gmra.mxu0 %v2429
      %v4117 = vpop.f32.mrf.mxu0
      %v4118 = vadd.f32 %v3989, %v4117
      %v4119 = vpop.f32.mrf.mxu0
      %v4120 = vadd.f32 %v3991, %v4119
      %4121 = vmatmul.bf16.gmra.mxu0 %v2431
      %v4122 = vpop.f32.mrf.mxu0
      %v4123 = vadd.f32 %v3994, %v4122
      %v4124 = vpop.f32.mrf.mxu0
      %v4125 = vadd.f32 %v3996, %v4124
      %4126 = vmatmul.bf16.gmra.mxu0 %v2433
      %v4127 = vpop.f32.mrf.mxu0
      %v4128 = vadd.f32 %v3999, %v4127
      %v4129 = vpop.f32.mrf.mxu0
      %v4130 = vadd.f32 %v4001, %v4129
      %4131 = vmatmul.bf16.gmra.mxu0 %v2435
      %v4132 = vpop.f32.mrf.mxu0
      %v4133 = vadd.f32 %v4004, %v4132
      %v4134 = vpop.f32.mrf.mxu0
      %v4135 = vadd.f32 %v4006, %v4134
      %4136 = vmatmul.bf16.gmra.mxu0 %v2437
      %v4137 = vpop.f32.mrf.mxu0
      %v4138 = vadd.f32 %v4009, %v4137
      %v4139 = vpop.f32.mrf.mxu0
      %v4140 = vadd.f32 %v4011, %v4139
      %4141 = vmatmul.bf16.gmra.mxu0 %v2439
      %v4142 = vpop.f32.mrf.mxu0
      %v4143 = vadd.f32 %v4014, %v4142
      %v4144 = vpop.f32.mrf.mxu0
      %v4145 = vadd.f32 %v4016, %v4144
      %4146 = vmatmul.bf16.gmra.mxu0 %v2441
      %v4147 = vpop.f32.mrf.mxu0
      %v4148 = vadd.f32 %v4019, %v4147
      %v4149 = vpop.f32.mrf.mxu0
      %v4150 = vadd.f32 %v4021, %v4149
      %4151 = vmatmul.bf16.gmra.mxu0 %v2443
      %v4152 = vpop.f32.mrf.mxu0
      %v4153 = vadd.f32 %v4024, %v4152
      %v4154 = vpop.f32.mrf.mxu0
      %v4155 = vadd.f32 %v4026, %v4154
      %4156 = vmatmul.bf16.gmra.mxu0 %v2445
      %v4157 = vpop.f32.mrf.mxu0
      %v4158 = vadd.f32 %v4029, %v4157
      %v4159 = vpop.f32.mrf.mxu0
      %v4160 = vadd.f32 %v4031, %v4159
      %4161 = vmatmul.bf16.gmra.mxu0 %v2447
      %v4162 = vpop.f32.mrf.mxu0
      %v4163 = vadd.f32 %v4034, %v4162
      %v4164 = vpop.f32.mrf.mxu0
      %v4165 = vadd.f32 %v4036, %v4164
      %4166 = vmatmul.bf16.gmra.mxu0 %v2449
      %v4167 = vpop.f32.mrf.mxu0
      %v4168 = vadd.f32 %v4039, %v4167
      %v4169 = vpop.f32.mrf.mxu0
      %v4170 = vadd.f32 %v4041, %v4169
      %4171 = vmatmul.bf16.gmra.mxu0 %v2451
      %v4172 = vpop.f32.mrf.mxu0
      %v4173 = vadd.f32 %v4044, %v4172
      %v4174 = vpop.f32.mrf.mxu0
      %v4175 = vadd.f32 %v4046, %v4174
      %4176 = vmatmul.bf16.gmra.mxu0 %v2453
      %v4177 = vpop.f32.mrf.mxu0
      %v4178 = vadd.f32 %v4049, %v4177
      %v4179 = vpop.f32.mrf.mxu0
      %v4180 = vadd.f32 %v4051, %v4179
      %4181 = vmatmul.bf16.gmra.mxu0 %v2455
      %v4182 = vpop.f32.mrf.mxu0
      %v4183 = vadd.f32 %v4054, %v4182
      %v4184 = vpop.f32.mrf.mxu0
      %v4185 = vadd.f32 %v4056, %v4184
      %4186 = vmatmul.bf16.gmra.mxu0 %v2457
      %v4187 = vpop.f32.mrf.mxu0
      %v4188 = vadd.f32 %v4059, %v4187
      %v4189 = vpop.f32.mrf.mxu0
      %v4190 = vadd.f32 %v4061, %v4189
      %4191 = vmatmul.bf16.gmra.mxu0 %v2459
      %v4192 = vpop.f32.mrf.mxu0
      %v4193 = vadd.f32 %v4064, %v4192
      %v4194 = vpop.f32.mrf.mxu0
      %v4195 = vadd.f32 %v4066, %v4194
      %4196 = vmatmul.bf16.gmra.mxu0 %v2461
      %v4197 = vpop.f32.mrf.mxu0
      %v4198 = vadd.f32 %v4069, %v4197
      %v4199 = vpop.f32.mrf.mxu0
      %v4200 = vadd.f32 %v4071, %v4199
      %4201 = vmatmul.bf16.gmra.mxu0 %v2463
      %v4202 = vpop.f32.mrf.mxu0
      %v4203 = vadd.f32 %v4074, %v4202
      %v4204 = vpop.f32.mrf.mxu0
      %v4205 = vadd.f32 %v4076, %v4204
      %4206 = vmatmul.bf16.gmra.mxu0 %v2465
      %v4207 = vpop.f32.mrf.mxu0
      %v4208 = vadd.f32 %v4079, %v4207
      %v4209 = vpop.f32.mrf.mxu0
      %v4210 = vadd.f32 %v4081, %v4209
      %4211 = vmatmul.bf16.gmra.mxu0 %v2467
      %v4212 = vpop.f32.mrf.mxu0
      %v4213 = vadd.f32 %v4084, %v4212
      %v4214 = vpop.f32.mrf.mxu0
      %v4215 = vadd.f32 %v4086, %v4214
      %4216 = vmatmul.bf16.gmra.mxu0 %v2469
      %v4217 = vpop.f32.mrf.mxu0
      %v4218 = vadd.f32 %v4089, %v4217
      %v4219 = vpop.f32.mrf.mxu0
      %v4220 = vadd.f32 %v4091, %v4219
      %4221 = vmatmul.bf16.gmra.mxu0 %v2471
      %v4222 = vpop.f32.mrf.mxu0
      %v4223 = vadd.f32 %v4094, %v4222
      %v4224 = vpop.f32.mrf.mxu0
      %v4225 = vadd.f32 %v4096, %v4224
      %4226 = vmatmul.bf16.gmra.mxu0 %v2473
      %v4227 = vpop.f32.mrf.mxu0
      %v4228 = vadd.f32 %v4099, %v4227
      %v4229 = vpop.f32.mrf.mxu0
      %v4230 = vadd.f32 %v4101, %v4229
      %4231 = vmatmul.bf16.gmra.mxu0 %v2475
      %v4232 = vpop.f32.mrf.mxu0
      %v4233 = vadd.f32 %v4104, %v4232
      %v4234 = vpop.f32.mrf.mxu0
      %v4235 = vadd.f32 %v4106, %v4234
      %4236 = vdwg.mxu0
      %v4237 = vpack.c.bf16 %v4118, %v4118
      %v4238 = vpack.c.bf16 %v4120, %v4120
      %v4239 = vpack.c.bf16 %v4123, %v4123
      %v4240 = vpack.c.bf16 %v4125, %v4125
      %v4241 = vpack.c.bf16 %v4128, %v4128
      %v4242 = vpack.c.bf16 %v4130, %v4130
      %v4243 = vpack.c.bf16 %v4133, %v4133
      %v4244 = vpack.c.bf16 %v4135, %v4135
      %v4245 = vpack.c.bf16 %v4138, %v4138
      %v4246 = vpack.c.bf16 %v4140, %v4140
      %v4247 = vpack.c.bf16 %v4143, %v4143
      %v4248 = vpack.c.bf16 %v4145, %v4145
      %v4249 = vpack.c.bf16 %v4148, %v4148
      %v4250 = vpack.c.bf16 %v4150, %v4150
      %v4251 = vpack.c.bf16 %v4153, %v4153
      %v4252 = vpack.c.bf16 %v4155, %v4155
      %v4253 = vpack.c.bf16 %v4158, %v4158
      %v4254 = vpack.c.bf16 %v4160, %v4160
      %v4255 = vpack.c.bf16 %v4163, %v4163
      %v4256 = vpack.c.bf16 %v4165, %v4165
      %v4257 = vpack.c.bf16 %v4168, %v4168
      %v4258 = vpack.c.bf16 %v4170, %v4170
      %v4259 = vpack.c.bf16 %v4173, %v4173
      %v4260 = vpack.c.bf16 %v4175, %v4175
      %v4261 = vpack.c.bf16 %v4178, %v4178
      %v4262 = vpack.c.bf16 %v4180, %v4180
      %v4263 = vpack.c.bf16 %v4183, %v4183
      %v4264 = vpack.c.bf16 %v4185, %v4185
      %v4265 = vpack.c.bf16 %v4188, %v4188
      %v4266 = vpack.c.bf16 %v4190, %v4190
      %v4267 = vpack.c.bf16 %v4193, %v4193
      %v4268 = vpack.c.bf16 %v4195, %v4195
      %v4269 = vpack.c.bf16 %v4198, %v4198
      %v4270 = vpack.c.bf16 %v4200, %v4200
      %v4271 = vpack.c.bf16 %v4203, %v4203
      %v4272 = vpack.c.bf16 %v4205, %v4205
      %v4273 = vpack.c.bf16 %v4208, %v4208
      %v4274 = vpack.c.bf16 %v4210, %v4210
      %v4275 = vpack.c.bf16 %v4213, %v4213
      %v4276 = vpack.c.bf16 %v4215, %v4215
      %v4277 = vpack.c.bf16 %v4218, %v4218
      %v4278 = vpack.c.bf16 %v4220, %v4220
      %v4279 = vpack.c.bf16 %v4223, %v4223
      %v4280 = vpack.c.bf16 %v4225, %v4225
      %v4281 = vpack.c.bf16 %v4228, %v4228
      %v4282 = vpack.c.bf16 %v4230, %v4230
      %v4283 = vpack.c.bf16 %v4233, %v4233
      %v4284 = vpack.c.bf16 %v4235, %v4235
      %4285 = vst [vmem:[%s231] sm:$0xf] %v4237
      %4286 = vst [vmem:[%s231 + $0x4] sm:$0xf] %v4238
      %4287 = vst [vmem:[%s231 + $0x8] sm:$0xf] %v4239
      %4288 = vst [vmem:[%s231 + $0xc] sm:$0xf] %v4240
      %4289 = vst [vmem:[%s231 + $0x10] sm:$0xf] %v4241
      %4290 = vst [vmem:[%s231 + $0x14] sm:$0xf] %v4242
      %4291 = vst [vmem:[%s231 + $0x18] sm:$0xf] %v4243
      %4292 = vst [vmem:[%s231 + $0x1c] sm:$0xf] %v4244
      %4293 = vst [vmem:[%s231 + $0x20] sm:$0xf] %v4245
      %4294 = vst [vmem:[%s231 + $0x24] sm:$0xf] %v4246
      %4295 = vst [vmem:[%s231 + $0x28] sm:$0xf] %v4247
      %4296 = vst [vmem:[%s231 + $0x2c] sm:$0xf] %v4248
      %4297 = vst [vmem:[%s231 + $0x30] sm:$0xf] %v4249
      %4298 = vst [vmem:[%s231 + $0x34] sm:$0xf] %v4250
      %4299 = vst [vmem:[%s231 + $0x38] sm:$0xf] %v4251
      %4300 = vst [vmem:[%s231 + $0x3c] sm:$0xf] %v4252
      %4301 = vst [vmem:[%s231 + $0x40] sm:$0xf] %v4253
      %4302 = vst [vmem:[%s231 + $0x44] sm:$0xf] %v4254
      %4303 = vst [vmem:[%s231 + $0x48] sm:$0xf] %v4255
      %4304 = vst [vmem:[%s231 + $0x4c] sm:$0xf] %v4256
      %4305 = vst [vmem:[%s231 + $0x50] sm:$0xf] %v4257
      %4306 = vst [vmem:[%s231 + $0x54] sm:$0xf] %v4258
      %4307 = vst [vmem:[%s231 + $0x58] sm:$0xf] %v4259
      %4308 = vst [vmem:[%s231 + $0x5c] sm:$0xf] %v4260
      %4309 = vst [vmem:[%s231 + $0x60] sm:$0xf] %v4261
      %4310 = vst [vmem:[%s231 + $0x64] sm:$0xf] %v4262
      %4311 = vst [vmem:[%s231 + $0x68] sm:$0xf] %v4263
      %4312 = vst [vmem:[%s231 + $0x6c] sm:$0xf] %v4264
      %4313 = vst [vmem:[%s231 + $0x70] sm:$0xf] %v4265
      %4314 = vst [vmem:[%s231 + $0x74] sm:$0xf] %v4266
      %4315 = vst [vmem:[%s231 + $0x78] sm:$0xf] %v4267
      %4316 = vst [vmem:[%s231 + $0x7c] sm:$0xf] %v4268
      %4317 = vst [vmem:[%s231 + $0x80] sm:$0xf] %v4269
      %4318 = vst [vmem:[%s231 + $0x84] sm:$0xf] %v4270
      %4319 = vst [vmem:[%s231 + $0x88] sm:$0xf] %v4271
      %4320 = vst [vmem:[%s231 + $0x8c] sm:$0xf] %v4272
      %4321 = vst [vmem:[%s231 + $0x90] sm:$0xf] %v4273
      %4322 = vst [vmem:[%s231 + $0x94] sm:$0xf] %v4274
      %4323 = vst [vmem:[%s231 + $0x98] sm:$0xf] %v4275
      %4324 = vst [vmem:[%s231 + $0x9c] sm:$0xf] %v4276
      %4325 = vst [vmem:[%s231 + $0xa0] sm:$0xf] %v4277
      %4326 = vst [vmem:[%s231 + $0xa4] sm:$0xf] %v4278
      %4327 = vst [vmem:[%s231 + $0xa8] sm:$0xf] %v4279
      %4328 = vst [vmem:[%s231 + $0xac] sm:$0xf] %v4280
      %4329 = vst [vmem:[%s231 + $0xb0] sm:$0xf] %v4281
      %4330 = vst [vmem:[%s231 + $0xb4] sm:$0xf] %v4282
      %4331 = vst [vmem:[%s231 + $0xb8] sm:$0xf] %v4283
      %4332 = vst [vmem:[%s231 + $0xbc] sm:$0xf] %v4284
      %v4333 = vmul.f32 %v4118, %v269
      %v4334 = vmul.f32 %v4120, %v270
      %v4335 = vmul.f32 %v4123, %v271
      %v4336 = vmul.f32 %v4125, %v269
      %v4337 = vmul.f32 %v4128, %v270
      %v4338 = vmul.f32 %v4130, %v271
      %v4339 = vmul.f32 %v4133, %v269
      %v4340 = vmul.f32 %v4135, %v270
      %v4341 = vmul.f32 %v4138, %v271
      %v4342 = vmul.f32 %v4140, %v269
      %v4343 = vmul.f32 %v4143, %v270
      %v4344 = vmul.f32 %v4145, %v271
      %v4345 = vmul.f32 %v4148, %v269
      %v4346 = vmul.f32 %v4150, %v270
      %v4347 = vmul.f32 %v4153, %v271
      %v4348 = vmul.f32 %v4155, %v269
      %v4349 = vmul.f32 %v4158, %v270
      %v4350 = vmul.f32 %v4160, %v271
      %v4351 = vmul.f32 %v4163, %v269
      %v4352 = vmul.f32 %v4165, %v270
      %v4353 = vmul.f32 %v4168, %v271
      %v4354 = vmul.f32 %v4170, %v269
      %v4355 = vmul.f32 %v4173, %v270
      %v4356 = vmul.f32 %v4175, %v271
      %v4357 = vmul.f32 %v4178, %v269
      %v4358 = vmul.f32 %v4180, %v270
      %v4359 = vmul.f32 %v4183, %v271
      %v4360 = vmul.f32 %v4185, %v269
      %v4361 = vmul.f32 %v4188, %v270
      %v4362 = vmul.f32 %v4190, %v271
      %v4363 = vmul.f32 %v4193, %v269
      %v4364 = vmul.f32 %v4195, %v270
      %v4365 = vmul.f32 %v4198, %v271
      %v4366 = vmul.f32 %v4200, %v269
      %v4367 = vmul.f32 %v4203, %v270
      %v4368 = vmul.f32 %v4205, %v271
      %v4369 = vmul.f32 %v4208, %v269
      %v4370 = vmul.f32 %v4210, %v270
      %v4371 = vmul.f32 %v4213, %v271
      %v4372 = vmul.f32 %v4215, %v269
      %v4373 = vmul.f32 %v4218, %v270
      %v4374 = vmul.f32 %v4220, %v271
      %v4375 = vmul.f32 %v4223, %v269
      %v4376 = vmul.f32 %v4225, %v270
      %v4377 = vmul.f32 %v4228, %v271
      %v4378 = vmul.f32 %v4230, %v269
      %v4379 = vmul.f32 %v4233, %v270
      %v4380 = vmul.f32 %v4235, %v271
      %v4381 = vadd.f32 %v4333, %v4334
      %v4382 = vadd.f32 %v4381, %v4335
      %v4383 = vadd.f32 %v4382, %v4336
      %v4384 = vadd.f32 %v4383, %v4337
      %v4385 = vadd.f32 %v4384, %v4338
      %v4386 = vadd.f32 %v4385, %v4339
      %v4387 = vadd.f32 %v4386, %v4340
      %v4388 = vadd.f32 %v4387, %v4341
      %v4389 = vadd.f32 %v4388, %v4342
      %v4390 = vadd.f32 %v4389, %v4343
      %v4391 = vadd.f32 %v4390, %v4344
      %v4392 = vadd.f32 %v4391, %v4345
      %v4393 = vadd.f32 %v4392, %v4346
      %v4394 = vadd.f32 %v4393, %v4347
      %v4395 = vadd.f32 %v4394, %v4348
      %v4396 = vadd.f32 %v4395, %v4349
      %v4397 = vadd.f32 %v4396, %v4350
      %v4398 = vadd.f32 %v4397, %v4351
      %v4399 = vadd.f32 %v4398, %v4352
      %v4400 = vadd.f32 %v4399, %v4353
      %v4401 = vadd.f32 %v4400, %v4354
      %v4402 = vadd.f32 %v4401, %v4355
      %v4403 = vadd.f32 %v4402, %v4356
      %v4404 = vadd.f32 %v4403, %v4357
      %v4405 = vadd.f32 %v4404, %v4358
      %v4406 = vadd.f32 %v4405, %v4359
      %v4407 = vadd.f32 %v4406, %v4360
      %v4408 = vadd.f32 %v4407, %v4361
      %v4409 = vadd.f32 %v4408, %v4362
      %v4410 = vadd.f32 %v4409, %v4363
      %v4411 = vadd.f32 %v4410, %v4364
      %v4412 = vadd.f32 %v4411, %v4365
      %v4413 = vadd.f32 %v4412, %v4366
      %v4414 = vadd.f32 %v4413, %v4367
      %v4415 = vadd.f32 %v4414, %v4368
      %v4416 = vadd.f32 %v4415, %v4369
      %v4417 = vadd.f32 %v4416, %v4370
      %v4418 = vadd.f32 %v4417, %v4371
      %v4419 = vadd.f32 %v4418, %v4372
      %v4420 = vadd.f32 %v4419, %v4373
      %v4421 = vadd.f32 %v4420, %v4374
      %v4422 = vadd.f32 %v4421, %v4375
      %v4423 = vadd.f32 %v4422, %v4376
      %v4424 = vadd.f32 %v4423, %v4377
      %v4425 = vadd.f32 %v4424, %v4378
      %v4426 = vadd.f32 %v4425, %v4379
      %v4427 = vadd.f32 %v4426, %v4380
      %v4428 = vrot.slane %v4427, 4
      %v4429 = vadd.f32 %v4427, %v4428
      %v4430 = vrot.slane %v4429, 2
      %v4431 = vadd.f32 %v4429, %v4430
      %v4432 = vrot.slane %v4431, 1
      %v4433 = vadd.f32 %v4431, %v4432
      %v4434 = vmul.f32 %v4333, %v4333
      %v4435 = vmul.f32 %v4334, %v4334
      %v4436 = vmul.f32 %v4335, %v4335
      %v4437 = vmul.f32 %v4336, %v4336
      %v4438 = vmul.f32 %v4337, %v4337
      %v4439 = vmul.f32 %v4338, %v4338
      %v4440 = vmul.f32 %v4339, %v4339
      %v4441 = vmul.f32 %v4340, %v4340
      %v4442 = vmul.f32 %v4341, %v4341
      %v4443 = vmul.f32 %v4342, %v4342
      %v4444 = vmul.f32 %v4343, %v4343
      %v4445 = vmul.f32 %v4344, %v4344
      %v4446 = vmul.f32 %v4345, %v4345
      %v4447 = vmul.f32 %v4346, %v4346
      %v4448 = vmul.f32 %v4347, %v4347
      %v4449 = vmul.f32 %v4348, %v4348
      %v4450 = vmul.f32 %v4349, %v4349
      %v4451 = vmul.f32 %v4350, %v4350
      %v4452 = vmul.f32 %v4351, %v4351
      %v4453 = vmul.f32 %v4352, %v4352
      %v4454 = vmul.f32 %v4353, %v4353
      %v4455 = vmul.f32 %v4354, %v4354
      %v4456 = vmul.f32 %v4355, %v4355
      %v4457 = vmul.f32 %v4356, %v4356
      %v4458 = vmul.f32 %v4357, %v4357
      %v4459 = vmul.f32 %v4358, %v4358
      %v4460 = vmul.f32 %v4359, %v4359
      %v4461 = vmul.f32 %v4360, %v4360
      %v4462 = vmul.f32 %v4361, %v4361
      %v4463 = vmul.f32 %v4362, %v4362
      %v4464 = vmul.f32 %v4363, %v4363
      %v4465 = vmul.f32 %v4364, %v4364
      %v4466 = vmul.f32 %v4365, %v4365
      %v4467 = vmul.f32 %v4366, %v4366
      %v4468 = vmul.f32 %v4367, %v4367
      %v4469 = vmul.f32 %v4368, %v4368
      %v4470 = vmul.f32 %v4369, %v4369
      %v4471 = vmul.f32 %v4370, %v4370
      %v4472 = vmul.f32 %v4371, %v4371
      %v4473 = vmul.f32 %v4372, %v4372
      %v4474 = vmul.f32 %v4373, %v4373
      %v4475 = vmul.f32 %v4374, %v4374
      %v4476 = vmul.f32 %v4375, %v4375
      %v4477 = vmul.f32 %v4376, %v4376
      %v4478 = vmul.f32 %v4377, %v4377
      %v4479 = vmul.f32 %v4378, %v4378
      %v4480 = vmul.f32 %v4379, %v4379
      %v4481 = vmul.f32 %v4380, %v4380
      %v4482 = vadd.f32 %v4434, %v4435
      %v4483 = vadd.f32 %v4482, %v4436
      %v4484 = vadd.f32 %v4483, %v4437
      %v4485 = vadd.f32 %v4484, %v4438
      %v4486 = vadd.f32 %v4485, %v4439
      %v4487 = vadd.f32 %v4486, %v4440
      %v4488 = vadd.f32 %v4487, %v4441
      %v4489 = vadd.f32 %v4488, %v4442
      %v4490 = vadd.f32 %v4489, %v4443
      %v4491 = vadd.f32 %v4490, %v4444
      %v4492 = vadd.f32 %v4491, %v4445
      %v4493 = vadd.f32 %v4492, %v4446
      %v4494 = vadd.f32 %v4493, %v4447
      %v4495 = vadd.f32 %v4494, %v4448
      %v4496 = vadd.f32 %v4495, %v4449
      %v4497 = vadd.f32 %v4496, %v4450
      %v4498 = vadd.f32 %v4497, %v4451
      %v4499 = vadd.f32 %v4498, %v4452
      %v4500 = vadd.f32 %v4499, %v4453
      %v4501 = vadd.f32 %v4500, %v4454
      %v4502 = vadd.f32 %v4501, %v4455
      %v4503 = vadd.f32 %v4502, %v4456
      %v4504 = vadd.f32 %v4503, %v4457
      %v4505 = vadd.f32 %v4504, %v4458
      %v4506 = vadd.f32 %v4505, %v4459
      %v4507 = vadd.f32 %v4506, %v4460
      %v4508 = vadd.f32 %v4507, %v4461
      %v4509 = vadd.f32 %v4508, %v4462
      %v4510 = vadd.f32 %v4509, %v4463
      %v4511 = vadd.f32 %v4510, %v4464
      %v4512 = vadd.f32 %v4511, %v4465
      %v4513 = vadd.f32 %v4512, %v4466
      %v4514 = vadd.f32 %v4513, %v4467
      %v4515 = vadd.f32 %v4514, %v4468
      %v4516 = vadd.f32 %v4515, %v4469
      %v4517 = vadd.f32 %v4516, %v4470
      %v4518 = vadd.f32 %v4517, %v4471
      %v4519 = vadd.f32 %v4518, %v4472
      %v4520 = vadd.f32 %v4519, %v4473
      %v4521 = vadd.f32 %v4520, %v4474
      %v4522 = vadd.f32 %v4521, %v4475
      %v4523 = vadd.f32 %v4522, %v4476
      %v4524 = vadd.f32 %v4523, %v4477
      %v4525 = vadd.f32 %v4524, %v4478
      %v4526 = vadd.f32 %v4525, %v4479
      %v4527 = vadd.f32 %v4526, %v4480
      %v4528 = vadd.f32 %v4527, %v4481
      %v4529 = vrot.slane %v4528, 4
      %v4530 = vadd.f32 %v4528, %v4529
      %v4531 = vrot.slane %v4530, 2
      %v4532 = vadd.f32 %v4530, %v4531
      %v4533 = vrot.slane %v4532, 1
      %v4534 = vadd.f32 %v4532, %v4533
      %vm4535 = vcmask 1040384
      %v4536 = vsel %vm4535, %v4433, %v4534
      %4537 = vst [vmem:[%s235] sm:$0x3] %v4536
      %p4538 = scmp.lt.s32.totalorder %s17, 1
      %s4539 = scalar_select %p4538, %s17, 1
      %s4540 = smul.addr %s4539, 48
      %s4541 = smul.addr %s4540, 4
      %s4542 = scalar_lea.vmem %s4, %s4541
      %p4543 = scmp.lt.s32.totalorder %s17, 1
      %s4544 = scalar_select %p4543, %s17, 1
      %s4545 = smul.addr %s4544, 2
      %s4546 = scalar_lea.vmem %s5, %s4545
      // Predicated region
      $region37: #{encoder_block_forward.4} parent=35 // pred_check
        %p4547 = pneg %p124
      $region38: #{encoder_block_forward.4} parent=35 // pred_check_branch
        %4549 = sbr.rel (%p4547) target = $region40
      $region39: #{encoder_block_forward.4} parent=35 // pred_region
        _
      $region40: #{encoder_block_forward.4} parent=35 // pred_fallthru
        _
      // Predicated region
      $region41: #{encoder_block_forward.4} parent=35 // pred_check
        %p4550 = pneg %p150
      $region42: #{encoder_block_forward.4} parent=35 // pred_check_branch
        %4552 = sbr.rel (%p4550) target = $region44
      $region43: #{encoder_block_forward.4} parent=35 // pred_region
        _
      $region44: #{encoder_block_forward.4} parent=35 // pred_fallthru
        _
    $region36: #{encoder_block_forward.4} parent=5 // pred_fallthru
      _
    %p4553 = scmp.le.s32.totalorder 2, %s12
    // Predicated region
    $region45: #{encoder_block_forward.4} parent=5 // pred_check
      %p4554 = pneg %p4553
    $region46: #{encoder_block_forward.4} parent=5 // pred_check_branch
      %4556 = sbr.rel (%p4554) target = $region48
    $region47: #{encoder_block_forward.4} parent=5 // pred_region
      %s4557 = ssub.s32 %s12, 2
      // Predicated region
      $region49: #{encoder_block_forward.4} parent=47 // pred_check
        %p4558 = pneg %p130
      $region50: #{encoder_block_forward.4} parent=47 // pred_check_branch
        %4560 = sbr.rel (%p4558) target = $region52
      $region51: #{encoder_block_forward.4} parent=47 // pred_region
        %p4561 = scmp.lt.s32.totalorder %s18, 1
        %s4562 = scalar_select %p4561, %s18, 1
        %s4563 = smul.addr %s4562, 48
        %s4564 = smul.addr %s4563, 4
        %s4565 = scalar_lea.vmem %s4, %s4564
      $region52: #{encoder_block_forward.4} parent=47 // pred_fallthru
        _
      // Predicated region
      $region53: #{encoder_block_forward.4} parent=47 // pred_check
        %p4566 = pneg %p156
      $region54: #{encoder_block_forward.4} parent=47 // pred_check_branch
        %4568 = sbr.rel (%p4566) target = $region56
      $region55: #{encoder_block_forward.4} parent=47 // pred_region
        %p4569 = scmp.lt.s32.totalorder %s18, 1
        %s4570 = scalar_select %p4569, %s18, 1
        %s4571 = smul.addr %s4570, 2
        %s4572 = scalar_lea.vmem %s5, %s4571
      $region56: #{encoder_block_forward.4} parent=47 // pred_fallthru
        _
    $region48: #{encoder_block_forward.4} parent=5 // pred_fallthru
      _
  $region6: #{encoder_block_forward.4} parent=0 // loop_footer
    %s16 = sadd.s32 1, %s12
  $region7: #{encoder_block_forward.4} parent=0 // loop_footer_branch
    %11 = sbr.rel target = $region3
  $region8: #{encoder_block_forward.4} parent=0 // loop_exit
    _

</llo_original>
